<compile_context>
chip_gen: v7x
topology: tpu7x:2x2x1
jax: 0.10.0
libtpu: 0.0.40
codegen_flags: <defaults>
</compile_context>

<pallas_src>
import math

import jax
import jax.numpy as jnp
import numpy as np
from jax import lax
from jax.experimental import pallas as pl
from jax.experimental.pallas import tpu as pltpu

_LN_BASE = math.log(1.01)   # 1.01 ** xx == exp(xx * ln(1.01))


def _make_hist_kernel(num_bins: int, width: float, center0: float, step: float):
    """Builds the per-block kernel.

    Block shapes seen by the kernel:
      x_ref:    (ROWS, 1, HW_TILE)        input rows (native dtype)
      twod_ref: (ROWS, num_bins, HW_TILE) soft-bin maps for this block
      oned_ref: (ROWS, num_bins, 1)       running spatial SUM (f32 accumulator,
                                          resident across the HW-tile axis)
    """

    def hist_kernel(x_ref, twod_ref, oned_ref):
        j = pl.program_id(1)                                     # HW-tile index

        x = x_ref[...].astype(jnp.float32)                       # (R, 1, T)

        # Bin centers as compile-time constants: centers[b] = center0 + b*step.
        b_idx = lax.broadcasted_iota(jnp.int32, (1, num_bins, 1), 1)
        centers = center0 + step * b_idx.astype(jnp.float32)     # (1, NB, 1)

        # bin_centers_conv (w=1, b=-center) -> abs -> bin_widths_conv (w=-1, b=width)
        xx = width - jnp.abs(x - centers)                        # (R, NB, T)
        # nn.Threshold(1, 0) applied to 1.01**xx  ==  keep only where xx > 0.
        y = jnp.where(xx > 0.0, jnp.exp(xx * _LN_BASE), 0.0)     # f32

        twod_ref[...] = y.astype(twod_ref.dtype)

        @pl.when(j == 0)
        def _init():
            oned_ref[...] = jnp.zeros_like(oned_ref)

        oned_ref[...] += jnp.sum(y, axis=-1, keepdims=True)      # (R, NB, 1)

    return hist_kernel


def _pick_tile(total: int, candidates) -> int:
    for t in candidates:
        if total % t == 0:
            return t
    return total   # full-extent block (always legal)


def hist_layer(x: jax.Array, num_bins: int = 4, normalize: bool = True,
               two_d_dtype=None):
    """Pallas implementation of HistLayer.forward.

    Args:
      x: (B, C, H, W) image in NCHW (same as the PyTorch module).
      num_bins: number of histogram bins.
      normalize: True -> spatial mean (AdaptiveAvgPool2d(1)); False -> spatial sum.
      two_d_dtype: optional output dtype for two_d (default: x.dtype).
    Returns:
      one_d: (B, C * num_bins)
      two_d: (B, C * num_bins, H * W)
    """
    B, C, H, W = x.shape
    HW = H * W
    N = B * C

    # Deterministic "parameters", exactly as in __init__.
    bin_edges = np.linspace(-0.05, 1.05, num_bins + 1)
    step = float(bin_edges[1] - bin_edges[0])
    width = float((bin_edges[2] - bin_edges[1]) / 2.0)
    center0 = float(bin_edges[0]) + width                        # center of bin 0

    out_dtype = jnp.dtype(x.dtype if two_d_dtype is None else two_d_dtype)

    # Tiling: batch ROWS (b,c)-rows per step; lane-dense HW tile (mult. of 128).
    rows = _pick_tile(N, (16, 8))
    hw_tile = _pick_tile(HW, (2048, 1024, 512, 256, 128))
    grid = (N // rows, HW // hw_tile)

    # Explicit VMEM budget: (8,128)-padded blocks, double-buffered, + headroom.
    def _pad(v, m):
        return -(-v // m) * m
    lane_t = _pad(hw_tile, 128)
    in_blk = rows * 8 * lane_t * x.dtype.itemsize
    out2_blk = rows * _pad(num_bins, 8) * lane_t * out_dtype.itemsize
    out1_blk = rows * _pad(num_bins, 8) * 128 * 4
    vmem_limit = int(min(max(4 * (in_blk + out2_blk + out1_blk), 16 * 2**20),
                         64 * 2**20))

    x_r = x.reshape(N, 1, HW)        # no upcast here: cast happens in-kernel

    two_d_flat, one_sum = pl.pallas_call(
        _make_hist_kernel(num_bins, width, center0, step),
        out_shape=(
            jax.ShapeDtypeStruct((N, num_bins, HW), out_dtype),
            jax.ShapeDtypeStruct((N, num_bins, 1), jnp.float32),
        ),
        grid_spec=pltpu.PrefetchScalarGridSpec(
            num_scalar_prefetch=0,
            grid=grid,
            in_specs=[
                pl.BlockSpec((rows, 1, hw_tile), lambda i, j: (i, 0, j)),
            ],
            out_specs=[
                pl.BlockSpec((rows, num_bins, hw_tile), lambda i, j: (i, 0, j)),
                # Same block index across j -> accumulator resident in VMEM,
                # a single HBM writeback per row group.
                pl.BlockSpec((rows, num_bins, 1), lambda i, j: (i, 0, 0)),
            ],
        ),
        compiler_params=pltpu.CompilerParams(
            dimension_semantics=("parallel", "arbitrary"),
            vmem_limit_bytes=vmem_limit,
        ),
    )(x_r)

    two_d = two_d_flat.reshape(B, C * num_bins, HW)
    one_sum = one_sum.reshape(B, C * num_bins)
    if normalize:
        one_d = (one_sum * (1.0 / HW)).astype(x.dtype)   # AdaptiveAvgPool2d(1)
    else:
        one_d = one_sum.astype(x.dtype)                  # .sum([2, 3])
    return one_d, two_d


def _reference(x, num_bins=4, normalize=True):
    """Pure-JAX mirror of the PyTorch forward."""
    B, C, H, W = x.shape
    bin_edges = np.linspace(-0.05, 1.05, num_bins + 1)
    width = float((bin_edges[2] - bin_edges[1]) / 2.0)
    centers = (bin_edges + width)[:-1]
    xf = x.astype(jnp.float32)[:, :, None]                       # (B, C, 1, H, W)
    c = jnp.asarray(centers, jnp.float32)[None, None, :, None, None]
    xx = jnp.float32(width) - jnp.abs(xf - c)
    y = jnp.power(jnp.float32(1.01), xx)
    y = jnp.where(y > 1.0, y, 0.0)                               # nn.Threshold(1, 0)
    two_d = y.reshape(B, C * num_bins, H * W)
    one_d = two_d.mean(axis=-1) if normalize else two_d.sum(axis=-1)
    return one_d, two_d


if __name__ == "__main__":
    key = jax.random.PRNGKey(0)
    B, C, H, W = 32, 1, 64, 64       # in_channels=1: the only well-formed config
    num_bins = 4

    x = jax.random.uniform(key, (B, C, H, W), dtype=jnp.float32)
    # Keep values away from the hard bin edges so the (mathematically identical)
    # threshold formulations cannot disagree on float-borderline pixels.
    x = jnp.round(x * 256.0) / 256.0 + 1e-3

    one_d, two_d = hist_layer(x, num_bins=num_bins, normalize=True)
    jax.block_until_ready((one_d, two_d))

    ref_one, ref_two = _reference(x, num_bins=num_bins, normalize=True)
    np.testing.assert_allclose(np.asarray(two_d), np.asarray(ref_two),
                               rtol=1e-5, atol=1e-5)
    np.testing.assert_allclose(np.asarray(one_d), np.asarray(ref_one),
                               rtol=1e-5, atol=2e-5)

    one_s, _ = hist_layer(x, num_bins=num_bins, normalize=False)
    jax.block_until_ready(one_s)
    ref_one_s, _ = _reference(x, num_bins=num_bins, normalize=False)
    np.testing.assert_allclose(np.asarray(one_s), np.asarray(ref_one_s),
                               rtol=1e-4, atol=1e-3)

    assert one_d.shape == (B, C * num_bins)
    assert two_d.shape == (B, C * num_bins, H * W)
    print("KERNEL_OK")
</pallas_src>

<mosaic_0001>
module attributes {stable_mosaic.version = 11 : i64} {
  func.func @hist_kernel(%arg0: i32, %arg1: i32, %arg2: memref<16x1x2048xf32, #tpu.memory_space<vmem>>, %arg3: memref<16x4x2048xf32, #tpu.memory_space<vmem>>, %arg4: memref<16x4x1xf32, #tpu.memory_space<vmem>>) attributes {dimension_semantics = [#tpu.dimension_semantics<parallel>, #tpu.dimension_semantics<arbitrary>], iteration_bounds = array<i64: 2, 2>, scalar_prefetch = 0 : i64, scratch_operands = 0 : i64, tpu.core_type = #tpu.core_type<tc>, window_params = [{transform_indices = @transform_0, window_bounds = array<i64: 16, 1, 2048>}, {transform_indices = @transform_1, window_bounds = array<i64: 16, 4, 2048>}, {transform_indices = @transform_2, window_bounds = array<i64: 16, 4, 1>}]} {
    %c0 = arith.constant 0 : index
    %c0_0 = arith.constant 0 : index
    %c0_1 = arith.constant 0 : index
    %0 = vector.load %arg2[%c0, %c0_0, %c0_1] : memref<16x1x2048xf32, #tpu.memory_space<vmem>>, vector<16x1x2048xf32>
    %1 = tpu.iota {dimensions = array<i32: 1>} : vector<1x4x1xi32>
    %2 = arith.sitofp %1 : vector<1x4x1xi32> to vector<1x4x1xf32>
    %cst = arith.constant 2.750000e-01 : f32
    %3 = vector.broadcast %cst : f32 to vector<1x4x1xf32>
    %4 = arith.mulf %3, %2 : vector<1x4x1xf32>
    %cst_2 = arith.constant 0.0874999985 : f32
    %5 = vector.broadcast %cst_2 : f32 to vector<1x4x1xf32>
    %6 = arith.addf %5, %4 : vector<1x4x1xf32>
    %7 = vector.broadcast %0 : vector<16x1x2048xf32> to vector<16x4x2048xf32>
    %8 = vector.broadcast %6 : vector<1x4x1xf32> to vector<16x4x2048xf32>
    %9 = arith.subf %7, %8 : vector<16x4x2048xf32>
    %10 = math.absf %9 : vector<16x4x2048xf32>
    %cst_3 = arith.constant 1.375000e-01 : f32
    %11 = vector.broadcast %cst_3 : f32 to vector<16x4x2048xf32>
    %12 = arith.subf %11, %10 : vector<16x4x2048xf32>
    %cst_4 = arith.constant 0.000000e+00 : f32
    %13 = vector.broadcast %cst_4 : f32 to vector<16x4x2048xf32>
    %14 = arith.cmpf ogt, %12, %13 : vector<16x4x2048xf32>
    %cst_5 = arith.constant 0.00995033048 : f32
    %15 = vector.broadcast %cst_5 : f32 to vector<16x4x2048xf32>
    %16 = arith.mulf %12, %15 : vector<16x4x2048xf32>
    %17 = math.exp %16 : vector<16x4x2048xf32>
    %cst_6 = arith.constant 0.000000e+00 : f32
    %18 = vector.broadcast %cst_6 : f32 to vector<16x4x2048xf32>
    %19 = arith.select %14, %17, %18 : vector<16x4x2048xi1>, vector<16x4x2048xf32>
    %c0_7 = arith.constant 0 : index
    %c0_8 = arith.constant 0 : index
    %c0_9 = arith.constant 0 : index
    %20 = vector.load %arg3[%c0_7, %c0_8, %c0_9] : memref<16x4x2048xf32, #tpu.memory_space<vmem>>, vector<16x4x2048xf32>
    tpu.vector_store %arg3[%c0_7, %c0_8, %c0_9], %19 {strides = array<i32>} : memref<16x4x2048xf32, #tpu.memory_space<vmem>>, vector<16x4x2048xf32>,
    %c0_i32 = arith.constant 0 : i32
    %21 = arith.cmpi eq, %arg1, %c0_i32 : i32
    %22 = arith.extui %21 : i1 to i32
    %c0_i32_10 = arith.constant 0 : i32
    %23 = arith.cmpi ne, %22, %c0_i32_10 : i32
    scf.if %23 {
      %cst_18 = arith.constant 0.000000e+00 : f32
      %29 = vector.broadcast %cst_18 : f32 to vector<16x4x1xf32>
      %c0_19 = arith.constant 0 : index
      %c0_20 = arith.constant 0 : index
      %c0_21 = arith.constant 0 : index
      %30 = vector.load %arg4[%c0_19, %c0_20, %c0_21] : memref<16x4x1xf32, #tpu.memory_space<vmem>>, vector<16x4x1xf32>
      tpu.vector_store %arg4[%c0_19, %c0_20, %c0_21], %29 {strides = array<i32>} : memref<16x4x1xf32, #tpu.memory_space<vmem>>, vector<16x4x1xf32>,
    } else {
    }
    %c0_11 = arith.constant 0 : index
    %c0_12 = arith.constant 0 : index
    %c0_13 = arith.constant 0 : index
    %24 = vector.load %arg4[%c0_11, %c0_12, %c0_13] : memref<16x4x1xf32, #tpu.memory_space<vmem>>, vector<16x4x1xf32>
    %cst_14 = arith.constant dense<0.000000e+00> : vector<16x4xf32>
    %25 = vector.multi_reduction <add>, %19, %cst_14 [2] : vector<16x4x2048xf32> to vector<16x4xf32>
    %26 = vector.shape_cast %25 : vector<16x4xf32> to vector<16x4x1xf32>
    %27 = arith.addf %24, %26 : vector<16x4x1xf32>
    %c0_15 = arith.constant 0 : index
    %c0_16 = arith.constant 0 : index
    %c0_17 = arith.constant 0 : index
    %28 = vector.load %arg4[%c0_15, %c0_16, %c0_17] : memref<16x4x1xf32, #tpu.memory_space<vmem>>, vector<16x4x1xf32>
    tpu.vector_store %arg4[%c0_15, %c0_16, %c0_17], %27 {strides = array<i32>} : memref<16x4x1xf32, #tpu.memory_space<vmem>>, vector<16x4x1xf32>,
    return
  }
  func.func @transform_0(%arg0: i32, %arg1: i32) -> (i32, i32, i32) {
    %c0_i32 = arith.constant 0 : i32
    %c0_i32_0 = arith.constant 0 : i32
    return %arg0, %c0_i32, %arg1 : i32, i32, i32
  }
  func.func @transform_1(%arg0: i32, %arg1: i32) -> (i32, i32, i32) {
    %c0_i32 = arith.constant 0 : i32
    %c0_i32_0 = arith.constant 0 : i32
    return %arg0, %c0_i32, %arg1 : i32, i32, i32
  }
  func.func @transform_2(%arg0: i32, %arg1: i32) -> (i32, i32, i32) {
    %c0_i32 = arith.constant 0 : i32
    %c0_i32_0 = arith.constant 0 : i32
    %c0_i32_1 = arith.constant 0 : i32
    return %arg0, %c0_i32, %c0_i32_0 : i32, i32, i32
  }
}

</mosaic_0001>

<llo_original>
// kernel: tpu_custom_call.1
$region0: #{tpu_custom_call.1}
  #allocation0 [shape = 'u32[]', space=smem, size = 0x4, offset = 0x4, fixed_abs, tag = 'smem constant byte address 0x4 - core index']
  #allocation1 [shape = 'u32[144,128]{1,0:T(1,128)}', space=vmem, size = 0x12000, scoped, tag = 'internal scratch']
  %s0 = inlined_call_operand.hbm [shape: f32[32,1,4096], index: 0, kind: input, shape index: {}]
  %s1 = inlined_call_operand.hbm [shape: f32[32,4,4096], index: 1, kind: output, shape index: {0}]
  %s2 = inlined_call_operand.vmem [shape: f32[32,4,1], index: 2, kind: output, shape index: {1}]
  %3 = xla_tuple %s1, %s2
  %s4 = sld [smem:[#allocation0]]
  $region53: #{tpu_custom_call.1} parent=0
    _
  %s6 = ssub.s32 1, %s4
  %s7 = scalar_select 0, %s6, %s4
  $region1: #{tpu_custom_call.1} parent=0
    #allocation2 [shape = 'u8[262144]{0}', space=vmem, size = 0x40000, scoped, tag = 'input window, operand 0']
    #allocation3 [shape = 's32[2]{0}', space=sflag, size = 0x8, scoped, tag = 'scoped memory for tpu_custom_call.1']
    #allocation4 [shape = 's32[2]{0}', space=sflag, size = 0x8, scoped, tag = 'scoped memory for tpu_custom_call.1']
    #allocation5 [shape = 'u8[1048576]{0}', space=vmem, size = 0x100000, scoped, tag = 'output window, operand 0']
    %8 = vsyncpa [#allocation3], 0
    %s9 = scalar_lea.sflag [#allocation3], 1
    %10 = vsyncpa %s9, 0
    %11 = vsyncpa [#allocation4], 0
    %s12 = scalar_lea.sflag [#allocation4], 1
    %13 = vsyncpa %s12, 0
    loop: start=0, step=1, limit=6
    $region2: #{tpu_custom_call.1} parent=1 // loop_pre_header
      _
    $region3: #{tpu_custom_call.1} parent=1 // loop_header
      %s15 = sphi 0, %s19
      %p16 = scmp.ge.s32.totalorder %s15, 6
      %s22 = sphi 0, %s34
      %s23 = sphi 0, %s30
      %s24 = sphi 0, %s22
      %s25 = sphi 0, %s23
      %s26 = sphi 0, %s24
      %s27 = sphi 0, %s25
      %s39 = sphi 0, %s41
      %s42 = sphi 0, %s39
      %s43 = sphi 0, %s42
      %s59 = sphi 0, %s43
      %s67 = sphi 0, %s69
      %s70 = sphi 0, %s67
      %s71 = sphi 0, %s70
      %s87 = sphi 0, %s71
      %s93 = sphi 0, %s95
      %s96 = sphi 0, %s93
      %s97 = sphi 0, %s96
      %s113 = sphi 0, %s97
    $region4: #{tpu_custom_call.1} parent=1 // loop_header_branch
      %18 = sbr.rel (%p16) target = $region8
    $region5: #{tpu_custom_call.1} parent=1 // loop_body
      %s20 = ssub.s32 %s15, 1
      %s21 = ssub.s32 %s15, 2
      %s28 = sadd.s32 1, %s23
      %p29 = scmp.ge.s32.totalorder %s28, 2
      %s30 = scalar_select %p29, 0, %s28
      %s31 = sadd.s32 1, %s22
      %s32 = scalar_select %p29, %s31, %s22
      %p33 = scmp.ge.s32.totalorder %s32, 2
      %s34 = scalar_select %p33, 0, %s32
      %s35 = ssub.s32 %s22, %s34
      %s36 = ssub.s32 %s23, %s30
      %s37 = sor.u32 %s35, %s36
      %p38 = scmp.eq.s32.totalorder %s37, 0
      %s40 = sadd.s32 %s39, 1
      %s41 = scalar_select %p38, %s39, %s40
      %p44 = pneg %p38
      %p45 = scmp.eq.s32.totalorder %s15, 3
      %p46 = por %p44, %p45
      %p47 = scmp.ne.s32.totalorder %s39, %s42
      %p48 = scmp.eq.s32.totalorder %s15, 0
      %p49 = por %p47, %p48
      %p50 = scmp.ne.s32.totalorder %s39, %s42
      %p51 = scmp.eq.s32.totalorder %s20, 3
      %p52 = por %p50, %p51
      %p53 = scmp.ne.s32.totalorder %s42, %s43
      %p54 = scmp.eq.s32.totalorder %s20, 0
      %p55 = por %p53, %p54
      %p56 = scmp.ne.s32.totalorder %s42, %s43
      %p57 = scmp.eq.s32.totalorder %s21, 3
      %p58 = por %p56, %p57
      %p60 = scmp.ne.s32.totalorder %s43, %s59
      %p61 = scmp.eq.s32.totalorder %s21, 0
      %p62 = por %p60, %p61
      %s63 = ssub.s32 %s22, %s34
      %s64 = ssub.s32 %s23, %s30
      %s65 = sor.u32 %s63, %s64
      %p66 = scmp.eq.s32.totalorder %s65, 0
      %s68 = sadd.s32 %s67, 1
      %s69 = scalar_select %p66, %s67, %s68
      %p72 = pneg %p66
      %p73 = scmp.eq.s32.totalorder %s15, 3
      %p74 = por %p72, %p73
      %p75 = scmp.ne.s32.totalorder %s67, %s70
      %p76 = scmp.eq.s32.totalorder %s15, 0
      %p77 = por %p75, %p76
      %p78 = scmp.ne.s32.totalorder %s67, %s70
      %p79 = scmp.eq.s32.totalorder %s20, 3
      %p80 = por %p78, %p79
      %p81 = scmp.ne.s32.totalorder %s70, %s71
      %p82 = scmp.eq.s32.totalorder %s20, 0
      %p83 = por %p81, %p82
      %p84 = scmp.ne.s32.totalorder %s70, %s71
      %p85 = scmp.eq.s32.totalorder %s21, 3
      %p86 = por %p84, %p85
      %p88 = scmp.ne.s32.totalorder %s71, %s87
      %p89 = scmp.eq.s32.totalorder %s21, 0
      %p90 = por %p88, %p89
      %s91 = ssub.s32 %s22, %s34
      %p92 = scmp.eq.s32.totalorder %s91, 0
      %s94 = sadd.s32 %s93, 1
      %s95 = scalar_select %p92, %s93, %s94
      %p98 = pneg %p92
      %p99 = scmp.eq.s32.totalorder %s15, 3
      %p100 = por %p98, %p99
      %p101 = scmp.ne.s32.totalorder %s93, %s96
      %p102 = scmp.eq.s32.totalorder %s15, 0
      %p103 = por %p101, %p102
      %p104 = scmp.ne.s32.totalorder %s93, %s96
      %p105 = scmp.eq.s32.totalorder %s20, 3
      %p106 = por %p104, %p105
      %p107 = scmp.ne.s32.totalorder %s96, %s97
      %p108 = scmp.eq.s32.totalorder %s20, 0
      %p109 = por %p107, %p108
      %p110 = scmp.ne.s32.totalorder %s96, %s97
      %p111 = scmp.eq.s32.totalorder %s21, 3
      %p112 = por %p110, %p111
      %p114 = scmp.ne.s32.totalorder %s97, %s113
      %p115 = scmp.eq.s32.totalorder %s21, 0
      %p116 = por %p114, %p115
      %p117 = scmp.le.s32.totalorder 1, %s15
      %p118 = scmp.lt.s32.totalorder %s15, 5
      %p119 = pnand %p117, %p118
      %p120 = pneg %p119
      // Predicated region
      $region9: #{tpu_custom_call.1} parent=5 // pred_check
        _
      $region10: #{tpu_custom_call.1} parent=5 // pred_check_branch
        %122 = sbr.rel (%p119) target = $region12
      $region11: #{tpu_custom_call.1} parent=5 // pred_region
        %s123 = ssub.s32 %s15, 1
      $region12: #{tpu_custom_call.1} parent=5 // pred_fallthru
        _
      %p124 = scmp.lt.s32.totalorder %s15, 4
      // Predicated region
      $region13: #{tpu_custom_call.1} parent=5 // pred_check
        %p125 = pneg %p124
      $region14: #{tpu_custom_call.1} parent=5 // pred_check_branch
        %127 = sbr.rel (%p125) target = $region16
      $region15: #{tpu_custom_call.1} parent=5 // pred_region
        // Predicated region
        $region17: #{tpu_custom_call.1} parent=15 // pred_check
          %p128 = pneg %p49
        $region18: #{tpu_custom_call.1} parent=15 // pred_check_branch
          %130 = sbr.rel (%p128) target = $region20
        $region19: #{tpu_custom_call.1} parent=15 // pred_region
          %s131 = sand.u32 %s39, 1
          %s132 = scalar_lea.sflag [#allocation3], %s131
          %s133 = sand.u32 %s39, 1
          %s134 = smul.addr %s133, 256
          %s135 = scalar_lea.vmem [#allocation2], %s134
          %s136 = smul.u32 16, %s22
          %s137 = smul.u32 16, %s23
          %s139 = ssub.s32 4096, 4096
          %140 = vsyncadd %s132, %s139
          %s141 = smul.addr %s136, 32
          %s142 = sadd.s32 %s137, %s141
          %s143 = smul.addr %s142, 16
          %s144 = scalar_lea.hbm %s0, %s143
          %s145 = sshll.u32 %s135, 4
          %s146 = int_to_ptr.vmem [resolvable:$true] %s145
          %151 = dma.hbm_to_vmem [thread:$0]  %s144, 4096, %s146, %s132, 512, 256, 16
        $region20: #{tpu_custom_call.1} parent=15 // pred_fallthru
          _
      $region16: #{tpu_custom_call.1} parent=5 // pred_fallthru
        _
      %p152 = scmp.le.s32.totalorder 1, %s15
      %p153 = scmp.lt.s32.totalorder %s15, 5
      %p154 = pnand %p152, %p153
      %p155 = pneg %p154
      // Predicated region
      $region21: #{tpu_custom_call.1} parent=5 // pred_check
        _
      $region22: #{tpu_custom_call.1} parent=5 // pred_check_branch
        %157 = sbr.rel (%p154) target = $region24
      $region23: #{tpu_custom_call.1} parent=5 // pred_region
        %s158 = ssub.s32 %s15, 1
        %s159 = sand.u32 %s42, 1
        %s160 = scalar_lea.sflag [#allocation3], %s159
        %s161 = sand.u32 %s42, 1
        %s162 = smul.addr %s161, 256
        %s163 = scalar_lea.vmem [#allocation2], %s162
        // Predicated region
        $region25: #{tpu_custom_call.1} parent=23 // pred_check
          %p164 = pneg %p55
        $region26: #{tpu_custom_call.1} parent=23 // pred_check_branch
          %166 = sbr.rel (%p164) target = $region28
        $region27: #{tpu_custom_call.1} parent=23 // pred_region
          %167 = dma.done %s160, 4096
        $region28: #{tpu_custom_call.1} parent=23 // pred_fallthru
          _
        %s168 = sand.u32 %s42, 1
        %s169 = scalar_lea.sflag [#allocation3], %s168
        %s170 = sand.u32 %s42, 1
        %s171 = smul.addr %s170, 256
        %s172 = scalar_lea.vmem [#allocation2], %s171
        %p173 = pneg %p55
        %p174 = pneg %p52
        %p175 = pneg %p83
        %p176 = pneg %p80
        %s177 = sand.u32 %s70, 1
        %s178 = scalar_lea.sflag [#allocation4], %s177
        %s179 = sand.u32 %s70, 1
        %s180 = smul.addr %s179, 1024
        %s181 = scalar_lea.vmem [#allocation5], %s180
        %p182 = pneg %p109
        %p183 = pneg %p106
        %s184 = smul.u32 16, %s24
        %p185 = scmp.lt.s32.totalorder %s184, 31
        %s186 = scalar_select %p185, %s184, 31
        %s187 = smul.addr %s186, 4
        %s188 = scalar_lea.vmem %s2, %s187
        %s189 = smul.u32 16, %s24
        %s190 = smul.u32 16, %s25
        %s191 = smul.u32 16, %s24
        %s192 = smul.u32 16, %s25
        %s193 = smul.u32 16, %s24
        %p194 = scmp.lt.s32.totalorder %s193, 31
        %s195 = scalar_select %p194, %s193, 31
        %s196 = smul.addr %s195, 4
        %s197 = scalar_lea.vmem %s2, %s196
        %s198 = smul.u32 16, %s24
        %v199 = vld [vmem:[%s163] sm:$0xff]
        %v200 = vld [vmem:[%s163 + $0x8] sm:$0xff]
        %v201 = vld [vmem:[%s163 + $0x10] sm:$0xff]
        %v202 = vld [vmem:[%s163 + $0x18] sm:$0xff]
        %v203 = vld [vmem:[%s163 + $0x20] sm:$0xff]
        %v204 = vld [vmem:[%s163 + $0x28] sm:$0xff]
        %v205 = vld [vmem:[%s163 + $0x30] sm:$0xff]
        %v206 = vld [vmem:[%s163 + $0x38] sm:$0xff]
        %v207 = vld [vmem:[%s163 + $0x40] sm:$0xff]
        %v208 = vld [vmem:[%s163 + $0x48] sm:$0xff]
        %v209 = vld [vmem:[%s163 + $0x50] sm:$0xff]
        %v210 = vld [vmem:[%s163 + $0x58] sm:$0xff]
        %v211 = vld [vmem:[%s163 + $0x60] sm:$0xff]
        %v212 = vld [vmem:[%s163 + $0x68] sm:$0xff]
        %v213 = vld [vmem:[%s163 + $0x70] sm:$0xff]
        %v214 = vld [vmem:[%s163 + $0x78] sm:$0xff]
        %v215 = vld [vmem:[%s163 + $0x80] sm:$0xff]
        %v216 = vld [vmem:[%s163 + $0x88] sm:$0xff]
        %v217 = vld [vmem:[%s163 + $0x90] sm:$0xff]
        %v218 = vld [vmem:[%s163 + $0x98] sm:$0xff]
        %v219 = vld [vmem:[%s163 + $0xa0] sm:$0xff]
        %v220 = vld [vmem:[%s163 + $0xa8] sm:$0xff]
        %v221 = vld [vmem:[%s163 + $0xb0] sm:$0xff]
        %v222 = vld [vmem:[%s163 + $0xb8] sm:$0xff]
        %v223 = vld [vmem:[%s163 + $0xc0] sm:$0xff]
        %v224 = vld [vmem:[%s163 + $0xc8] sm:$0xff]
        %v225 = vld [vmem:[%s163 + $0xd0] sm:$0xff]
        %v226 = vld [vmem:[%s163 + $0xd8] sm:$0xff]
        %v227 = vld [vmem:[%s163 + $0xe0] sm:$0xff]
        %v228 = vld [vmem:[%s163 + $0xe8] sm:$0xff]
        %v229 = vld [vmem:[%s163 + $0xf0] sm:$0xff]
        %v230 = vld [vmem:[%s163 + $0xf8] sm:$0xff]
        %v231 = vlaneseq
        %v232 = vshrl.u32 %v231, 7
        %v233 = vcvt.s32.f32 %v232
        %v234 = vmul.f32 %v233, 0.275
        %v235 = vadd.f32 %v234, 0.0875
        %v268 = vlaneseq
        %v269 = vshrl.u32 %v268, 7
        %v270 = vsub.s32 0, %v269
        %v271 = vrot.slane %v199, %v270
        %v272 = vlaneseq
        %v273 = vshrl.u32 %v272, 7
        %v274 = vsub.s32 1, %v273
        %v275 = vrot.slane %v199, %v274
        %v276 = vlaneseq
        %v277 = vshrl.u32 %v276, 7
        %v278 = vsub.s32 2, %v277
        %v279 = vrot.slane %v199, %v278
        %v280 = vlaneseq
        %v281 = vshrl.u32 %v280, 7
        %v282 = vsub.s32 3, %v281
        %v283 = vrot.slane %v199, %v282
        %v284 = vlaneseq
        %v285 = vshrl.u32 %v284, 7
        %v286 = vsub.s32 4, %v285
        %v287 = vrot.slane %v199, %v286
        %v288 = vlaneseq
        %v289 = vshrl.u32 %v288, 7
        %v290 = vsub.s32 5, %v289
        %v291 = vrot.slane %v199, %v290
        %v292 = vlaneseq
        %v293 = vshrl.u32 %v292, 7
        %v294 = vsub.s32 6, %v293
        %v295 = vrot.slane %v199, %v294
        %v296 = vlaneseq
        %v297 = vshrl.u32 %v296, 7
        %v298 = vsub.s32 7, %v297
        %v299 = vrot.slane %v199, %v298
        %v300 = vlaneseq
        %v301 = vshrl.u32 %v300, 7
        %v302 = vsub.s32 0, %v301
        %v303 = vrot.slane %v200, %v302
        %v304 = vlaneseq
        %v305 = vshrl.u32 %v304, 7
        %v306 = vsub.s32 1, %v305
        %v307 = vrot.slane %v200, %v306
        %v308 = vlaneseq
        %v309 = vshrl.u32 %v308, 7
        %v310 = vsub.s32 2, %v309
        %v311 = vrot.slane %v200, %v310
        %v312 = vlaneseq
        %v313 = vshrl.u32 %v312, 7
        %v314 = vsub.s32 3, %v313
        %v315 = vrot.slane %v200, %v314
        %v316 = vlaneseq
        %v317 = vshrl.u32 %v316, 7
        %v318 = vsub.s32 4, %v317
        %v319 = vrot.slane %v200, %v318
        %v320 = vlaneseq
        %v321 = vshrl.u32 %v320, 7
        %v322 = vsub.s32 5, %v321
        %v323 = vrot.slane %v200, %v322
        %v324 = vlaneseq
        %v325 = vshrl.u32 %v324, 7
        %v326 = vsub.s32 6, %v325
        %v327 = vrot.slane %v200, %v326
        %v328 = vlaneseq
        %v329 = vshrl.u32 %v328, 7
        %v330 = vsub.s32 7, %v329
        %v331 = vrot.slane %v200, %v330
        %v332 = vlaneseq
        %v333 = vshrl.u32 %v332, 7
        %v334 = vsub.s32 0, %v333
        %v335 = vrot.slane %v201, %v334
        %v336 = vlaneseq
        %v337 = vshrl.u32 %v336, 7
        %v338 = vsub.s32 1, %v337
        %v339 = vrot.slane %v201, %v338
        %v340 = vlaneseq
        %v341 = vshrl.u32 %v340, 7
        %v342 = vsub.s32 2, %v341
        %v343 = vrot.slane %v201, %v342
        %v344 = vlaneseq
        %v345 = vshrl.u32 %v344, 7
        %v346 = vsub.s32 3, %v345
        %v347 = vrot.slane %v201, %v346
        %v348 = vlaneseq
        %v349 = vshrl.u32 %v348, 7
        %v350 = vsub.s32 4, %v349
        %v351 = vrot.slane %v201, %v350
        %v352 = vlaneseq
        %v353 = vshrl.u32 %v352, 7
        %v354 = vsub.s32 5, %v353
        %v355 = vrot.slane %v201, %v354
        %v356 = vlaneseq
        %v357 = vshrl.u32 %v356, 7
        %v358 = vsub.s32 6, %v357
        %v359 = vrot.slane %v201, %v358
        %v360 = vlaneseq
        %v361 = vshrl.u32 %v360, 7
        %v362 = vsub.s32 7, %v361
        %v363 = vrot.slane %v201, %v362
        %v364 = vlaneseq
        %v365 = vshrl.u32 %v364, 7
        %v366 = vsub.s32 0, %v365
        %v367 = vrot.slane %v202, %v366
        %v368 = vlaneseq
        %v369 = vshrl.u32 %v368, 7
        %v370 = vsub.s32 1, %v369
        %v371 = vrot.slane %v202, %v370
        %v372 = vlaneseq
        %v373 = vshrl.u32 %v372, 7
        %v374 = vsub.s32 2, %v373
        %v375 = vrot.slane %v202, %v374
        %v376 = vlaneseq
        %v377 = vshrl.u32 %v376, 7
        %v378 = vsub.s32 3, %v377
        %v379 = vrot.slane %v202, %v378
        %v380 = vlaneseq
        %v381 = vshrl.u32 %v380, 7
        %v382 = vsub.s32 4, %v381
        %v383 = vrot.slane %v202, %v382
        %v384 = vlaneseq
        %v385 = vshrl.u32 %v384, 7
        %v386 = vsub.s32 5, %v385
        %v387 = vrot.slane %v202, %v386
        %v388 = vlaneseq
        %v389 = vshrl.u32 %v388, 7
        %v390 = vsub.s32 6, %v389
        %v391 = vrot.slane %v202, %v390
        %v392 = vlaneseq
        %v393 = vshrl.u32 %v392, 7
        %v394 = vsub.s32 7, %v393
        %v395 = vrot.slane %v202, %v394
        %v396 = vlaneseq
        %v397 = vshrl.u32 %v396, 7
        %v398 = vsub.s32 0, %v397
        %v399 = vrot.slane %v203, %v398
        %v400 = vlaneseq
        %v401 = vshrl.u32 %v400, 7
        %v402 = vsub.s32 1, %v401
        %v403 = vrot.slane %v203, %v402
        %v404 = vlaneseq
        %v405 = vshrl.u32 %v404, 7
        %v406 = vsub.s32 2, %v405
        %v407 = vrot.slane %v203, %v406
        %v408 = vlaneseq
        %v409 = vshrl.u32 %v408, 7
        %v410 = vsub.s32 3, %v409
        %v411 = vrot.slane %v203, %v410
        %v412 = vlaneseq
        %v413 = vshrl.u32 %v412, 7
        %v414 = vsub.s32 4, %v413
        %v415 = vrot.slane %v203, %v414
        %v416 = vlaneseq
        %v417 = vshrl.u32 %v416, 7
        %v418 = vsub.s32 5, %v417
        %v419 = vrot.slane %v203, %v418
        %v420 = vlaneseq
        %v421 = vshrl.u32 %v420, 7
        %v422 = vsub.s32 6, %v421
        %v423 = vrot.slane %v203, %v422
        %v424 = vlaneseq
        %v425 = vshrl.u32 %v424, 7
        %v426 = vsub.s32 7, %v425
        %v427 = vrot.slane %v203, %v426
        %v428 = vlaneseq
        %v429 = vshrl.u32 %v428, 7
        %v430 = vsub.s32 0, %v429
        %v431 = vrot.slane %v204, %v430
        %v432 = vlaneseq
        %v433 = vshrl.u32 %v432, 7
        %v434 = vsub.s32 1, %v433
        %v435 = vrot.slane %v204, %v434
        %v436 = vlaneseq
        %v437 = vshrl.u32 %v436, 7
        %v438 = vsub.s32 2, %v437
        %v439 = vrot.slane %v204, %v438
        %v440 = vlaneseq
        %v441 = vshrl.u32 %v440, 7
        %v442 = vsub.s32 3, %v441
        %v443 = vrot.slane %v204, %v442
        %v444 = vlaneseq
        %v445 = vshrl.u32 %v444, 7
        %v446 = vsub.s32 4, %v445
        %v447 = vrot.slane %v204, %v446
        %v448 = vlaneseq
        %v449 = vshrl.u32 %v448, 7
        %v450 = vsub.s32 5, %v449
        %v451 = vrot.slane %v204, %v450
        %v452 = vlaneseq
        %v453 = vshrl.u32 %v452, 7
        %v454 = vsub.s32 6, %v453
        %v455 = vrot.slane %v204, %v454
        %v456 = vlaneseq
        %v457 = vshrl.u32 %v456, 7
        %v458 = vsub.s32 7, %v457
        %v459 = vrot.slane %v204, %v458
        %v460 = vlaneseq
        %v461 = vshrl.u32 %v460, 7
        %v462 = vsub.s32 0, %v461
        %v463 = vrot.slane %v205, %v462
        %v464 = vlaneseq
        %v465 = vshrl.u32 %v464, 7
        %v466 = vsub.s32 1, %v465
        %v467 = vrot.slane %v205, %v466
        %v468 = vlaneseq
        %v469 = vshrl.u32 %v468, 7
        %v470 = vsub.s32 2, %v469
        %v471 = vrot.slane %v205, %v470
        %v472 = vlaneseq
        %v473 = vshrl.u32 %v472, 7
        %v474 = vsub.s32 3, %v473
        %v475 = vrot.slane %v205, %v474
        %v476 = vlaneseq
        %v477 = vshrl.u32 %v476, 7
        %v478 = vsub.s32 4, %v477
        %v479 = vrot.slane %v205, %v478
        %v480 = vlaneseq
        %v481 = vshrl.u32 %v480, 7
        %v482 = vsub.s32 5, %v481
        %v483 = vrot.slane %v205, %v482
        %v484 = vlaneseq
        %v485 = vshrl.u32 %v484, 7
        %v486 = vsub.s32 6, %v485
        %v487 = vrot.slane %v205, %v486
        %v488 = vlaneseq
        %v489 = vshrl.u32 %v488, 7
        %v490 = vsub.s32 7, %v489
        %v491 = vrot.slane %v205, %v490
        %v492 = vlaneseq
        %v493 = vshrl.u32 %v492, 7
        %v494 = vsub.s32 0, %v493
        %v495 = vrot.slane %v206, %v494
        %v496 = vlaneseq
        %v497 = vshrl.u32 %v496, 7
        %v498 = vsub.s32 1, %v497
        %v499 = vrot.slane %v206, %v498
        %v500 = vlaneseq
        %v501 = vshrl.u32 %v500, 7
        %v502 = vsub.s32 2, %v501
        %v503 = vrot.slane %v206, %v502
        %v504 = vlaneseq
        %v505 = vshrl.u32 %v504, 7
        %v506 = vsub.s32 3, %v505
        %v507 = vrot.slane %v206, %v506
        %v508 = vlaneseq
        %v509 = vshrl.u32 %v508, 7
        %v510 = vsub.s32 4, %v509
        %v511 = vrot.slane %v206, %v510
        %v512 = vlaneseq
        %v513 = vshrl.u32 %v512, 7
        %v514 = vsub.s32 5, %v513
        %v515 = vrot.slane %v206, %v514
        %v516 = vlaneseq
        %v517 = vshrl.u32 %v516, 7
        %v518 = vsub.s32 6, %v517
        %v519 = vrot.slane %v206, %v518
        %v520 = vlaneseq
        %v521 = vshrl.u32 %v520, 7
        %v522 = vsub.s32 7, %v521
        %v523 = vrot.slane %v206, %v522
        %v524 = vlaneseq
        %v525 = vshrl.u32 %v524, 7
        %v526 = vsub.s32 0, %v525
        %v527 = vrot.slane %v207, %v526
        %v528 = vlaneseq
        %v529 = vshrl.u32 %v528, 7
        %v530 = vsub.s32 1, %v529
        %v531 = vrot.slane %v207, %v530
        %v532 = vlaneseq
        %v533 = vshrl.u32 %v532, 7
        %v534 = vsub.s32 2, %v533
        %v535 = vrot.slane %v207, %v534
        %v536 = vlaneseq
        %v537 = vshrl.u32 %v536, 7
        %v538 = vsub.s32 3, %v537
        %v539 = vrot.slane %v207, %v538
        %v540 = vlaneseq
        %v541 = vshrl.u32 %v540, 7
        %v542 = vsub.s32 4, %v541
        %v543 = vrot.slane %v207, %v542
        %v544 = vlaneseq
        %v545 = vshrl.u32 %v544, 7
        %v546 = vsub.s32 5, %v545
        %v547 = vrot.slane %v207, %v546
        %v548 = vlaneseq
        %v549 = vshrl.u32 %v548, 7
        %v550 = vsub.s32 6, %v549
        %v551 = vrot.slane %v207, %v550
        %v552 = vlaneseq
        %v553 = vshrl.u32 %v552, 7
        %v554 = vsub.s32 7, %v553
        %v555 = vrot.slane %v207, %v554
        %v556 = vlaneseq
        %v557 = vshrl.u32 %v556, 7
        %v558 = vsub.s32 0, %v557
        %v559 = vrot.slane %v208, %v558
        %v560 = vlaneseq
        %v561 = vshrl.u32 %v560, 7
        %v562 = vsub.s32 1, %v561
        %v563 = vrot.slane %v208, %v562
        %v564 = vlaneseq
        %v565 = vshrl.u32 %v564, 7
        %v566 = vsub.s32 2, %v565
        %v567 = vrot.slane %v208, %v566
        %v568 = vlaneseq
        %v569 = vshrl.u32 %v568, 7
        %v570 = vsub.s32 3, %v569
        %v571 = vrot.slane %v208, %v570
        %v572 = vlaneseq
        %v573 = vshrl.u32 %v572, 7
        %v574 = vsub.s32 4, %v573
        %v575 = vrot.slane %v208, %v574
        %v576 = vlaneseq
        %v577 = vshrl.u32 %v576, 7
        %v578 = vsub.s32 5, %v577
        %v579 = vrot.slane %v208, %v578
        %v580 = vlaneseq
        %v581 = vshrl.u32 %v580, 7
        %v582 = vsub.s32 6, %v581
        %v583 = vrot.slane %v208, %v582
        %v584 = vlaneseq
        %v585 = vshrl.u32 %v584, 7
        %v586 = vsub.s32 7, %v585
        %v587 = vrot.slane %v208, %v586
        %v588 = vlaneseq
        %v589 = vshrl.u32 %v588, 7
        %v590 = vsub.s32 0, %v589
        %v591 = vrot.slane %v209, %v590
        %v592 = vlaneseq
        %v593 = vshrl.u32 %v592, 7
        %v594 = vsub.s32 1, %v593
        %v595 = vrot.slane %v209, %v594
        %v596 = vlaneseq
        %v597 = vshrl.u32 %v596, 7
        %v598 = vsub.s32 2, %v597
        %v599 = vrot.slane %v209, %v598
        %v600 = vlaneseq
        %v601 = vshrl.u32 %v600, 7
        %v602 = vsub.s32 3, %v601
        %v603 = vrot.slane %v209, %v602
        %v604 = vlaneseq
        %v605 = vshrl.u32 %v604, 7
        %v606 = vsub.s32 4, %v605
        %v607 = vrot.slane %v209, %v606
        %v608 = vlaneseq
        %v609 = vshrl.u32 %v608, 7
        %v610 = vsub.s32 5, %v609
        %v611 = vrot.slane %v209, %v610
        %v612 = vlaneseq
        %v613 = vshrl.u32 %v612, 7
        %v614 = vsub.s32 6, %v613
        %v615 = vrot.slane %v209, %v614
        %v616 = vlaneseq
        %v617 = vshrl.u32 %v616, 7
        %v618 = vsub.s32 7, %v617
        %v619 = vrot.slane %v209, %v618
        %v620 = vlaneseq
        %v621 = vshrl.u32 %v620, 7
        %v622 = vsub.s32 0, %v621
        %v623 = vrot.slane %v210, %v622
        %v624 = vlaneseq
        %v625 = vshrl.u32 %v624, 7
        %v626 = vsub.s32 1, %v625
        %v627 = vrot.slane %v210, %v626
        %v628 = vlaneseq
        %v629 = vshrl.u32 %v628, 7
        %v630 = vsub.s32 2, %v629
        %v631 = vrot.slane %v210, %v630
        %v632 = vlaneseq
        %v633 = vshrl.u32 %v632, 7
        %v634 = vsub.s32 3, %v633
        %v635 = vrot.slane %v210, %v634
        %v636 = vlaneseq
        %v637 = vshrl.u32 %v636, 7
        %v638 = vsub.s32 4, %v637
        %v639 = vrot.slane %v210, %v638
        %v640 = vlaneseq
        %v641 = vshrl.u32 %v640, 7
        %v642 = vsub.s32 5, %v641
        %v643 = vrot.slane %v210, %v642
        %v644 = vlaneseq
        %v645 = vshrl.u32 %v644, 7
        %v646 = vsub.s32 6, %v645
        %v647 = vrot.slane %v210, %v646
        %v648 = vlaneseq
        %v649 = vshrl.u32 %v648, 7
        %v650 = vsub.s32 7, %v649
        %v651 = vrot.slane %v210, %v650
        %v652 = vlaneseq
        %v653 = vshrl.u32 %v652, 7
        %v654 = vsub.s32 0, %v653
        %v655 = vrot.slane %v211, %v654
        %v656 = vlaneseq
        %v657 = vshrl.u32 %v656, 7
        %v658 = vsub.s32 1, %v657
        %v659 = vrot.slane %v211, %v658
        %v660 = vlaneseq
        %v661 = vshrl.u32 %v660, 7
        %v662 = vsub.s32 2, %v661
        %v663 = vrot.slane %v211, %v662
        %v664 = vlaneseq
        %v665 = vshrl.u32 %v664, 7
        %v666 = vsub.s32 3, %v665
        %v667 = vrot.slane %v211, %v666
        %v668 = vlaneseq
        %v669 = vshrl.u32 %v668, 7
        %v670 = vsub.s32 4, %v669
        %v671 = vrot.slane %v211, %v670
        %v672 = vlaneseq
        %v673 = vshrl.u32 %v672, 7
        %v674 = vsub.s32 5, %v673
        %v675 = vrot.slane %v211, %v674
        %v676 = vlaneseq
        %v677 = vshrl.u32 %v676, 7
        %v678 = vsub.s32 6, %v677
        %v679 = vrot.slane %v211, %v678
        %v680 = vlaneseq
        %v681 = vshrl.u32 %v680, 7
        %v682 = vsub.s32 7, %v681
        %v683 = vrot.slane %v211, %v682
        %v684 = vlaneseq
        %v685 = vshrl.u32 %v684, 7
        %v686 = vsub.s32 0, %v685
        %v687 = vrot.slane %v212, %v686
        %v688 = vlaneseq
        %v689 = vshrl.u32 %v688, 7
        %v690 = vsub.s32 1, %v689
        %v691 = vrot.slane %v212, %v690
        %v692 = vlaneseq
        %v693 = vshrl.u32 %v692, 7
        %v694 = vsub.s32 2, %v693
        %v695 = vrot.slane %v212, %v694
        %v696 = vlaneseq
        %v697 = vshrl.u32 %v696, 7
        %v698 = vsub.s32 3, %v697
        %v699 = vrot.slane %v212, %v698
        %v700 = vlaneseq
        %v701 = vshrl.u32 %v700, 7
        %v702 = vsub.s32 4, %v701
        %v703 = vrot.slane %v212, %v702
        %v704 = vlaneseq
        %v705 = vshrl.u32 %v704, 7
        %v706 = vsub.s32 5, %v705
        %v707 = vrot.slane %v212, %v706
        %v708 = vlaneseq
        %v709 = vshrl.u32 %v708, 7
        %v710 = vsub.s32 6, %v709
        %v711 = vrot.slane %v212, %v710
        %v712 = vlaneseq
        %v713 = vshrl.u32 %v712, 7
        %v714 = vsub.s32 7, %v713
        %v715 = vrot.slane %v212, %v714
        %v716 = vlaneseq
        %v717 = vshrl.u32 %v716, 7
        %v718 = vsub.s32 0, %v717
        %v719 = vrot.slane %v213, %v718
        %v720 = vlaneseq
        %v721 = vshrl.u32 %v720, 7
        %v722 = vsub.s32 1, %v721
        %v723 = vrot.slane %v213, %v722
        %v724 = vlaneseq
        %v725 = vshrl.u32 %v724, 7
        %v726 = vsub.s32 2, %v725
        %v727 = vrot.slane %v213, %v726
        %v728 = vlaneseq
        %v729 = vshrl.u32 %v728, 7
        %v730 = vsub.s32 3, %v729
        %v731 = vrot.slane %v213, %v730
        %v732 = vlaneseq
        %v733 = vshrl.u32 %v732, 7
        %v734 = vsub.s32 4, %v733
        %v735 = vrot.slane %v213, %v734
        %v736 = vlaneseq
        %v737 = vshrl.u32 %v736, 7
        %v738 = vsub.s32 5, %v737
        %v739 = vrot.slane %v213, %v738
        %v740 = vlaneseq
        %v741 = vshrl.u32 %v740, 7
        %v742 = vsub.s32 6, %v741
        %v743 = vrot.slane %v213, %v742
        %v744 = vlaneseq
        %v745 = vshrl.u32 %v744, 7
        %v746 = vsub.s32 7, %v745
        %v747 = vrot.slane %v213, %v746
        %v748 = vlaneseq
        %v749 = vshrl.u32 %v748, 7
        %v750 = vsub.s32 0, %v749
        %v751 = vrot.slane %v214, %v750
        %v752 = vlaneseq
        %v753 = vshrl.u32 %v752, 7
        %v754 = vsub.s32 1, %v753
        %v755 = vrot.slane %v214, %v754
        %v756 = vlaneseq
        %v757 = vshrl.u32 %v756, 7
        %v758 = vsub.s32 2, %v757
        %v759 = vrot.slane %v214, %v758
        %v760 = vlaneseq
        %v761 = vshrl.u32 %v760, 7
        %v762 = vsub.s32 3, %v761
        %v763 = vrot.slane %v214, %v762
        %v764 = vlaneseq
        %v765 = vshrl.u32 %v764, 7
        %v766 = vsub.s32 4, %v765
        %v767 = vrot.slane %v214, %v766
        %v768 = vlaneseq
        %v769 = vshrl.u32 %v768, 7
        %v770 = vsub.s32 5, %v769
        %v771 = vrot.slane %v214, %v770
        %v772 = vlaneseq
        %v773 = vshrl.u32 %v772, 7
        %v774 = vsub.s32 6, %v773
        %v775 = vrot.slane %v214, %v774
        %v776 = vlaneseq
        %v777 = vshrl.u32 %v776, 7
        %v778 = vsub.s32 7, %v777
        %v779 = vrot.slane %v214, %v778
        %v780 = vlaneseq
        %v781 = vshrl.u32 %v780, 7
        %v782 = vsub.s32 0, %v781
        %v783 = vrot.slane %v215, %v782
        %v784 = vlaneseq
        %v785 = vshrl.u32 %v784, 7
        %v786 = vsub.s32 1, %v785
        %v787 = vrot.slane %v215, %v786
        %v788 = vlaneseq
        %v789 = vshrl.u32 %v788, 7
        %v790 = vsub.s32 2, %v789
        %v791 = vrot.slane %v215, %v790
        %v792 = vlaneseq
        %v793 = vshrl.u32 %v792, 7
        %v794 = vsub.s32 3, %v793
        %v795 = vrot.slane %v215, %v794
        %v796 = vlaneseq
        %v797 = vshrl.u32 %v796, 7
        %v798 = vsub.s32 4, %v797
        %v799 = vrot.slane %v215, %v798
        %v800 = vlaneseq
        %v801 = vshrl.u32 %v800, 7
        %v802 = vsub.s32 5, %v801
        %v803 = vrot.slane %v215, %v802
        %v804 = vlaneseq
        %v805 = vshrl.u32 %v804, 7
        %v806 = vsub.s32 6, %v805
        %v807 = vrot.slane %v215, %v806
        %v808 = vlaneseq
        %v809 = vshrl.u32 %v808, 7
        %v810 = vsub.s32 7, %v809
        %v811 = vrot.slane %v215, %v810
        %v812 = vlaneseq
        %v813 = vshrl.u32 %v812, 7
        %v814 = vsub.s32 0, %v813
        %v815 = vrot.slane %v216, %v814
        %v816 = vlaneseq
        %v817 = vshrl.u32 %v816, 7
        %v818 = vsub.s32 1, %v817
        %v819 = vrot.slane %v216, %v818
        %v820 = vlaneseq
        %v821 = vshrl.u32 %v820, 7
        %v822 = vsub.s32 2, %v821
        %v823 = vrot.slane %v216, %v822
        %v824 = vlaneseq
        %v825 = vshrl.u32 %v824, 7
        %v826 = vsub.s32 3, %v825
        %v827 = vrot.slane %v216, %v826
        %v828 = vlaneseq
        %v829 = vshrl.u32 %v828, 7
        %v830 = vsub.s32 4, %v829
        %v831 = vrot.slane %v216, %v830
        %v832 = vlaneseq
        %v833 = vshrl.u32 %v832, 7
        %v834 = vsub.s32 5, %v833
        %v835 = vrot.slane %v216, %v834
        %v836 = vlaneseq
        %v837 = vshrl.u32 %v836, 7
        %v838 = vsub.s32 6, %v837
        %v839 = vrot.slane %v216, %v838
        %v840 = vlaneseq
        %v841 = vshrl.u32 %v840, 7
        %v842 = vsub.s32 7, %v841
        %v843 = vrot.slane %v216, %v842
        %v844 = vlaneseq
        %v845 = vshrl.u32 %v844, 7
        %v846 = vsub.s32 0, %v845
        %v847 = vrot.slane %v217, %v846
        %v848 = vlaneseq
        %v849 = vshrl.u32 %v848, 7
        %v850 = vsub.s32 1, %v849
        %v851 = vrot.slane %v217, %v850
        %v852 = vlaneseq
        %v853 = vshrl.u32 %v852, 7
        %v854 = vsub.s32 2, %v853
        %v855 = vrot.slane %v217, %v854
        %v856 = vlaneseq
        %v857 = vshrl.u32 %v856, 7
        %v858 = vsub.s32 3, %v857
        %v859 = vrot.slane %v217, %v858
        %v860 = vlaneseq
        %v861 = vshrl.u32 %v860, 7
        %v862 = vsub.s32 4, %v861
        %v863 = vrot.slane %v217, %v862
        %v864 = vlaneseq
        %v865 = vshrl.u32 %v864, 7
        %v866 = vsub.s32 5, %v865
        %v867 = vrot.slane %v217, %v866
        %v868 = vlaneseq
        %v869 = vshrl.u32 %v868, 7
        %v870 = vsub.s32 6, %v869
        %v871 = vrot.slane %v217, %v870
        %v872 = vlaneseq
        %v873 = vshrl.u32 %v872, 7
        %v874 = vsub.s32 7, %v873
        %v875 = vrot.slane %v217, %v874
        %v876 = vlaneseq
        %v877 = vshrl.u32 %v876, 7
        %v878 = vsub.s32 0, %v877
        %v879 = vrot.slane %v218, %v878
        %v880 = vlaneseq
        %v881 = vshrl.u32 %v880, 7
        %v882 = vsub.s32 1, %v881
        %v883 = vrot.slane %v218, %v882
        %v884 = vlaneseq
        %v885 = vshrl.u32 %v884, 7
        %v886 = vsub.s32 2, %v885
        %v887 = vrot.slane %v218, %v886
        %v888 = vlaneseq
        %v889 = vshrl.u32 %v888, 7
        %v890 = vsub.s32 3, %v889
        %v891 = vrot.slane %v218, %v890
        %v892 = vlaneseq
        %v893 = vshrl.u32 %v892, 7
        %v894 = vsub.s32 4, %v893
        %v895 = vrot.slane %v218, %v894
        %v896 = vlaneseq
        %v897 = vshrl.u32 %v896, 7
        %v898 = vsub.s32 5, %v897
        %v899 = vrot.slane %v218, %v898
        %v900 = vlaneseq
        %v901 = vshrl.u32 %v900, 7
        %v902 = vsub.s32 6, %v901
        %v903 = vrot.slane %v218, %v902
        %v904 = vlaneseq
        %v905 = vshrl.u32 %v904, 7
        %v906 = vsub.s32 7, %v905
        %v907 = vrot.slane %v218, %v906
        %v908 = vlaneseq
        %v909 = vshrl.u32 %v908, 7
        %v910 = vsub.s32 0, %v909
        %v911 = vrot.slane %v219, %v910
        %v912 = vlaneseq
        %v913 = vshrl.u32 %v912, 7
        %v914 = vsub.s32 1, %v913
        %v915 = vrot.slane %v219, %v914
        %v916 = vlaneseq
        %v917 = vshrl.u32 %v916, 7
        %v918 = vsub.s32 2, %v917
        %v919 = vrot.slane %v219, %v918
        %v920 = vlaneseq
        %v921 = vshrl.u32 %v920, 7
        %v922 = vsub.s32 3, %v921
        %v923 = vrot.slane %v219, %v922
        %v924 = vlaneseq
        %v925 = vshrl.u32 %v924, 7
        %v926 = vsub.s32 4, %v925
        %v927 = vrot.slane %v219, %v926
        %v928 = vlaneseq
        %v929 = vshrl.u32 %v928, 7
        %v930 = vsub.s32 5, %v929
        %v931 = vrot.slane %v219, %v930
        %v932 = vlaneseq
        %v933 = vshrl.u32 %v932, 7
        %v934 = vsub.s32 6, %v933
        %v935 = vrot.slane %v219, %v934
        %v936 = vlaneseq
        %v937 = vshrl.u32 %v936, 7
        %v938 = vsub.s32 7, %v937
        %v939 = vrot.slane %v219, %v938
        %v940 = vlaneseq
        %v941 = vshrl.u32 %v940, 7
        %v942 = vsub.s32 0, %v941
        %v943 = vrot.slane %v220, %v942
        %v944 = vlaneseq
        %v945 = vshrl.u32 %v944, 7
        %v946 = vsub.s32 1, %v945
        %v947 = vrot.slane %v220, %v946
        %v948 = vlaneseq
        %v949 = vshrl.u32 %v948, 7
        %v950 = vsub.s32 2, %v949
        %v951 = vrot.slane %v220, %v950
        %v952 = vlaneseq
        %v953 = vshrl.u32 %v952, 7
        %v954 = vsub.s32 3, %v953
        %v955 = vrot.slane %v220, %v954
        %v956 = vlaneseq
        %v957 = vshrl.u32 %v956, 7
        %v958 = vsub.s32 4, %v957
        %v959 = vrot.slane %v220, %v958
        %v960 = vlaneseq
        %v961 = vshrl.u32 %v960, 7
        %v962 = vsub.s32 5, %v961
        %v963 = vrot.slane %v220, %v962
        %v964 = vlaneseq
        %v965 = vshrl.u32 %v964, 7
        %v966 = vsub.s32 6, %v965
        %v967 = vrot.slane %v220, %v966
        %v968 = vlaneseq
        %v969 = vshrl.u32 %v968, 7
        %v970 = vsub.s32 7, %v969
        %v971 = vrot.slane %v220, %v970
        %v972 = vlaneseq
        %v973 = vshrl.u32 %v972, 7
        %v974 = vsub.s32 0, %v973
        %v975 = vrot.slane %v221, %v974
        %v976 = vlaneseq
        %v977 = vshrl.u32 %v976, 7
        %v978 = vsub.s32 1, %v977
        %v979 = vrot.slane %v221, %v978
        %v980 = vlaneseq
        %v981 = vshrl.u32 %v980, 7
        %v982 = vsub.s32 2, %v981
        %v983 = vrot.slane %v221, %v982
        %v984 = vlaneseq
        %v985 = vshrl.u32 %v984, 7
        %v986 = vsub.s32 3, %v985
        %v987 = vrot.slane %v221, %v986
        %v988 = vlaneseq
        %v989 = vshrl.u32 %v988, 7
        %v990 = vsub.s32 4, %v989
        %v991 = vrot.slane %v221, %v990
        %v992 = vlaneseq
        %v993 = vshrl.u32 %v992, 7
        %v994 = vsub.s32 5, %v993
        %v995 = vrot.slane %v221, %v994
        %v996 = vlaneseq
        %v997 = vshrl.u32 %v996, 7
        %v998 = vsub.s32 6, %v997
        %v999 = vrot.slane %v221, %v998
        %v1000 = vlaneseq
        %v1001 = vshrl.u32 %v1000, 7
        %v1002 = vsub.s32 7, %v1001
        %v1003 = vrot.slane %v221, %v1002
        %v1004 = vlaneseq
        %v1005 = vshrl.u32 %v1004, 7
        %v1006 = vsub.s32 0, %v1005
        %v1007 = vrot.slane %v222, %v1006
        %v1008 = vlaneseq
        %v1009 = vshrl.u32 %v1008, 7
        %v1010 = vsub.s32 1, %v1009
        %v1011 = vrot.slane %v222, %v1010
        %v1012 = vlaneseq
        %v1013 = vshrl.u32 %v1012, 7
        %v1014 = vsub.s32 2, %v1013
        %v1015 = vrot.slane %v222, %v1014
        %v1016 = vlaneseq
        %v1017 = vshrl.u32 %v1016, 7
        %v1018 = vsub.s32 3, %v1017
        %v1019 = vrot.slane %v222, %v1018
        %v1020 = vlaneseq
        %v1021 = vshrl.u32 %v1020, 7
        %v1022 = vsub.s32 4, %v1021
        %v1023 = vrot.slane %v222, %v1022
        %v1024 = vlaneseq
        %v1025 = vshrl.u32 %v1024, 7
        %v1026 = vsub.s32 5, %v1025
        %v1027 = vrot.slane %v222, %v1026
        %v1028 = vlaneseq
        %v1029 = vshrl.u32 %v1028, 7
        %v1030 = vsub.s32 6, %v1029
        %v1031 = vrot.slane %v222, %v1030
        %v1032 = vlaneseq
        %v1033 = vshrl.u32 %v1032, 7
        %v1034 = vsub.s32 7, %v1033
        %v1035 = vrot.slane %v222, %v1034
        %v1036 = vlaneseq
        %v1037 = vshrl.u32 %v1036, 7
        %v1038 = vsub.s32 0, %v1037
        %v1039 = vrot.slane %v223, %v1038
        %v1040 = vlaneseq
        %v1041 = vshrl.u32 %v1040, 7
        %v1042 = vsub.s32 1, %v1041
        %v1043 = vrot.slane %v223, %v1042
        %v1044 = vlaneseq
        %v1045 = vshrl.u32 %v1044, 7
        %v1046 = vsub.s32 2, %v1045
        %v1047 = vrot.slane %v223, %v1046
        %v1048 = vlaneseq
        %v1049 = vshrl.u32 %v1048, 7
        %v1050 = vsub.s32 3, %v1049
        %v1051 = vrot.slane %v223, %v1050
        %v1052 = vlaneseq
        %v1053 = vshrl.u32 %v1052, 7
        %v1054 = vsub.s32 4, %v1053
        %v1055 = vrot.slane %v223, %v1054
        %v1056 = vlaneseq
        %v1057 = vshrl.u32 %v1056, 7
        %v1058 = vsub.s32 5, %v1057
        %v1059 = vrot.slane %v223, %v1058
        %v1060 = vlaneseq
        %v1061 = vshrl.u32 %v1060, 7
        %v1062 = vsub.s32 6, %v1061
        %v1063 = vrot.slane %v223, %v1062
        %v1064 = vlaneseq
        %v1065 = vshrl.u32 %v1064, 7
        %v1066 = vsub.s32 7, %v1065
        %v1067 = vrot.slane %v223, %v1066
        %v1068 = vlaneseq
        %v1069 = vshrl.u32 %v1068, 7
        %v1070 = vsub.s32 0, %v1069
        %v1071 = vrot.slane %v224, %v1070
        %v1072 = vlaneseq
        %v1073 = vshrl.u32 %v1072, 7
        %v1074 = vsub.s32 1, %v1073
        %v1075 = vrot.slane %v224, %v1074
        %v1076 = vlaneseq
        %v1077 = vshrl.u32 %v1076, 7
        %v1078 = vsub.s32 2, %v1077
        %v1079 = vrot.slane %v224, %v1078
        %v1080 = vlaneseq
        %v1081 = vshrl.u32 %v1080, 7
        %v1082 = vsub.s32 3, %v1081
        %v1083 = vrot.slane %v224, %v1082
        %v1084 = vlaneseq
        %v1085 = vshrl.u32 %v1084, 7
        %v1086 = vsub.s32 4, %v1085
        %v1087 = vrot.slane %v224, %v1086
        %v1088 = vlaneseq
        %v1089 = vshrl.u32 %v1088, 7
        %v1090 = vsub.s32 5, %v1089
        %v1091 = vrot.slane %v224, %v1090
        %v1092 = vlaneseq
        %v1093 = vshrl.u32 %v1092, 7
        %v1094 = vsub.s32 6, %v1093
        %v1095 = vrot.slane %v224, %v1094
        %v1096 = vlaneseq
        %v1097 = vshrl.u32 %v1096, 7
        %v1098 = vsub.s32 7, %v1097
        %v1099 = vrot.slane %v224, %v1098
        %v1100 = vlaneseq
        %v1101 = vshrl.u32 %v1100, 7
        %v1102 = vsub.s32 0, %v1101
        %v1103 = vrot.slane %v225, %v1102
        %v1104 = vlaneseq
        %v1105 = vshrl.u32 %v1104, 7
        %v1106 = vsub.s32 1, %v1105
        %v1107 = vrot.slane %v225, %v1106
        %v1108 = vlaneseq
        %v1109 = vshrl.u32 %v1108, 7
        %v1110 = vsub.s32 2, %v1109
        %v1111 = vrot.slane %v225, %v1110
        %v1112 = vlaneseq
        %v1113 = vshrl.u32 %v1112, 7
        %v1114 = vsub.s32 3, %v1113
        %v1115 = vrot.slane %v225, %v1114
        %v1116 = vlaneseq
        %v1117 = vshrl.u32 %v1116, 7
        %v1118 = vsub.s32 4, %v1117
        %v1119 = vrot.slane %v225, %v1118
        %v1120 = vlaneseq
        %v1121 = vshrl.u32 %v1120, 7
        %v1122 = vsub.s32 5, %v1121
        %v1123 = vrot.slane %v225, %v1122
        %v1124 = vlaneseq
        %v1125 = vshrl.u32 %v1124, 7
        %v1126 = vsub.s32 6, %v1125
        %v1127 = vrot.slane %v225, %v1126
        %v1128 = vlaneseq
        %v1129 = vshrl.u32 %v1128, 7
        %v1130 = vsub.s32 7, %v1129
        %v1131 = vrot.slane %v225, %v1130
        %v1132 = vlaneseq
        %v1133 = vshrl.u32 %v1132, 7
        %v1134 = vsub.s32 0, %v1133
        %v1135 = vrot.slane %v226, %v1134
        %v1136 = vlaneseq
        %v1137 = vshrl.u32 %v1136, 7
        %v1138 = vsub.s32 1, %v1137
        %v1139 = vrot.slane %v226, %v1138
        %v1140 = vlaneseq
        %v1141 = vshrl.u32 %v1140, 7
        %v1142 = vsub.s32 2, %v1141
        %v1143 = vrot.slane %v226, %v1142
        %v1144 = vlaneseq
        %v1145 = vshrl.u32 %v1144, 7
        %v1146 = vsub.s32 3, %v1145
        %v1147 = vrot.slane %v226, %v1146
        %v1148 = vlaneseq
        %v1149 = vshrl.u32 %v1148, 7
        %v1150 = vsub.s32 4, %v1149
        %v1151 = vrot.slane %v226, %v1150
        %v1152 = vlaneseq
        %v1153 = vshrl.u32 %v1152, 7
        %v1154 = vsub.s32 5, %v1153
        %v1155 = vrot.slane %v226, %v1154
        %v1156 = vlaneseq
        %v1157 = vshrl.u32 %v1156, 7
        %v1158 = vsub.s32 6, %v1157
        %v1159 = vrot.slane %v226, %v1158
        %v1160 = vlaneseq
        %v1161 = vshrl.u32 %v1160, 7
        %v1162 = vsub.s32 7, %v1161
        %v1163 = vrot.slane %v226, %v1162
        %v1164 = vlaneseq
        %v1165 = vshrl.u32 %v1164, 7
        %v1166 = vsub.s32 0, %v1165
        %v1167 = vrot.slane %v227, %v1166
        %v1168 = vlaneseq
        %v1169 = vshrl.u32 %v1168, 7
        %v1170 = vsub.s32 1, %v1169
        %v1171 = vrot.slane %v227, %v1170
        %v1172 = vlaneseq
        %v1173 = vshrl.u32 %v1172, 7
        %v1174 = vsub.s32 2, %v1173
        %v1175 = vrot.slane %v227, %v1174
        %v1176 = vlaneseq
        %v1177 = vshrl.u32 %v1176, 7
        %v1178 = vsub.s32 3, %v1177
        %v1179 = vrot.slane %v227, %v1178
        %v1180 = vlaneseq
        %v1181 = vshrl.u32 %v1180, 7
        %v1182 = vsub.s32 4, %v1181
        %v1183 = vrot.slane %v227, %v1182
        %v1184 = vlaneseq
        %v1185 = vshrl.u32 %v1184, 7
        %v1186 = vsub.s32 5, %v1185
        %v1187 = vrot.slane %v227, %v1186
        %v1188 = vlaneseq
        %v1189 = vshrl.u32 %v1188, 7
        %v1190 = vsub.s32 6, %v1189
        %v1191 = vrot.slane %v227, %v1190
        %v1192 = vlaneseq
        %v1193 = vshrl.u32 %v1192, 7
        %v1194 = vsub.s32 7, %v1193
        %v1195 = vrot.slane %v227, %v1194
        %v1196 = vlaneseq
        %v1197 = vshrl.u32 %v1196, 7
        %v1198 = vsub.s32 0, %v1197
        %v1199 = vrot.slane %v228, %v1198
        %v1200 = vlaneseq
        %v1201 = vshrl.u32 %v1200, 7
        %v1202 = vsub.s32 1, %v1201
        %v1203 = vrot.slane %v228, %v1202
        %v1204 = vlaneseq
        %v1205 = vshrl.u32 %v1204, 7
        %v1206 = vsub.s32 2, %v1205
        %v1207 = vrot.slane %v228, %v1206
        %v1208 = vlaneseq
        %v1209 = vshrl.u32 %v1208, 7
        %v1210 = vsub.s32 3, %v1209
        %v1211 = vrot.slane %v228, %v1210
        %v1212 = vlaneseq
        %v1213 = vshrl.u32 %v1212, 7
        %v1214 = vsub.s32 4, %v1213
        %v1215 = vrot.slane %v228, %v1214
        %v1216 = vlaneseq
        %v1217 = vshrl.u32 %v1216, 7
        %v1218 = vsub.s32 5, %v1217
        %v1219 = vrot.slane %v228, %v1218
        %v1220 = vlaneseq
        %v1221 = vshrl.u32 %v1220, 7
        %v1222 = vsub.s32 6, %v1221
        %v1223 = vrot.slane %v228, %v1222
        %v1224 = vlaneseq
        %v1225 = vshrl.u32 %v1224, 7
        %v1226 = vsub.s32 7, %v1225
        %v1227 = vrot.slane %v228, %v1226
        %v1228 = vlaneseq
        %v1229 = vshrl.u32 %v1228, 7
        %v1230 = vsub.s32 0, %v1229
        %v1231 = vrot.slane %v229, %v1230
        %v1232 = vlaneseq
        %v1233 = vshrl.u32 %v1232, 7
        %v1234 = vsub.s32 1, %v1233
        %v1235 = vrot.slane %v229, %v1234
        %v1236 = vlaneseq
        %v1237 = vshrl.u32 %v1236, 7
        %v1238 = vsub.s32 2, %v1237
        %v1239 = vrot.slane %v229, %v1238
        %v1240 = vlaneseq
        %v1241 = vshrl.u32 %v1240, 7
        %v1242 = vsub.s32 3, %v1241
        %v1243 = vrot.slane %v229, %v1242
        %v1244 = vlaneseq
        %v1245 = vshrl.u32 %v1244, 7
        %v1246 = vsub.s32 4, %v1245
        %v1247 = vrot.slane %v229, %v1246
        %v1248 = vlaneseq
        %v1249 = vshrl.u32 %v1248, 7
        %v1250 = vsub.s32 5, %v1249
        %v1251 = vrot.slane %v229, %v1250
        %v1252 = vlaneseq
        %v1253 = vshrl.u32 %v1252, 7
        %v1254 = vsub.s32 6, %v1253
        %v1255 = vrot.slane %v229, %v1254
        %v1256 = vlaneseq
        %v1257 = vshrl.u32 %v1256, 7
        %v1258 = vsub.s32 7, %v1257
        %v1259 = vrot.slane %v229, %v1258
        %v1260 = vlaneseq
        %v1261 = vshrl.u32 %v1260, 7
        %v1262 = vsub.s32 0, %v1261
        %v1263 = vrot.slane %v230, %v1262
        %v1264 = vlaneseq
        %v1265 = vshrl.u32 %v1264, 7
        %v1266 = vsub.s32 1, %v1265
        %v1267 = vrot.slane %v230, %v1266
        %v1268 = vlaneseq
        %v1269 = vshrl.u32 %v1268, 7
        %v1270 = vsub.s32 2, %v1269
        %v1271 = vrot.slane %v230, %v1270
        %v1272 = vlaneseq
        %v1273 = vshrl.u32 %v1272, 7
        %v1274 = vsub.s32 3, %v1273
        %v1275 = vrot.slane %v230, %v1274
        %v1276 = vlaneseq
        %v1277 = vshrl.u32 %v1276, 7
        %v1278 = vsub.s32 4, %v1277
        %v1279 = vrot.slane %v230, %v1278
        %v1280 = vlaneseq
        %v1281 = vshrl.u32 %v1280, 7
        %v1282 = vsub.s32 5, %v1281
        %v1283 = vrot.slane %v230, %v1282
        %v1284 = vlaneseq
        %v1285 = vshrl.u32 %v1284, 7
        %v1286 = vsub.s32 6, %v1285
        %v1287 = vrot.slane %v230, %v1286
        %v1288 = vlaneseq
        %v1289 = vshrl.u32 %v1288, 7
        %v1290 = vsub.s32 7, %v1289
        %v1291 = vrot.slane %v230, %v1290
        %v1548 = vsub.f32 %v271, %v235
        %v1549 = vsub.f32 %v275, %v235
        %v1550 = vsub.f32 %v279, %v235
        %v1551 = vsub.f32 %v283, %v235
        %v1552 = vsub.f32 %v287, %v235
        %v1553 = vsub.f32 %v291, %v235
        %v1554 = vsub.f32 %v295, %v235
        %v1555 = vsub.f32 %v299, %v235
        %v1556 = vsub.f32 %v303, %v235
        %v1557 = vsub.f32 %v307, %v235
        %v1558 = vsub.f32 %v311, %v235
        %v1559 = vsub.f32 %v315, %v235
        %v1560 = vsub.f32 %v319, %v235
        %v1561 = vsub.f32 %v323, %v235
        %v1562 = vsub.f32 %v327, %v235
        %v1563 = vsub.f32 %v331, %v235
        %v1564 = vsub.f32 %v335, %v235
        %v1565 = vsub.f32 %v339, %v235
        %v1566 = vsub.f32 %v343, %v235
        %v1567 = vsub.f32 %v347, %v235
        %v1568 = vsub.f32 %v351, %v235
        %v1569 = vsub.f32 %v355, %v235
        %v1570 = vsub.f32 %v359, %v235
        %v1571 = vsub.f32 %v363, %v235
        %v1572 = vsub.f32 %v367, %v235
        %v1573 = vsub.f32 %v371, %v235
        %v1574 = vsub.f32 %v375, %v235
        %v1575 = vsub.f32 %v379, %v235
        %v1576 = vsub.f32 %v383, %v235
        %v1577 = vsub.f32 %v387, %v235
        %v1578 = vsub.f32 %v391, %v235
        %v1579 = vsub.f32 %v395, %v235
        %v1580 = vsub.f32 %v399, %v235
        %v1581 = vsub.f32 %v403, %v235
        %v1582 = vsub.f32 %v407, %v235
        %v1583 = vsub.f32 %v411, %v235
        %v1584 = vsub.f32 %v415, %v235
        %v1585 = vsub.f32 %v419, %v235
        %v1586 = vsub.f32 %v423, %v235
        %v1587 = vsub.f32 %v427, %v235
        %v1588 = vsub.f32 %v431, %v235
        %v1589 = vsub.f32 %v435, %v235
        %v1590 = vsub.f32 %v439, %v235
        %v1591 = vsub.f32 %v443, %v235
        %v1592 = vsub.f32 %v447, %v235
        %v1593 = vsub.f32 %v451, %v235
        %v1594 = vsub.f32 %v455, %v235
        %v1595 = vsub.f32 %v459, %v235
        %v1596 = vsub.f32 %v463, %v235
        %v1597 = vsub.f32 %v467, %v235
        %v1598 = vsub.f32 %v471, %v235
        %v1599 = vsub.f32 %v475, %v235
        %v1600 = vsub.f32 %v479, %v235
        %v1601 = vsub.f32 %v483, %v235
        %v1602 = vsub.f32 %v487, %v235
        %v1603 = vsub.f32 %v491, %v235
        %v1604 = vsub.f32 %v495, %v235
        %v1605 = vsub.f32 %v499, %v235
        %v1606 = vsub.f32 %v503, %v235
        %v1607 = vsub.f32 %v507, %v235
        %v1608 = vsub.f32 %v511, %v235
        %v1609 = vsub.f32 %v515, %v235
        %v1610 = vsub.f32 %v519, %v235
        %v1611 = vsub.f32 %v523, %v235
        %v1612 = vsub.f32 %v527, %v235
        %v1613 = vsub.f32 %v531, %v235
        %v1614 = vsub.f32 %v535, %v235
        %v1615 = vsub.f32 %v539, %v235
        %v1616 = vsub.f32 %v543, %v235
        %v1617 = vsub.f32 %v547, %v235
        %v1618 = vsub.f32 %v551, %v235
        %v1619 = vsub.f32 %v555, %v235
        %v1620 = vsub.f32 %v559, %v235
        %v1621 = vsub.f32 %v563, %v235
        %v1622 = vsub.f32 %v567, %v235
        %v1623 = vsub.f32 %v571, %v235
        %v1624 = vsub.f32 %v575, %v235
        %v1625 = vsub.f32 %v579, %v235
        %v1626 = vsub.f32 %v583, %v235
        %v1627 = vsub.f32 %v587, %v235
        %v1628 = vsub.f32 %v591, %v235
        %v1629 = vsub.f32 %v595, %v235
        %v1630 = vsub.f32 %v599, %v235
        %v1631 = vsub.f32 %v603, %v235
        %v1632 = vsub.f32 %v607, %v235
        %v1633 = vsub.f32 %v611, %v235
        %v1634 = vsub.f32 %v615, %v235
        %v1635 = vsub.f32 %v619, %v235
        %v1636 = vsub.f32 %v623, %v235
        %v1637 = vsub.f32 %v627, %v235
        %v1638 = vsub.f32 %v631, %v235
        %v1639 = vsub.f32 %v635, %v235
        %v1640 = vsub.f32 %v639, %v235
        %v1641 = vsub.f32 %v643, %v235
        %v1642 = vsub.f32 %v647, %v235
        %v1643 = vsub.f32 %v651, %v235
        %v1644 = vsub.f32 %v655, %v235
        %v1645 = vsub.f32 %v659, %v235
        %v1646 = vsub.f32 %v663, %v235
        %v1647 = vsub.f32 %v667, %v235
        %v1648 = vsub.f32 %v671, %v235
        %v1649 = vsub.f32 %v675, %v235
        %v1650 = vsub.f32 %v679, %v235
        %v1651 = vsub.f32 %v683, %v235
        %v1652 = vsub.f32 %v687, %v235
        %v1653 = vsub.f32 %v691, %v235
        %v1654 = vsub.f32 %v695, %v235
        %v1655 = vsub.f32 %v699, %v235
        %v1656 = vsub.f32 %v703, %v235
        %v1657 = vsub.f32 %v707, %v235
        %v1658 = vsub.f32 %v711, %v235
        %v1659 = vsub.f32 %v715, %v235
        %v1660 = vsub.f32 %v719, %v235
        %v1661 = vsub.f32 %v723, %v235
        %v1662 = vsub.f32 %v727, %v235
        %v1663 = vsub.f32 %v731, %v235
        %v1664 = vsub.f32 %v735, %v235
        %v1665 = vsub.f32 %v739, %v235
        %v1666 = vsub.f32 %v743, %v235
        %v1667 = vsub.f32 %v747, %v235
        %v1668 = vsub.f32 %v751, %v235
        %v1669 = vsub.f32 %v755, %v235
        %v1670 = vsub.f32 %v759, %v235
        %v1671 = vsub.f32 %v763, %v235
        %v1672 = vsub.f32 %v767, %v235
        %v1673 = vsub.f32 %v771, %v235
        %v1674 = vsub.f32 %v775, %v235
        %v1675 = vsub.f32 %v779, %v235
        %v1676 = vsub.f32 %v783, %v235
        %v1677 = vsub.f32 %v787, %v235
        %v1678 = vsub.f32 %v791, %v235
        %v1679 = vsub.f32 %v795, %v235
        %v1680 = vsub.f32 %v799, %v235
        %v1681 = vsub.f32 %v803, %v235
        %v1682 = vsub.f32 %v807, %v235
        %v1683 = vsub.f32 %v811, %v235
        %v1684 = vsub.f32 %v815, %v235
        %v1685 = vsub.f32 %v819, %v235
        %v1686 = vsub.f32 %v823, %v235
        %v1687 = vsub.f32 %v827, %v235
        %v1688 = vsub.f32 %v831, %v235
        %v1689 = vsub.f32 %v835, %v235
        %v1690 = vsub.f32 %v839, %v235
        %v1691 = vsub.f32 %v843, %v235
        %v1692 = vsub.f32 %v847, %v235
        %v1693 = vsub.f32 %v851, %v235
        %v1694 = vsub.f32 %v855, %v235
        %v1695 = vsub.f32 %v859, %v235
        %v1696 = vsub.f32 %v863, %v235
        %v1697 = vsub.f32 %v867, %v235
        %v1698 = vsub.f32 %v871, %v235
        %v1699 = vsub.f32 %v875, %v235
        %v1700 = vsub.f32 %v879, %v235
        %v1701 = vsub.f32 %v883, %v235
        %v1702 = vsub.f32 %v887, %v235
        %v1703 = vsub.f32 %v891, %v235
        %v1704 = vsub.f32 %v895, %v235
        %v1705 = vsub.f32 %v899, %v235
        %v1706 = vsub.f32 %v903, %v235
        %v1707 = vsub.f32 %v907, %v235
        %v1708 = vsub.f32 %v911, %v235
        %v1709 = vsub.f32 %v915, %v235
        %v1710 = vsub.f32 %v919, %v235
        %v1711 = vsub.f32 %v923, %v235
        %v1712 = vsub.f32 %v927, %v235
        %v1713 = vsub.f32 %v931, %v235
        %v1714 = vsub.f32 %v935, %v235
        %v1715 = vsub.f32 %v939, %v235
        %v1716 = vsub.f32 %v943, %v235
        %v1717 = vsub.f32 %v947, %v235
        %v1718 = vsub.f32 %v951, %v235
        %v1719 = vsub.f32 %v955, %v235
        %v1720 = vsub.f32 %v959, %v235
        %v1721 = vsub.f32 %v963, %v235
        %v1722 = vsub.f32 %v967, %v235
        %v1723 = vsub.f32 %v971, %v235
        %v1724 = vsub.f32 %v975, %v235
        %v1725 = vsub.f32 %v979, %v235
        %v1726 = vsub.f32 %v983, %v235
        %v1727 = vsub.f32 %v987, %v235
        %v1728 = vsub.f32 %v991, %v235
        %v1729 = vsub.f32 %v995, %v235
        %v1730 = vsub.f32 %v999, %v235
        %v1731 = vsub.f32 %v1003, %v235
        %v1732 = vsub.f32 %v1007, %v235
        %v1733 = vsub.f32 %v1011, %v235
        %v1734 = vsub.f32 %v1015, %v235
        %v1735 = vsub.f32 %v1019, %v235
        %v1736 = vsub.f32 %v1023, %v235
        %v1737 = vsub.f32 %v1027, %v235
        %v1738 = vsub.f32 %v1031, %v235
        %v1739 = vsub.f32 %v1035, %v235
        %v1740 = vsub.f32 %v1039, %v235
        %v1741 = vsub.f32 %v1043, %v235
        %v1742 = vsub.f32 %v1047, %v235
        %v1743 = vsub.f32 %v1051, %v235
        %v1744 = vsub.f32 %v1055, %v235
        %v1745 = vsub.f32 %v1059, %v235
        %v1746 = vsub.f32 %v1063, %v235
        %v1747 = vsub.f32 %v1067, %v235
        %v1748 = vsub.f32 %v1071, %v235
        %v1749 = vsub.f32 %v1075, %v235
        %v1750 = vsub.f32 %v1079, %v235
        %v1751 = vsub.f32 %v1083, %v235
        %v1752 = vsub.f32 %v1087, %v235
        %v1753 = vsub.f32 %v1091, %v235
        %v1754 = vsub.f32 %v1095, %v235
        %v1755 = vsub.f32 %v1099, %v235
        %v1756 = vsub.f32 %v1103, %v235
        %v1757 = vsub.f32 %v1107, %v235
        %v1758 = vsub.f32 %v1111, %v235
        %v1759 = vsub.f32 %v1115, %v235
        %v1760 = vsub.f32 %v1119, %v235
        %v1761 = vsub.f32 %v1123, %v235
        %v1762 = vsub.f32 %v1127, %v235
        %v1763 = vsub.f32 %v1131, %v235
        %v1764 = vsub.f32 %v1135, %v235
        %v1765 = vsub.f32 %v1139, %v235
        %v1766 = vsub.f32 %v1143, %v235
        %v1767 = vsub.f32 %v1147, %v235
        %v1768 = vsub.f32 %v1151, %v235
        %v1769 = vsub.f32 %v1155, %v235
        %v1770 = vsub.f32 %v1159, %v235
        %v1771 = vsub.f32 %v1163, %v235
        %v1772 = vsub.f32 %v1167, %v235
        %v1773 = vsub.f32 %v1171, %v235
        %v1774 = vsub.f32 %v1175, %v235
        %v1775 = vsub.f32 %v1179, %v235
        %v1776 = vsub.f32 %v1183, %v235
        %v1777 = vsub.f32 %v1187, %v235
        %v1778 = vsub.f32 %v1191, %v235
        %v1779 = vsub.f32 %v1195, %v235
        %v1780 = vsub.f32 %v1199, %v235
        %v1781 = vsub.f32 %v1203, %v235
        %v1782 = vsub.f32 %v1207, %v235
        %v1783 = vsub.f32 %v1211, %v235
        %v1784 = vsub.f32 %v1215, %v235
        %v1785 = vsub.f32 %v1219, %v235
        %v1786 = vsub.f32 %v1223, %v235
        %v1787 = vsub.f32 %v1227, %v235
        %v1788 = vsub.f32 %v1231, %v235
        %v1789 = vsub.f32 %v1235, %v235
        %v1790 = vsub.f32 %v1239, %v235
        %v1791 = vsub.f32 %v1243, %v235
        %v1792 = vsub.f32 %v1247, %v235
        %v1793 = vsub.f32 %v1251, %v235
        %v1794 = vsub.f32 %v1255, %v235
        %v1795 = vsub.f32 %v1259, %v235
        %v1796 = vsub.f32 %v1263, %v235
        %v1797 = vsub.f32 %v1267, %v235
        %v1798 = vsub.f32 %v1271, %v235
        %v1799 = vsub.f32 %v1275, %v235
        %v1800 = vsub.f32 %v1279, %v235
        %v1801 = vsub.f32 %v1283, %v235
        %v1802 = vsub.f32 %v1287, %v235
        %v1803 = vsub.f32 %v1291, %v235
        %v1804 = vand.u32 2147483647, %v1548
        %v1805 = vand.u32 2147483647, %v1549
        %v1806 = vand.u32 2147483647, %v1550
        %v1807 = vand.u32 2147483647, %v1551
        %v1808 = vand.u32 2147483647, %v1552
        %v1809 = vand.u32 2147483647, %v1553
        %v1810 = vand.u32 2147483647, %v1554
        %v1811 = vand.u32 2147483647, %v1555
        %v1812 = vand.u32 2147483647, %v1556
        %v1813 = vand.u32 2147483647, %v1557
        %v1814 = vand.u32 2147483647, %v1558
        %v1815 = vand.u32 2147483647, %v1559
        %v1816 = vand.u32 2147483647, %v1560
        %v1817 = vand.u32 2147483647, %v1561
        %v1818 = vand.u32 2147483647, %v1562
        %v1819 = vand.u32 2147483647, %v1563
        %v1820 = vand.u32 2147483647, %v1564
        %v1821 = vand.u32 2147483647, %v1565
        %v1822 = vand.u32 2147483647, %v1566
        %v1823 = vand.u32 2147483647, %v1567
        %v1824 = vand.u32 2147483647, %v1568
        %v1825 = vand.u32 2147483647, %v1569
        %v1826 = vand.u32 2147483647, %v1570
        %v1827 = vand.u32 2147483647, %v1571
        %v1828 = vand.u32 2147483647, %v1572
        %v1829 = vand.u32 2147483647, %v1573
        %v1830 = vand.u32 2147483647, %v1574
        %v1831 = vand.u32 2147483647, %v1575
        %v1832 = vand.u32 2147483647, %v1576
        %v1833 = vand.u32 2147483647, %v1577
        %v1834 = vand.u32 2147483647, %v1578
        %v1835 = vand.u32 2147483647, %v1579
        %v1836 = vand.u32 2147483647, %v1580
        %v1837 = vand.u32 2147483647, %v1581
        %v1838 = vand.u32 2147483647, %v1582
        %v1839 = vand.u32 2147483647, %v1583
        %v1840 = vand.u32 2147483647, %v1584
        %v1841 = vand.u32 2147483647, %v1585
        %v1842 = vand.u32 2147483647, %v1586
        %v1843 = vand.u32 2147483647, %v1587
        %v1844 = vand.u32 2147483647, %v1588
        %v1845 = vand.u32 2147483647, %v1589
        %v1846 = vand.u32 2147483647, %v1590
        %v1847 = vand.u32 2147483647, %v1591
        %v1848 = vand.u32 2147483647, %v1592
        %v1849 = vand.u32 2147483647, %v1593
        %v1850 = vand.u32 2147483647, %v1594
        %v1851 = vand.u32 2147483647, %v1595
        %v1852 = vand.u32 2147483647, %v1596
        %v1853 = vand.u32 2147483647, %v1597
        %v1854 = vand.u32 2147483647, %v1598
        %v1855 = vand.u32 2147483647, %v1599
        %v1856 = vand.u32 2147483647, %v1600
        %v1857 = vand.u32 2147483647, %v1601
        %v1858 = vand.u32 2147483647, %v1602
        %v1859 = vand.u32 2147483647, %v1603
        %v1860 = vand.u32 2147483647, %v1604
        %v1861 = vand.u32 2147483647, %v1605
        %v1862 = vand.u32 2147483647, %v1606
        %v1863 = vand.u32 2147483647, %v1607
        %v1864 = vand.u32 2147483647, %v1608
        %v1865 = vand.u32 2147483647, %v1609
        %v1866 = vand.u32 2147483647, %v1610
        %v1867 = vand.u32 2147483647, %v1611
        %v1868 = vand.u32 2147483647, %v1612
        %v1869 = vand.u32 2147483647, %v1613
        %v1870 = vand.u32 2147483647, %v1614
        %v1871 = vand.u32 2147483647, %v1615
        %v1872 = vand.u32 2147483647, %v1616
        %v1873 = vand.u32 2147483647, %v1617
        %v1874 = vand.u32 2147483647, %v1618
        %v1875 = vand.u32 2147483647, %v1619
        %v1876 = vand.u32 2147483647, %v1620
        %v1877 = vand.u32 2147483647, %v1621
        %v1878 = vand.u32 2147483647, %v1622
        %v1879 = vand.u32 2147483647, %v1623
        %v1880 = vand.u32 2147483647, %v1624
        %v1881 = vand.u32 2147483647, %v1625
        %v1882 = vand.u32 2147483647, %v1626
        %v1883 = vand.u32 2147483647, %v1627
        %v1884 = vand.u32 2147483647, %v1628
        %v1885 = vand.u32 2147483647, %v1629
        %v1886 = vand.u32 2147483647, %v1630
        %v1887 = vand.u32 2147483647, %v1631
        %v1888 = vand.u32 2147483647, %v1632
        %v1889 = vand.u32 2147483647, %v1633
        %v1890 = vand.u32 2147483647, %v1634
        %v1891 = vand.u32 2147483647, %v1635
        %v1892 = vand.u32 2147483647, %v1636
        %v1893 = vand.u32 2147483647, %v1637
        %v1894 = vand.u32 2147483647, %v1638
        %v1895 = vand.u32 2147483647, %v1639
        %v1896 = vand.u32 2147483647, %v1640
        %v1897 = vand.u32 2147483647, %v1641
        %v1898 = vand.u32 2147483647, %v1642
        %v1899 = vand.u32 2147483647, %v1643
        %v1900 = vand.u32 2147483647, %v1644
        %v1901 = vand.u32 2147483647, %v1645
        %v1902 = vand.u32 2147483647, %v1646
        %v1903 = vand.u32 2147483647, %v1647
        %v1904 = vand.u32 2147483647, %v1648
        %v1905 = vand.u32 2147483647, %v1649
        %v1906 = vand.u32 2147483647, %v1650
        %v1907 = vand.u32 2147483647, %v1651
        %v1908 = vand.u32 2147483647, %v1652
        %v1909 = vand.u32 2147483647, %v1653
        %v1910 = vand.u32 2147483647, %v1654
        %v1911 = vand.u32 2147483647, %v1655
        %v1912 = vand.u32 2147483647, %v1656
        %v1913 = vand.u32 2147483647, %v1657
        %v1914 = vand.u32 2147483647, %v1658
        %v1915 = vand.u32 2147483647, %v1659
        %v1916 = vand.u32 2147483647, %v1660
        %v1917 = vand.u32 2147483647, %v1661
        %v1918 = vand.u32 2147483647, %v1662
        %v1919 = vand.u32 2147483647, %v1663
        %v1920 = vand.u32 2147483647, %v1664
        %v1921 = vand.u32 2147483647, %v1665
        %v1922 = vand.u32 2147483647, %v1666
        %v1923 = vand.u32 2147483647, %v1667
        %v1924 = vand.u32 2147483647, %v1668
        %v1925 = vand.u32 2147483647, %v1669
        %v1926 = vand.u32 2147483647, %v1670
        %v1927 = vand.u32 2147483647, %v1671
        %v1928 = vand.u32 2147483647, %v1672
        %v1929 = vand.u32 2147483647, %v1673
        %v1930 = vand.u32 2147483647, %v1674
        %v1931 = vand.u32 2147483647, %v1675
        %v1932 = vand.u32 2147483647, %v1676
        %v1933 = vand.u32 2147483647, %v1677
        %v1934 = vand.u32 2147483647, %v1678
        %v1935 = vand.u32 2147483647, %v1679
        %v1936 = vand.u32 2147483647, %v1680
        %v1937 = vand.u32 2147483647, %v1681
        %v1938 = vand.u32 2147483647, %v1682
        %v1939 = vand.u32 2147483647, %v1683
        %v1940 = vand.u32 2147483647, %v1684
        %v1941 = vand.u32 2147483647, %v1685
        %v1942 = vand.u32 2147483647, %v1686
        %v1943 = vand.u32 2147483647, %v1687
        %v1944 = vand.u32 2147483647, %v1688
        %v1945 = vand.u32 2147483647, %v1689
        %v1946 = vand.u32 2147483647, %v1690
        %v1947 = vand.u32 2147483647, %v1691
        %v1948 = vand.u32 2147483647, %v1692
        %v1949 = vand.u32 2147483647, %v1693
        %v1950 = vand.u32 2147483647, %v1694
        %v1951 = vand.u32 2147483647, %v1695
        %v1952 = vand.u32 2147483647, %v1696
        %v1953 = vand.u32 2147483647, %v1697
        %v1954 = vand.u32 2147483647, %v1698
        %v1955 = vand.u32 2147483647, %v1699
        %v1956 = vand.u32 2147483647, %v1700
        %v1957 = vand.u32 2147483647, %v1701
        %v1958 = vand.u32 2147483647, %v1702
        %v1959 = vand.u32 2147483647, %v1703
        %v1960 = vand.u32 2147483647, %v1704
        %v1961 = vand.u32 2147483647, %v1705
        %v1962 = vand.u32 2147483647, %v1706
        %v1963 = vand.u32 2147483647, %v1707
        %v1964 = vand.u32 2147483647, %v1708
        %v1965 = vand.u32 2147483647, %v1709
        %v1966 = vand.u32 2147483647, %v1710
        %v1967 = vand.u32 2147483647, %v1711
        %v1968 = vand.u32 2147483647, %v1712
        %v1969 = vand.u32 2147483647, %v1713
        %v1970 = vand.u32 2147483647, %v1714
        %v1971 = vand.u32 2147483647, %v1715
        %v1972 = vand.u32 2147483647, %v1716
        %v1973 = vand.u32 2147483647, %v1717
        %v1974 = vand.u32 2147483647, %v1718
        %v1975 = vand.u32 2147483647, %v1719
        %v1976 = vand.u32 2147483647, %v1720
        %v1977 = vand.u32 2147483647, %v1721
        %v1978 = vand.u32 2147483647, %v1722
        %v1979 = vand.u32 2147483647, %v1723
        %v1980 = vand.u32 2147483647, %v1724
        %v1981 = vand.u32 2147483647, %v1725
        %v1982 = vand.u32 2147483647, %v1726
        %v1983 = vand.u32 2147483647, %v1727
        %v1984 = vand.u32 2147483647, %v1728
        %v1985 = vand.u32 2147483647, %v1729
        %v1986 = vand.u32 2147483647, %v1730
        %v1987 = vand.u32 2147483647, %v1731
        %v1988 = vand.u32 2147483647, %v1732
        %v1989 = vand.u32 2147483647, %v1733
        %v1990 = vand.u32 2147483647, %v1734
        %v1991 = vand.u32 2147483647, %v1735
        %v1992 = vand.u32 2147483647, %v1736
        %v1993 = vand.u32 2147483647, %v1737
        %v1994 = vand.u32 2147483647, %v1738
        %v1995 = vand.u32 2147483647, %v1739
        %v1996 = vand.u32 2147483647, %v1740
        %v1997 = vand.u32 2147483647, %v1741
        %v1998 = vand.u32 2147483647, %v1742
        %v1999 = vand.u32 2147483647, %v1743
        %v2000 = vand.u32 2147483647, %v1744
        %v2001 = vand.u32 2147483647, %v1745
        %v2002 = vand.u32 2147483647, %v1746
        %v2003 = vand.u32 2147483647, %v1747
        %v2004 = vand.u32 2147483647, %v1748
        %v2005 = vand.u32 2147483647, %v1749
        %v2006 = vand.u32 2147483647, %v1750
        %v2007 = vand.u32 2147483647, %v1751
        %v2008 = vand.u32 2147483647, %v1752
        %v2009 = vand.u32 2147483647, %v1753
        %v2010 = vand.u32 2147483647, %v1754
        %v2011 = vand.u32 2147483647, %v1755
        %v2012 = vand.u32 2147483647, %v1756
        %v2013 = vand.u32 2147483647, %v1757
        %v2014 = vand.u32 2147483647, %v1758
        %v2015 = vand.u32 2147483647, %v1759
        %v2016 = vand.u32 2147483647, %v1760
        %v2017 = vand.u32 2147483647, %v1761
        %v2018 = vand.u32 2147483647, %v1762
        %v2019 = vand.u32 2147483647, %v1763
        %v2020 = vand.u32 2147483647, %v1764
        %v2021 = vand.u32 2147483647, %v1765
        %v2022 = vand.u32 2147483647, %v1766
        %v2023 = vand.u32 2147483647, %v1767
        %v2024 = vand.u32 2147483647, %v1768
        %v2025 = vand.u32 2147483647, %v1769
        %v2026 = vand.u32 2147483647, %v1770
        %v2027 = vand.u32 2147483647, %v1771
        %v2028 = vand.u32 2147483647, %v1772
        %v2029 = vand.u32 2147483647, %v1773
        %v2030 = vand.u32 2147483647, %v1774
        %v2031 = vand.u32 2147483647, %v1775
        %v2032 = vand.u32 2147483647, %v1776
        %v2033 = vand.u32 2147483647, %v1777
        %v2034 = vand.u32 2147483647, %v1778
        %v2035 = vand.u32 2147483647, %v1779
        %v2036 = vand.u32 2147483647, %v1780
        %v2037 = vand.u32 2147483647, %v1781
        %v2038 = vand.u32 2147483647, %v1782
        %v2039 = vand.u32 2147483647, %v1783
        %v2040 = vand.u32 2147483647, %v1784
        %v2041 = vand.u32 2147483647, %v1785
        %v2042 = vand.u32 2147483647, %v1786
        %v2043 = vand.u32 2147483647, %v1787
        %v2044 = vand.u32 2147483647, %v1788
        %v2045 = vand.u32 2147483647, %v1789
        %v2046 = vand.u32 2147483647, %v1790
        %v2047 = vand.u32 2147483647, %v1791
        %v2048 = vand.u32 2147483647, %v1792
        %v2049 = vand.u32 2147483647, %v1793
        %v2050 = vand.u32 2147483647, %v1794
        %v2051 = vand.u32 2147483647, %v1795
        %v2052 = vand.u32 2147483647, %v1796
        %v2053 = vand.u32 2147483647, %v1797
        %v2054 = vand.u32 2147483647, %v1798
        %v2055 = vand.u32 2147483647, %v1799
        %v2056 = vand.u32 2147483647, %v1800
        %v2057 = vand.u32 2147483647, %v1801
        %v2058 = vand.u32 2147483647, %v1802
        %v2059 = vand.u32 2147483647, %v1803
        %v2060 = vsub.f32 0.1375, %v1804
        %v2061 = vsub.f32 0.1375, %v1805
        %v2062 = vsub.f32 0.1375, %v1806
        %v2063 = vsub.f32 0.1375, %v1807
        %v2064 = vsub.f32 0.1375, %v1808
        %v2065 = vsub.f32 0.1375, %v1809
        %v2066 = vsub.f32 0.1375, %v1810
        %v2067 = vsub.f32 0.1375, %v1811
        %v2068 = vsub.f32 0.1375, %v1812
        %v2069 = vsub.f32 0.1375, %v1813
        %v2070 = vsub.f32 0.1375, %v1814
        %v2071 = vsub.f32 0.1375, %v1815
        %v2072 = vsub.f32 0.1375, %v1816
        %v2073 = vsub.f32 0.1375, %v1817
        %v2074 = vsub.f32 0.1375, %v1818
        %v2075 = vsub.f32 0.1375, %v1819
        %v2076 = vsub.f32 0.1375, %v1820
        %v2077 = vsub.f32 0.1375, %v1821
        %v2078 = vsub.f32 0.1375, %v1822
        %v2079 = vsub.f32 0.1375, %v1823
        %v2080 = vsub.f32 0.1375, %v1824
        %v2081 = vsub.f32 0.1375, %v1825
        %v2082 = vsub.f32 0.1375, %v1826
        %v2083 = vsub.f32 0.1375, %v1827
        %v2084 = vsub.f32 0.1375, %v1828
        %v2085 = vsub.f32 0.1375, %v1829
        %v2086 = vsub.f32 0.1375, %v1830
        %v2087 = vsub.f32 0.1375, %v1831
        %v2088 = vsub.f32 0.1375, %v1832
        %v2089 = vsub.f32 0.1375, %v1833
        %v2090 = vsub.f32 0.1375, %v1834
        %v2091 = vsub.f32 0.1375, %v1835
        %v2092 = vsub.f32 0.1375, %v1836
        %v2093 = vsub.f32 0.1375, %v1837
        %v2094 = vsub.f32 0.1375, %v1838
        %v2095 = vsub.f32 0.1375, %v1839
        %v2096 = vsub.f32 0.1375, %v1840
        %v2097 = vsub.f32 0.1375, %v1841
        %v2098 = vsub.f32 0.1375, %v1842
        %v2099 = vsub.f32 0.1375, %v1843
        %v2100 = vsub.f32 0.1375, %v1844
        %v2101 = vsub.f32 0.1375, %v1845
        %v2102 = vsub.f32 0.1375, %v1846
        %v2103 = vsub.f32 0.1375, %v1847
        %v2104 = vsub.f32 0.1375, %v1848
        %v2105 = vsub.f32 0.1375, %v1849
        %v2106 = vsub.f32 0.1375, %v1850
        %v2107 = vsub.f32 0.1375, %v1851
        %v2108 = vsub.f32 0.1375, %v1852
        %v2109 = vsub.f32 0.1375, %v1853
        %v2110 = vsub.f32 0.1375, %v1854
        %v2111 = vsub.f32 0.1375, %v1855
        %v2112 = vsub.f32 0.1375, %v1856
        %v2113 = vsub.f32 0.1375, %v1857
        %v2114 = vsub.f32 0.1375, %v1858
        %v2115 = vsub.f32 0.1375, %v1859
        %v2116 = vsub.f32 0.1375, %v1860
        %v2117 = vsub.f32 0.1375, %v1861
        %v2118 = vsub.f32 0.1375, %v1862
        %v2119 = vsub.f32 0.1375, %v1863
        %v2120 = vsub.f32 0.1375, %v1864
        %v2121 = vsub.f32 0.1375, %v1865
        %v2122 = vsub.f32 0.1375, %v1866
        %v2123 = vsub.f32 0.1375, %v1867
        %v2124 = vsub.f32 0.1375, %v1868
        %v2125 = vsub.f32 0.1375, %v1869
        %v2126 = vsub.f32 0.1375, %v1870
        %v2127 = vsub.f32 0.1375, %v1871
        %v2128 = vsub.f32 0.1375, %v1872
        %v2129 = vsub.f32 0.1375, %v1873
        %v2130 = vsub.f32 0.1375, %v1874
        %v2131 = vsub.f32 0.1375, %v1875
        %v2132 = vsub.f32 0.1375, %v1876
        %v2133 = vsub.f32 0.1375, %v1877
        %v2134 = vsub.f32 0.1375, %v1878
        %v2135 = vsub.f32 0.1375, %v1879
        %v2136 = vsub.f32 0.1375, %v1880
        %v2137 = vsub.f32 0.1375, %v1881
        %v2138 = vsub.f32 0.1375, %v1882
        %v2139 = vsub.f32 0.1375, %v1883
        %v2140 = vsub.f32 0.1375, %v1884
        %v2141 = vsub.f32 0.1375, %v1885
        %v2142 = vsub.f32 0.1375, %v1886
        %v2143 = vsub.f32 0.1375, %v1887
        %v2144 = vsub.f32 0.1375, %v1888
        %v2145 = vsub.f32 0.1375, %v1889
        %v2146 = vsub.f32 0.1375, %v1890
        %v2147 = vsub.f32 0.1375, %v1891
        %v2148 = vsub.f32 0.1375, %v1892
        %v2149 = vsub.f32 0.1375, %v1893
        %v2150 = vsub.f32 0.1375, %v1894
        %v2151 = vsub.f32 0.1375, %v1895
        %v2152 = vsub.f32 0.1375, %v1896
        %v2153 = vsub.f32 0.1375, %v1897
        %v2154 = vsub.f32 0.1375, %v1898
        %v2155 = vsub.f32 0.1375, %v1899
        %v2156 = vsub.f32 0.1375, %v1900
        %v2157 = vsub.f32 0.1375, %v1901
        %v2158 = vsub.f32 0.1375, %v1902
        %v2159 = vsub.f32 0.1375, %v1903
        %v2160 = vsub.f32 0.1375, %v1904
        %v2161 = vsub.f32 0.1375, %v1905
        %v2162 = vsub.f32 0.1375, %v1906
        %v2163 = vsub.f32 0.1375, %v1907
        %v2164 = vsub.f32 0.1375, %v1908
        %v2165 = vsub.f32 0.1375, %v1909
        %v2166 = vsub.f32 0.1375, %v1910
        %v2167 = vsub.f32 0.1375, %v1911
        %v2168 = vsub.f32 0.1375, %v1912
        %v2169 = vsub.f32 0.1375, %v1913
        %v2170 = vsub.f32 0.1375, %v1914
        %v2171 = vsub.f32 0.1375, %v1915
        %v2172 = vsub.f32 0.1375, %v1916
        %v2173 = vsub.f32 0.1375, %v1917
        %v2174 = vsub.f32 0.1375, %v1918
        %v2175 = vsub.f32 0.1375, %v1919
        %v2176 = vsub.f32 0.1375, %v1920
        %v2177 = vsub.f32 0.1375, %v1921
        %v2178 = vsub.f32 0.1375, %v1922
        %v2179 = vsub.f32 0.1375, %v1923
        %v2180 = vsub.f32 0.1375, %v1924
        %v2181 = vsub.f32 0.1375, %v1925
        %v2182 = vsub.f32 0.1375, %v1926
        %v2183 = vsub.f32 0.1375, %v1927
        %v2184 = vsub.f32 0.1375, %v1928
        %v2185 = vsub.f32 0.1375, %v1929
        %v2186 = vsub.f32 0.1375, %v1930
        %v2187 = vsub.f32 0.1375, %v1931
        %v2188 = vsub.f32 0.1375, %v1932
        %v2189 = vsub.f32 0.1375, %v1933
        %v2190 = vsub.f32 0.1375, %v1934
        %v2191 = vsub.f32 0.1375, %v1935
        %v2192 = vsub.f32 0.1375, %v1936
        %v2193 = vsub.f32 0.1375, %v1937
        %v2194 = vsub.f32 0.1375, %v1938
        %v2195 = vsub.f32 0.1375, %v1939
        %v2196 = vsub.f32 0.1375, %v1940
        %v2197 = vsub.f32 0.1375, %v1941
        %v2198 = vsub.f32 0.1375, %v1942
        %v2199 = vsub.f32 0.1375, %v1943
        %v2200 = vsub.f32 0.1375, %v1944
        %v2201 = vsub.f32 0.1375, %v1945
        %v2202 = vsub.f32 0.1375, %v1946
        %v2203 = vsub.f32 0.1375, %v1947
        %v2204 = vsub.f32 0.1375, %v1948
        %v2205 = vsub.f32 0.1375, %v1949
        %v2206 = vsub.f32 0.1375, %v1950
        %v2207 = vsub.f32 0.1375, %v1951
        %v2208 = vsub.f32 0.1375, %v1952
        %v2209 = vsub.f32 0.1375, %v1953
        %v2210 = vsub.f32 0.1375, %v1954
        %v2211 = vsub.f32 0.1375, %v1955
        %v2212 = vsub.f32 0.1375, %v1956
        %v2213 = vsub.f32 0.1375, %v1957
        %v2214 = vsub.f32 0.1375, %v1958
        %v2215 = vsub.f32 0.1375, %v1959
        %v2216 = vsub.f32 0.1375, %v1960
        %v2217 = vsub.f32 0.1375, %v1961
        %v2218 = vsub.f32 0.1375, %v1962
        %v2219 = vsub.f32 0.1375, %v1963
        %v2220 = vsub.f32 0.1375, %v1964
        %v2221 = vsub.f32 0.1375, %v1965
        %v2222 = vsub.f32 0.1375, %v1966
        %v2223 = vsub.f32 0.1375, %v1967
        %v2224 = vsub.f32 0.1375, %v1968
        %v2225 = vsub.f32 0.1375, %v1969
        %v2226 = vsub.f32 0.1375, %v1970
        %v2227 = vsub.f32 0.1375, %v1971
        %v2228 = vsub.f32 0.1375, %v1972
        %v2229 = vsub.f32 0.1375, %v1973
        %v2230 = vsub.f32 0.1375, %v1974
        %v2231 = vsub.f32 0.1375, %v1975
        %v2232 = vsub.f32 0.1375, %v1976
        %v2233 = vsub.f32 0.1375, %v1977
        %v2234 = vsub.f32 0.1375, %v1978
        %v2235 = vsub.f32 0.1375, %v1979
        %v2236 = vsub.f32 0.1375, %v1980
        %v2237 = vsub.f32 0.1375, %v1981
        %v2238 = vsub.f32 0.1375, %v1982
        %v2239 = vsub.f32 0.1375, %v1983
        %v2240 = vsub.f32 0.1375, %v1984
        %v2241 = vsub.f32 0.1375, %v1985
        %v2242 = vsub.f32 0.1375, %v1986
        %v2243 = vsub.f32 0.1375, %v1987
        %v2244 = vsub.f32 0.1375, %v1988
        %v2245 = vsub.f32 0.1375, %v1989
        %v2246 = vsub.f32 0.1375, %v1990
        %v2247 = vsub.f32 0.1375, %v1991
        %v2248 = vsub.f32 0.1375, %v1992
        %v2249 = vsub.f32 0.1375, %v1993
        %v2250 = vsub.f32 0.1375, %v1994
        %v2251 = vsub.f32 0.1375, %v1995
        %v2252 = vsub.f32 0.1375, %v1996
        %v2253 = vsub.f32 0.1375, %v1997
        %v2254 = vsub.f32 0.1375, %v1998
        %v2255 = vsub.f32 0.1375, %v1999
        %v2256 = vsub.f32 0.1375, %v2000
        %v2257 = vsub.f32 0.1375, %v2001
        %v2258 = vsub.f32 0.1375, %v2002
        %v2259 = vsub.f32 0.1375, %v2003
        %v2260 = vsub.f32 0.1375, %v2004
        %v2261 = vsub.f32 0.1375, %v2005
        %v2262 = vsub.f32 0.1375, %v2006
        %v2263 = vsub.f32 0.1375, %v2007
        %v2264 = vsub.f32 0.1375, %v2008
        %v2265 = vsub.f32 0.1375, %v2009
        %v2266 = vsub.f32 0.1375, %v2010
        %v2267 = vsub.f32 0.1375, %v2011
        %v2268 = vsub.f32 0.1375, %v2012
        %v2269 = vsub.f32 0.1375, %v2013
        %v2270 = vsub.f32 0.1375, %v2014
        %v2271 = vsub.f32 0.1375, %v2015
        %v2272 = vsub.f32 0.1375, %v2016
        %v2273 = vsub.f32 0.1375, %v2017
        %v2274 = vsub.f32 0.1375, %v2018
        %v2275 = vsub.f32 0.1375, %v2019
        %v2276 = vsub.f32 0.1375, %v2020
        %v2277 = vsub.f32 0.1375, %v2021
        %v2278 = vsub.f32 0.1375, %v2022
        %v2279 = vsub.f32 0.1375, %v2023
        %v2280 = vsub.f32 0.1375, %v2024
        %v2281 = vsub.f32 0.1375, %v2025
        %v2282 = vsub.f32 0.1375, %v2026
        %v2283 = vsub.f32 0.1375, %v2027
        %v2284 = vsub.f32 0.1375, %v2028
        %v2285 = vsub.f32 0.1375, %v2029
        %v2286 = vsub.f32 0.1375, %v2030
        %v2287 = vsub.f32 0.1375, %v2031
        %v2288 = vsub.f32 0.1375, %v2032
        %v2289 = vsub.f32 0.1375, %v2033
        %v2290 = vsub.f32 0.1375, %v2034
        %v2291 = vsub.f32 0.1375, %v2035
        %v2292 = vsub.f32 0.1375, %v2036
        %v2293 = vsub.f32 0.1375, %v2037
        %v2294 = vsub.f32 0.1375, %v2038
        %v2295 = vsub.f32 0.1375, %v2039
        %v2296 = vsub.f32 0.1375, %v2040
        %v2297 = vsub.f32 0.1375, %v2041
        %v2298 = vsub.f32 0.1375, %v2042
        %v2299 = vsub.f32 0.1375, %v2043
        %v2300 = vsub.f32 0.1375, %v2044
        %v2301 = vsub.f32 0.1375, %v2045
        %v2302 = vsub.f32 0.1375, %v2046
        %v2303 = vsub.f32 0.1375, %v2047
        %v2304 = vsub.f32 0.1375, %v2048
        %v2305 = vsub.f32 0.1375, %v2049
        %v2306 = vsub.f32 0.1375, %v2050
        %v2307 = vsub.f32 0.1375, %v2051
        %v2308 = vsub.f32 0.1375, %v2052
        %v2309 = vsub.f32 0.1375, %v2053
        %v2310 = vsub.f32 0.1375, %v2054
        %v2311 = vsub.f32 0.1375, %v2055
        %v2312 = vsub.f32 0.1375, %v2056
        %v2313 = vsub.f32 0.1375, %v2057
        %v2314 = vsub.f32 0.1375, %v2058
        %v2315 = vsub.f32 0.1375, %v2059
        %vm2316 = vcmp.gt.f32.partialorder %v2060, 0.0
        %vm2317 = vcmp.gt.f32.partialorder %v2061, 0.0
        %vm2318 = vcmp.gt.f32.partialorder %v2062, 0.0
        %vm2319 = vcmp.gt.f32.partialorder %v2063, 0.0
        %vm2320 = vcmp.gt.f32.partialorder %v2064, 0.0
        %vm2321 = vcmp.gt.f32.partialorder %v2065, 0.0
        %vm2322 = vcmp.gt.f32.partialorder %v2066, 0.0
        %vm2323 = vcmp.gt.f32.partialorder %v2067, 0.0
        %vm2324 = vcmp.gt.f32.partialorder %v2068, 0.0
        %vm2325 = vcmp.gt.f32.partialorder %v2069, 0.0
        %vm2326 = vcmp.gt.f32.partialorder %v2070, 0.0
        %vm2327 = vcmp.gt.f32.partialorder %v2071, 0.0
        %vm2328 = vcmp.gt.f32.partialorder %v2072, 0.0
        %vm2329 = vcmp.gt.f32.partialorder %v2073, 0.0
        %vm2330 = vcmp.gt.f32.partialorder %v2074, 0.0
        %vm2331 = vcmp.gt.f32.partialorder %v2075, 0.0
        %vm2332 = vcmp.gt.f32.partialorder %v2076, 0.0
        %vm2333 = vcmp.gt.f32.partialorder %v2077, 0.0
        %vm2334 = vcmp.gt.f32.partialorder %v2078, 0.0
        %vm2335 = vcmp.gt.f32.partialorder %v2079, 0.0
        %vm2336 = vcmp.gt.f32.partialorder %v2080, 0.0
        %vm2337 = vcmp.gt.f32.partialorder %v2081, 0.0
        %vm2338 = vcmp.gt.f32.partialorder %v2082, 0.0
        %vm2339 = vcmp.gt.f32.partialorder %v2083, 0.0
        %vm2340 = vcmp.gt.f32.partialorder %v2084, 0.0
        %vm2341 = vcmp.gt.f32.partialorder %v2085, 0.0
        %vm2342 = vcmp.gt.f32.partialorder %v2086, 0.0
        %vm2343 = vcmp.gt.f32.partialorder %v2087, 0.0
        %vm2344 = vcmp.gt.f32.partialorder %v2088, 0.0
        %vm2345 = vcmp.gt.f32.partialorder %v2089, 0.0
        %vm2346 = vcmp.gt.f32.partialorder %v2090, 0.0
        %vm2347 = vcmp.gt.f32.partialorder %v2091, 0.0
        %vm2348 = vcmp.gt.f32.partialorder %v2092, 0.0
        %vm2349 = vcmp.gt.f32.partialorder %v2093, 0.0
        %vm2350 = vcmp.gt.f32.partialorder %v2094, 0.0
        %vm2351 = vcmp.gt.f32.partialorder %v2095, 0.0
        %vm2352 = vcmp.gt.f32.partialorder %v2096, 0.0
        %vm2353 = vcmp.gt.f32.partialorder %v2097, 0.0
        %vm2354 = vcmp.gt.f32.partialorder %v2098, 0.0
        %vm2355 = vcmp.gt.f32.partialorder %v2099, 0.0
        %vm2356 = vcmp.gt.f32.partialorder %v2100, 0.0
        %vm2357 = vcmp.gt.f32.partialorder %v2101, 0.0
        %vm2358 = vcmp.gt.f32.partialorder %v2102, 0.0
        %vm2359 = vcmp.gt.f32.partialorder %v2103, 0.0
        %vm2360 = vcmp.gt.f32.partialorder %v2104, 0.0
        %vm2361 = vcmp.gt.f32.partialorder %v2105, 0.0
        %vm2362 = vcmp.gt.f32.partialorder %v2106, 0.0
        %vm2363 = vcmp.gt.f32.partialorder %v2107, 0.0
        %vm2364 = vcmp.gt.f32.partialorder %v2108, 0.0
        %vm2365 = vcmp.gt.f32.partialorder %v2109, 0.0
        %vm2366 = vcmp.gt.f32.partialorder %v2110, 0.0
        %vm2367 = vcmp.gt.f32.partialorder %v2111, 0.0
        %vm2368 = vcmp.gt.f32.partialorder %v2112, 0.0
        %vm2369 = vcmp.gt.f32.partialorder %v2113, 0.0
        %vm2370 = vcmp.gt.f32.partialorder %v2114, 0.0
        %vm2371 = vcmp.gt.f32.partialorder %v2115, 0.0
        %vm2372 = vcmp.gt.f32.partialorder %v2116, 0.0
        %vm2373 = vcmp.gt.f32.partialorder %v2117, 0.0
        %vm2374 = vcmp.gt.f32.partialorder %v2118, 0.0
        %vm2375 = vcmp.gt.f32.partialorder %v2119, 0.0
        %vm2376 = vcmp.gt.f32.partialorder %v2120, 0.0
        %vm2377 = vcmp.gt.f32.partialorder %v2121, 0.0
        %vm2378 = vcmp.gt.f32.partialorder %v2122, 0.0
        %vm2379 = vcmp.gt.f32.partialorder %v2123, 0.0
        %vm2380 = vcmp.gt.f32.partialorder %v2124, 0.0
        %vm2381 = vcmp.gt.f32.partialorder %v2125, 0.0
        %vm2382 = vcmp.gt.f32.partialorder %v2126, 0.0
        %vm2383 = vcmp.gt.f32.partialorder %v2127, 0.0
        %vm2384 = vcmp.gt.f32.partialorder %v2128, 0.0
        %vm2385 = vcmp.gt.f32.partialorder %v2129, 0.0
        %vm2386 = vcmp.gt.f32.partialorder %v2130, 0.0
        %vm2387 = vcmp.gt.f32.partialorder %v2131, 0.0
        %vm2388 = vcmp.gt.f32.partialorder %v2132, 0.0
        %vm2389 = vcmp.gt.f32.partialorder %v2133, 0.0
        %vm2390 = vcmp.gt.f32.partialorder %v2134, 0.0
        %vm2391 = vcmp.gt.f32.partialorder %v2135, 0.0
        %vm2392 = vcmp.gt.f32.partialorder %v2136, 0.0
        %vm2393 = vcmp.gt.f32.partialorder %v2137, 0.0
        %vm2394 = vcmp.gt.f32.partialorder %v2138, 0.0
        %vm2395 = vcmp.gt.f32.partialorder %v2139, 0.0
        %vm2396 = vcmp.gt.f32.partialorder %v2140, 0.0
        %vm2397 = vcmp.gt.f32.partialorder %v2141, 0.0
        %vm2398 = vcmp.gt.f32.partialorder %v2142, 0.0
        %vm2399 = vcmp.gt.f32.partialorder %v2143, 0.0
        %vm2400 = vcmp.gt.f32.partialorder %v2144, 0.0
        %vm2401 = vcmp.gt.f32.partialorder %v2145, 0.0
        %vm2402 = vcmp.gt.f32.partialorder %v2146, 0.0
        %vm2403 = vcmp.gt.f32.partialorder %v2147, 0.0
        %vm2404 = vcmp.gt.f32.partialorder %v2148, 0.0
        %vm2405 = vcmp.gt.f32.partialorder %v2149, 0.0
        %vm2406 = vcmp.gt.f32.partialorder %v2150, 0.0
        %vm2407 = vcmp.gt.f32.partialorder %v2151, 0.0
        %vm2408 = vcmp.gt.f32.partialorder %v2152, 0.0
        %vm2409 = vcmp.gt.f32.partialorder %v2153, 0.0
        %vm2410 = vcmp.gt.f32.partialorder %v2154, 0.0
        %vm2411 = vcmp.gt.f32.partialorder %v2155, 0.0
        %vm2412 = vcmp.gt.f32.partialorder %v2156, 0.0
        %vm2413 = vcmp.gt.f32.partialorder %v2157, 0.0
        %vm2414 = vcmp.gt.f32.partialorder %v2158, 0.0
        %vm2415 = vcmp.gt.f32.partialorder %v2159, 0.0
        %vm2416 = vcmp.gt.f32.partialorder %v2160, 0.0
        %vm2417 = vcmp.gt.f32.partialorder %v2161, 0.0
        %vm2418 = vcmp.gt.f32.partialorder %v2162, 0.0
        %vm2419 = vcmp.gt.f32.partialorder %v2163, 0.0
        %vm2420 = vcmp.gt.f32.partialorder %v2164, 0.0
        %vm2421 = vcmp.gt.f32.partialorder %v2165, 0.0
        %vm2422 = vcmp.gt.f32.partialorder %v2166, 0.0
        %vm2423 = vcmp.gt.f32.partialorder %v2167, 0.0
        %vm2424 = vcmp.gt.f32.partialorder %v2168, 0.0
        %vm2425 = vcmp.gt.f32.partialorder %v2169, 0.0
        %vm2426 = vcmp.gt.f32.partialorder %v2170, 0.0
        %vm2427 = vcmp.gt.f32.partialorder %v2171, 0.0
        %vm2428 = vcmp.gt.f32.partialorder %v2172, 0.0
        %vm2429 = vcmp.gt.f32.partialorder %v2173, 0.0
        %vm2430 = vcmp.gt.f32.partialorder %v2174, 0.0
        %vm2431 = vcmp.gt.f32.partialorder %v2175, 0.0
        %vm2432 = vcmp.gt.f32.partialorder %v2176, 0.0
        %vm2433 = vcmp.gt.f32.partialorder %v2177, 0.0
        %vm2434 = vcmp.gt.f32.partialorder %v2178, 0.0
        %vm2435 = vcmp.gt.f32.partialorder %v2179, 0.0
        %vm2436 = vcmp.gt.f32.partialorder %v2180, 0.0
        %vm2437 = vcmp.gt.f32.partialorder %v2181, 0.0
        %vm2438 = vcmp.gt.f32.partialorder %v2182, 0.0
        %vm2439 = vcmp.gt.f32.partialorder %v2183, 0.0
        %vm2440 = vcmp.gt.f32.partialorder %v2184, 0.0
        %vm2441 = vcmp.gt.f32.partialorder %v2185, 0.0
        %vm2442 = vcmp.gt.f32.partialorder %v2186, 0.0
        %vm2443 = vcmp.gt.f32.partialorder %v2187, 0.0
        %vm2444 = vcmp.gt.f32.partialorder %v2188, 0.0
        %vm2445 = vcmp.gt.f32.partialorder %v2189, 0.0
        %vm2446 = vcmp.gt.f32.partialorder %v2190, 0.0
        %vm2447 = vcmp.gt.f32.partialorder %v2191, 0.0
        %vm2448 = vcmp.gt.f32.partialorder %v2192, 0.0
        %vm2449 = vcmp.gt.f32.partialorder %v2193, 0.0
        %vm2450 = vcmp.gt.f32.partialorder %v2194, 0.0
        %vm2451 = vcmp.gt.f32.partialorder %v2195, 0.0
        %vm2452 = vcmp.gt.f32.partialorder %v2196, 0.0
        %vm2453 = vcmp.gt.f32.partialorder %v2197, 0.0
        %vm2454 = vcmp.gt.f32.partialorder %v2198, 0.0
        %vm2455 = vcmp.gt.f32.partialorder %v2199, 0.0
        %vm2456 = vcmp.gt.f32.partialorder %v2200, 0.0
        %vm2457 = vcmp.gt.f32.partialorder %v2201, 0.0
        %vm2458 = vcmp.gt.f32.partialorder %v2202, 0.0
        %vm2459 = vcmp.gt.f32.partialorder %v2203, 0.0
        %vm2460 = vcmp.gt.f32.partialorder %v2204, 0.0
        %vm2461 = vcmp.gt.f32.partialorder %v2205, 0.0
        %vm2462 = vcmp.gt.f32.partialorder %v2206, 0.0
        %vm2463 = vcmp.gt.f32.partialorder %v2207, 0.0
        %vm2464 = vcmp.gt.f32.partialorder %v2208, 0.0
        %vm2465 = vcmp.gt.f32.partialorder %v2209, 0.0
        %vm2466 = vcmp.gt.f32.partialorder %v2210, 0.0
        %vm2467 = vcmp.gt.f32.partialorder %v2211, 0.0
        %vm2468 = vcmp.gt.f32.partialorder %v2212, 0.0
        %vm2469 = vcmp.gt.f32.partialorder %v2213, 0.0
        %vm2470 = vcmp.gt.f32.partialorder %v2214, 0.0
        %vm2471 = vcmp.gt.f32.partialorder %v2215, 0.0
        %vm2472 = vcmp.gt.f32.partialorder %v2216, 0.0
        %vm2473 = vcmp.gt.f32.partialorder %v2217, 0.0
        %vm2474 = vcmp.gt.f32.partialorder %v2218, 0.0
        %vm2475 = vcmp.gt.f32.partialorder %v2219, 0.0
        %vm2476 = vcmp.gt.f32.partialorder %v2220, 0.0
        %vm2477 = vcmp.gt.f32.partialorder %v2221, 0.0
        %vm2478 = vcmp.gt.f32.partialorder %v2222, 0.0
        %vm2479 = vcmp.gt.f32.partialorder %v2223, 0.0
        %vm2480 = vcmp.gt.f32.partialorder %v2224, 0.0
        %vm2481 = vcmp.gt.f32.partialorder %v2225, 0.0
        %vm2482 = vcmp.gt.f32.partialorder %v2226, 0.0
        %vm2483 = vcmp.gt.f32.partialorder %v2227, 0.0
        %vm2484 = vcmp.gt.f32.partialorder %v2228, 0.0
        %vm2485 = vcmp.gt.f32.partialorder %v2229, 0.0
        %vm2486 = vcmp.gt.f32.partialorder %v2230, 0.0
        %vm2487 = vcmp.gt.f32.partialorder %v2231, 0.0
        %vm2488 = vcmp.gt.f32.partialorder %v2232, 0.0
        %vm2489 = vcmp.gt.f32.partialorder %v2233, 0.0
        %vm2490 = vcmp.gt.f32.partialorder %v2234, 0.0
        %vm2491 = vcmp.gt.f32.partialorder %v2235, 0.0
        %vm2492 = vcmp.gt.f32.partialorder %v2236, 0.0
        %vm2493 = vcmp.gt.f32.partialorder %v2237, 0.0
        %vm2494 = vcmp.gt.f32.partialorder %v2238, 0.0
        %vm2495 = vcmp.gt.f32.partialorder %v2239, 0.0
        %vm2496 = vcmp.gt.f32.partialorder %v2240, 0.0
        %vm2497 = vcmp.gt.f32.partialorder %v2241, 0.0
        %vm2498 = vcmp.gt.f32.partialorder %v2242, 0.0
        %vm2499 = vcmp.gt.f32.partialorder %v2243, 0.0
        %vm2500 = vcmp.gt.f32.partialorder %v2244, 0.0
        %vm2501 = vcmp.gt.f32.partialorder %v2245, 0.0
        %vm2502 = vcmp.gt.f32.partialorder %v2246, 0.0
        %vm2503 = vcmp.gt.f32.partialorder %v2247, 0.0
        %vm2504 = vcmp.gt.f32.partialorder %v2248, 0.0
        %vm2505 = vcmp.gt.f32.partialorder %v2249, 0.0
        %vm2506 = vcmp.gt.f32.partialorder %v2250, 0.0
        %vm2507 = vcmp.gt.f32.partialorder %v2251, 0.0
        %vm2508 = vcmp.gt.f32.partialorder %v2252, 0.0
        %vm2509 = vcmp.gt.f32.partialorder %v2253, 0.0
        %vm2510 = vcmp.gt.f32.partialorder %v2254, 0.0
        %vm2511 = vcmp.gt.f32.partialorder %v2255, 0.0
        %vm2512 = vcmp.gt.f32.partialorder %v2256, 0.0
        %vm2513 = vcmp.gt.f32.partialorder %v2257, 0.0
        %vm2514 = vcmp.gt.f32.partialorder %v2258, 0.0
        %vm2515 = vcmp.gt.f32.partialorder %v2259, 0.0
        %vm2516 = vcmp.gt.f32.partialorder %v2260, 0.0
        %vm2517 = vcmp.gt.f32.partialorder %v2261, 0.0
        %vm2518 = vcmp.gt.f32.partialorder %v2262, 0.0
        %vm2519 = vcmp.gt.f32.partialorder %v2263, 0.0
        %vm2520 = vcmp.gt.f32.partialorder %v2264, 0.0
        %vm2521 = vcmp.gt.f32.partialorder %v2265, 0.0
        %vm2522 = vcmp.gt.f32.partialorder %v2266, 0.0
        %vm2523 = vcmp.gt.f32.partialorder %v2267, 0.0
        %vm2524 = vcmp.gt.f32.partialorder %v2268, 0.0
        %vm2525 = vcmp.gt.f32.partialorder %v2269, 0.0
        %vm2526 = vcmp.gt.f32.partialorder %v2270, 0.0
        %vm2527 = vcmp.gt.f32.partialorder %v2271, 0.0
        %vm2528 = vcmp.gt.f32.partialorder %v2272, 0.0
        %vm2529 = vcmp.gt.f32.partialorder %v2273, 0.0
        %vm2530 = vcmp.gt.f32.partialorder %v2274, 0.0
        %vm2531 = vcmp.gt.f32.partialorder %v2275, 0.0
        %vm2532 = vcmp.gt.f32.partialorder %v2276, 0.0
        %vm2533 = vcmp.gt.f32.partialorder %v2277, 0.0
        %vm2534 = vcmp.gt.f32.partialorder %v2278, 0.0
        %vm2535 = vcmp.gt.f32.partialorder %v2279, 0.0
        %vm2536 = vcmp.gt.f32.partialorder %v2280, 0.0
        %vm2537 = vcmp.gt.f32.partialorder %v2281, 0.0
        %vm2538 = vcmp.gt.f32.partialorder %v2282, 0.0
        %vm2539 = vcmp.gt.f32.partialorder %v2283, 0.0
        %vm2540 = vcmp.gt.f32.partialorder %v2284, 0.0
        %vm2541 = vcmp.gt.f32.partialorder %v2285, 0.0
        %vm2542 = vcmp.gt.f32.partialorder %v2286, 0.0
        %vm2543 = vcmp.gt.f32.partialorder %v2287, 0.0
        %vm2544 = vcmp.gt.f32.partialorder %v2288, 0.0
        %vm2545 = vcmp.gt.f32.partialorder %v2289, 0.0
        %vm2546 = vcmp.gt.f32.partialorder %v2290, 0.0
        %vm2547 = vcmp.gt.f32.partialorder %v2291, 0.0
        %vm2548 = vcmp.gt.f32.partialorder %v2292, 0.0
        %vm2549 = vcmp.gt.f32.partialorder %v2293, 0.0
        %vm2550 = vcmp.gt.f32.partialorder %v2294, 0.0
        %vm2551 = vcmp.gt.f32.partialorder %v2295, 0.0
        %vm2552 = vcmp.gt.f32.partialorder %v2296, 0.0
        %vm2553 = vcmp.gt.f32.partialorder %v2297, 0.0
        %vm2554 = vcmp.gt.f32.partialorder %v2298, 0.0
        %vm2555 = vcmp.gt.f32.partialorder %v2299, 0.0
        %vm2556 = vcmp.gt.f32.partialorder %v2300, 0.0
        %vm2557 = vcmp.gt.f32.partialorder %v2301, 0.0
        %vm2558 = vcmp.gt.f32.partialorder %v2302, 0.0
        %vm2559 = vcmp.gt.f32.partialorder %v2303, 0.0
        %vm2560 = vcmp.gt.f32.partialorder %v2304, 0.0
        %vm2561 = vcmp.gt.f32.partialorder %v2305, 0.0
        %vm2562 = vcmp.gt.f32.partialorder %v2306, 0.0
        %vm2563 = vcmp.gt.f32.partialorder %v2307, 0.0
        %vm2564 = vcmp.gt.f32.partialorder %v2308, 0.0
        %vm2565 = vcmp.gt.f32.partialorder %v2309, 0.0
        %vm2566 = vcmp.gt.f32.partialorder %v2310, 0.0
        %vm2567 = vcmp.gt.f32.partialorder %v2311, 0.0
        %vm2568 = vcmp.gt.f32.partialorder %v2312, 0.0
        %vm2569 = vcmp.gt.f32.partialorder %v2313, 0.0
        %vm2570 = vcmp.gt.f32.partialorder %v2314, 0.0
        %vm2571 = vcmp.gt.f32.partialorder %v2315, 0.0
        %v2572 = vmul.f32 %v2060, 0.0099503305
        %v2573 = vmul.f32 %v2061, 0.0099503305
        %v2574 = vmul.f32 %v2062, 0.0099503305
        %v2575 = vmul.f32 %v2063, 0.0099503305
        %v2576 = vmul.f32 %v2064, 0.0099503305
        %v2577 = vmul.f32 %v2065, 0.0099503305
        %v2578 = vmul.f32 %v2066, 0.0099503305
        %v2579 = vmul.f32 %v2067, 0.0099503305
        %v2580 = vmul.f32 %v2068, 0.0099503305
        %v2581 = vmul.f32 %v2069, 0.0099503305
        %v2582 = vmul.f32 %v2070, 0.0099503305
        %v2583 = vmul.f32 %v2071, 0.0099503305
        %v2584 = vmul.f32 %v2072, 0.0099503305
        %v2585 = vmul.f32 %v2073, 0.0099503305
        %v2586 = vmul.f32 %v2074, 0.0099503305
        %v2587 = vmul.f32 %v2075, 0.0099503305
        %v2588 = vmul.f32 %v2076, 0.0099503305
        %v2589 = vmul.f32 %v2077, 0.0099503305
        %v2590 = vmul.f32 %v2078, 0.0099503305
        %v2591 = vmul.f32 %v2079, 0.0099503305
        %v2592 = vmul.f32 %v2080, 0.0099503305
        %v2593 = vmul.f32 %v2081, 0.0099503305
        %v2594 = vmul.f32 %v2082, 0.0099503305
        %v2595 = vmul.f32 %v2083, 0.0099503305
        %v2596 = vmul.f32 %v2084, 0.0099503305
        %v2597 = vmul.f32 %v2085, 0.0099503305
        %v2598 = vmul.f32 %v2086, 0.0099503305
        %v2599 = vmul.f32 %v2087, 0.0099503305
        %v2600 = vmul.f32 %v2088, 0.0099503305
        %v2601 = vmul.f32 %v2089, 0.0099503305
        %v2602 = vmul.f32 %v2090, 0.0099503305
        %v2603 = vmul.f32 %v2091, 0.0099503305
        %v2604 = vmul.f32 %v2092, 0.0099503305
        %v2605 = vmul.f32 %v2093, 0.0099503305
        %v2606 = vmul.f32 %v2094, 0.0099503305
        %v2607 = vmul.f32 %v2095, 0.0099503305
        %v2608 = vmul.f32 %v2096, 0.0099503305
        %v2609 = vmul.f32 %v2097, 0.0099503305
        %v2610 = vmul.f32 %v2098, 0.0099503305
        %v2611 = vmul.f32 %v2099, 0.0099503305
        %v2612 = vmul.f32 %v2100, 0.0099503305
        %v2613 = vmul.f32 %v2101, 0.0099503305
        %v2614 = vmul.f32 %v2102, 0.0099503305
        %v2615 = vmul.f32 %v2103, 0.0099503305
        %v2616 = vmul.f32 %v2104, 0.0099503305
        %v2617 = vmul.f32 %v2105, 0.0099503305
        %v2618 = vmul.f32 %v2106, 0.0099503305
        %v2619 = vmul.f32 %v2107, 0.0099503305
        %v2620 = vmul.f32 %v2108, 0.0099503305
        %v2621 = vmul.f32 %v2109, 0.0099503305
        %v2622 = vmul.f32 %v2110, 0.0099503305
        %v2623 = vmul.f32 %v2111, 0.0099503305
        %v2624 = vmul.f32 %v2112, 0.0099503305
        %v2625 = vmul.f32 %v2113, 0.0099503305
        %v2626 = vmul.f32 %v2114, 0.0099503305
        %v2627 = vmul.f32 %v2115, 0.0099503305
        %v2628 = vmul.f32 %v2116, 0.0099503305
        %v2629 = vmul.f32 %v2117, 0.0099503305
        %v2630 = vmul.f32 %v2118, 0.0099503305
        %v2631 = vmul.f32 %v2119, 0.0099503305
        %v2632 = vmul.f32 %v2120, 0.0099503305
        %v2633 = vmul.f32 %v2121, 0.0099503305
        %v2634 = vmul.f32 %v2122, 0.0099503305
        %v2635 = vmul.f32 %v2123, 0.0099503305
        %v2636 = vmul.f32 %v2124, 0.0099503305
        %v2637 = vmul.f32 %v2125, 0.0099503305
        %v2638 = vmul.f32 %v2126, 0.0099503305
        %v2639 = vmul.f32 %v2127, 0.0099503305
        %v2640 = vmul.f32 %v2128, 0.0099503305
        %v2641 = vmul.f32 %v2129, 0.0099503305
        %v2642 = vmul.f32 %v2130, 0.0099503305
        %v2643 = vmul.f32 %v2131, 0.0099503305
        %v2644 = vmul.f32 %v2132, 0.0099503305
        %v2645 = vmul.f32 %v2133, 0.0099503305
        %v2646 = vmul.f32 %v2134, 0.0099503305
        %v2647 = vmul.f32 %v2135, 0.0099503305
        %v2648 = vmul.f32 %v2136, 0.0099503305
        %v2649 = vmul.f32 %v2137, 0.0099503305
        %v2650 = vmul.f32 %v2138, 0.0099503305
        %v2651 = vmul.f32 %v2139, 0.0099503305
        %v2652 = vmul.f32 %v2140, 0.0099503305
        %v2653 = vmul.f32 %v2141, 0.0099503305
        %v2654 = vmul.f32 %v2142, 0.0099503305
        %v2655 = vmul.f32 %v2143, 0.0099503305
        %v2656 = vmul.f32 %v2144, 0.0099503305
        %v2657 = vmul.f32 %v2145, 0.0099503305
        %v2658 = vmul.f32 %v2146, 0.0099503305
        %v2659 = vmul.f32 %v2147, 0.0099503305
        %v2660 = vmul.f32 %v2148, 0.0099503305
        %v2661 = vmul.f32 %v2149, 0.0099503305
        %v2662 = vmul.f32 %v2150, 0.0099503305
        %v2663 = vmul.f32 %v2151, 0.0099503305
        %v2664 = vmul.f32 %v2152, 0.0099503305
        %v2665 = vmul.f32 %v2153, 0.0099503305
        %v2666 = vmul.f32 %v2154, 0.0099503305
        %v2667 = vmul.f32 %v2155, 0.0099503305
        %v2668 = vmul.f32 %v2156, 0.0099503305
        %v2669 = vmul.f32 %v2157, 0.0099503305
        %v2670 = vmul.f32 %v2158, 0.0099503305
        %v2671 = vmul.f32 %v2159, 0.0099503305
        %v2672 = vmul.f32 %v2160, 0.0099503305
        %v2673 = vmul.f32 %v2161, 0.0099503305
        %v2674 = vmul.f32 %v2162, 0.0099503305
        %v2675 = vmul.f32 %v2163, 0.0099503305
        %v2676 = vmul.f32 %v2164, 0.0099503305
        %v2677 = vmul.f32 %v2165, 0.0099503305
        %v2678 = vmul.f32 %v2166, 0.0099503305
        %v2679 = vmul.f32 %v2167, 0.0099503305
        %v2680 = vmul.f32 %v2168, 0.0099503305
        %v2681 = vmul.f32 %v2169, 0.0099503305
        %v2682 = vmul.f32 %v2170, 0.0099503305
        %v2683 = vmul.f32 %v2171, 0.0099503305
        %v2684 = vmul.f32 %v2172, 0.0099503305
        %v2685 = vmul.f32 %v2173, 0.0099503305
        %v2686 = vmul.f32 %v2174, 0.0099503305
        %v2687 = vmul.f32 %v2175, 0.0099503305
        %v2688 = vmul.f32 %v2176, 0.0099503305
        %v2689 = vmul.f32 %v2177, 0.0099503305
        %v2690 = vmul.f32 %v2178, 0.0099503305
        %v2691 = vmul.f32 %v2179, 0.0099503305
        %v2692 = vmul.f32 %v2180, 0.0099503305
        %v2693 = vmul.f32 %v2181, 0.0099503305
        %v2694 = vmul.f32 %v2182, 0.0099503305
        %v2695 = vmul.f32 %v2183, 0.0099503305
        %v2696 = vmul.f32 %v2184, 0.0099503305
        %v2697 = vmul.f32 %v2185, 0.0099503305
        %v2698 = vmul.f32 %v2186, 0.0099503305
        %v2699 = vmul.f32 %v2187, 0.0099503305
        %v2700 = vmul.f32 %v2188, 0.0099503305
        %v2701 = vmul.f32 %v2189, 0.0099503305
        %v2702 = vmul.f32 %v2190, 0.0099503305
        %v2703 = vmul.f32 %v2191, 0.0099503305
        %v2704 = vmul.f32 %v2192, 0.0099503305
        %v2705 = vmul.f32 %v2193, 0.0099503305
        %v2706 = vmul.f32 %v2194, 0.0099503305
        %v2707 = vmul.f32 %v2195, 0.0099503305
        %v2708 = vmul.f32 %v2196, 0.0099503305
        %v2709 = vmul.f32 %v2197, 0.0099503305
        %v2710 = vmul.f32 %v2198, 0.0099503305
        %v2711 = vmul.f32 %v2199, 0.0099503305
        %v2712 = vmul.f32 %v2200, 0.0099503305
        %v2713 = vmul.f32 %v2201, 0.0099503305
        %v2714 = vmul.f32 %v2202, 0.0099503305
        %v2715 = vmul.f32 %v2203, 0.0099503305
        %v2716 = vmul.f32 %v2204, 0.0099503305
        %v2717 = vmul.f32 %v2205, 0.0099503305
        %v2718 = vmul.f32 %v2206, 0.0099503305
        %v2719 = vmul.f32 %v2207, 0.0099503305
        %v2720 = vmul.f32 %v2208, 0.0099503305
        %v2721 = vmul.f32 %v2209, 0.0099503305
        %v2722 = vmul.f32 %v2210, 0.0099503305
        %v2723 = vmul.f32 %v2211, 0.0099503305
        %v2724 = vmul.f32 %v2212, 0.0099503305
        %v2725 = vmul.f32 %v2213, 0.0099503305
        %v2726 = vmul.f32 %v2214, 0.0099503305
        %v2727 = vmul.f32 %v2215, 0.0099503305
        %v2728 = vmul.f32 %v2216, 0.0099503305
        %v2729 = vmul.f32 %v2217, 0.0099503305
        %v2730 = vmul.f32 %v2218, 0.0099503305
        %v2731 = vmul.f32 %v2219, 0.0099503305
        %v2732 = vmul.f32 %v2220, 0.0099503305
        %v2733 = vmul.f32 %v2221, 0.0099503305
        %v2734 = vmul.f32 %v2222, 0.0099503305
        %v2735 = vmul.f32 %v2223, 0.0099503305
        %v2736 = vmul.f32 %v2224, 0.0099503305
        %v2737 = vmul.f32 %v2225, 0.0099503305
        %v2738 = vmul.f32 %v2226, 0.0099503305
        %v2739 = vmul.f32 %v2227, 0.0099503305
        %v2740 = vmul.f32 %v2228, 0.0099503305
        %v2741 = vmul.f32 %v2229, 0.0099503305
        %v2742 = vmul.f32 %v2230, 0.0099503305
        %v2743 = vmul.f32 %v2231, 0.0099503305
        %v2744 = vmul.f32 %v2232, 0.0099503305
        %v2745 = vmul.f32 %v2233, 0.0099503305
        %v2746 = vmul.f32 %v2234, 0.0099503305
        %v2747 = vmul.f32 %v2235, 0.0099503305
        %v2748 = vmul.f32 %v2236, 0.0099503305
        %v2749 = vmul.f32 %v2237, 0.0099503305
        %v2750 = vmul.f32 %v2238, 0.0099503305
        %v2751 = vmul.f32 %v2239, 0.0099503305
        %v2752 = vmul.f32 %v2240, 0.0099503305
        %v2753 = vmul.f32 %v2241, 0.0099503305
        %v2754 = vmul.f32 %v2242, 0.0099503305
        %v2755 = vmul.f32 %v2243, 0.0099503305
        %v2756 = vmul.f32 %v2244, 0.0099503305
        %v2757 = vmul.f32 %v2245, 0.0099503305
        %v2758 = vmul.f32 %v2246, 0.0099503305
        %v2759 = vmul.f32 %v2247, 0.0099503305
        %v2760 = vmul.f32 %v2248, 0.0099503305
        %v2761 = vmul.f32 %v2249, 0.0099503305
        %v2762 = vmul.f32 %v2250, 0.0099503305
        %v2763 = vmul.f32 %v2251, 0.0099503305
        %v2764 = vmul.f32 %v2252, 0.0099503305
        %v2765 = vmul.f32 %v2253, 0.0099503305
        %v2766 = vmul.f32 %v2254, 0.0099503305
        %v2767 = vmul.f32 %v2255, 0.0099503305
        %v2768 = vmul.f32 %v2256, 0.0099503305
        %v2769 = vmul.f32 %v2257, 0.0099503305
        %v2770 = vmul.f32 %v2258, 0.0099503305
        %v2771 = vmul.f32 %v2259, 0.0099503305
        %v2772 = vmul.f32 %v2260, 0.0099503305
        %v2773 = vmul.f32 %v2261, 0.0099503305
        %v2774 = vmul.f32 %v2262, 0.0099503305
        %v2775 = vmul.f32 %v2263, 0.0099503305
        %v2776 = vmul.f32 %v2264, 0.0099503305
        %v2777 = vmul.f32 %v2265, 0.0099503305
        %v2778 = vmul.f32 %v2266, 0.0099503305
        %v2779 = vmul.f32 %v2267, 0.0099503305
        %v2780 = vmul.f32 %v2268, 0.0099503305
        %v2781 = vmul.f32 %v2269, 0.0099503305
        %v2782 = vmul.f32 %v2270, 0.0099503305
        %v2783 = vmul.f32 %v2271, 0.0099503305
        %v2784 = vmul.f32 %v2272, 0.0099503305
        %v2785 = vmul.f32 %v2273, 0.0099503305
        %v2786 = vmul.f32 %v2274, 0.0099503305
        %v2787 = vmul.f32 %v2275, 0.0099503305
        %v2788 = vmul.f32 %v2276, 0.0099503305
        %v2789 = vmul.f32 %v2277, 0.0099503305
        %v2790 = vmul.f32 %v2278, 0.0099503305
        %v2791 = vmul.f32 %v2279, 0.0099503305
        %v2792 = vmul.f32 %v2280, 0.0099503305
        %v2793 = vmul.f32 %v2281, 0.0099503305
        %v2794 = vmul.f32 %v2282, 0.0099503305
        %v2795 = vmul.f32 %v2283, 0.0099503305
        %v2796 = vmul.f32 %v2284, 0.0099503305
        %v2797 = vmul.f32 %v2285, 0.0099503305
        %v2798 = vmul.f32 %v2286, 0.0099503305
        %v2799 = vmul.f32 %v2287, 0.0099503305
        %v2800 = vmul.f32 %v2288, 0.0099503305
        %v2801 = vmul.f32 %v2289, 0.0099503305
        %v2802 = vmul.f32 %v2290, 0.0099503305
        %v2803 = vmul.f32 %v2291, 0.0099503305
        %v2804 = vmul.f32 %v2292, 0.0099503305
        %v2805 = vmul.f32 %v2293, 0.0099503305
        %v2806 = vmul.f32 %v2294, 0.0099503305
        %v2807 = vmul.f32 %v2295, 0.0099503305
        %v2808 = vmul.f32 %v2296, 0.0099503305
        %v2809 = vmul.f32 %v2297, 0.0099503305
        %v2810 = vmul.f32 %v2298, 0.0099503305
        %v2811 = vmul.f32 %v2299, 0.0099503305
        %v2812 = vmul.f32 %v2300, 0.0099503305
        %v2813 = vmul.f32 %v2301, 0.0099503305
        %v2814 = vmul.f32 %v2302, 0.0099503305
        %v2815 = vmul.f32 %v2303, 0.0099503305
        %v2816 = vmul.f32 %v2304, 0.0099503305
        %v2817 = vmul.f32 %v2305, 0.0099503305
        %v2818 = vmul.f32 %v2306, 0.0099503305
        %v2819 = vmul.f32 %v2307, 0.0099503305
        %v2820 = vmul.f32 %v2308, 0.0099503305
        %v2821 = vmul.f32 %v2309, 0.0099503305
        %v2822 = vmul.f32 %v2310, 0.0099503305
        %v2823 = vmul.f32 %v2311, 0.0099503305
        %v2824 = vmul.f32 %v2312, 0.0099503305
        %v2825 = vmul.f32 %v2313, 0.0099503305
        %v2826 = vmul.f32 %v2314, 0.0099503305
        %v2827 = vmul.f32 %v2315, 0.0099503305
        %v2828 = vmul.f32 %v2572, 1.442695
        %v2829 = vpow.pop %v2828
        %v2830 = vmul.f32 %v2573, 1.442695
        %v2831 = vpow.pop %v2830
        %v2832 = vmul.f32 %v2574, 1.442695
        %v2833 = vpow.pop %v2832
        %v2834 = vmul.f32 %v2575, 1.442695
        %v2835 = vpow.pop %v2834
        %v2836 = vmul.f32 %v2576, 1.442695
        %v2837 = vpow.pop %v2836
        %v2838 = vmul.f32 %v2577, 1.442695
        %v2839 = vpow.pop %v2838
        %v2840 = vmul.f32 %v2578, 1.442695
        %v2841 = vpow.pop %v2840
        %v2842 = vmul.f32 %v2579, 1.442695
        %v2843 = vpow.pop %v2842
        %v2844 = vmul.f32 %v2580, 1.442695
        %v2845 = vpow.pop %v2844
        %v2846 = vmul.f32 %v2581, 1.442695
        %v2847 = vpow.pop %v2846
        %v2848 = vmul.f32 %v2582, 1.442695
        %v2849 = vpow.pop %v2848
        %v2850 = vmul.f32 %v2583, 1.442695
        %v2851 = vpow.pop %v2850
        %v2852 = vmul.f32 %v2584, 1.442695
        %v2853 = vpow.pop %v2852
        %v2854 = vmul.f32 %v2585, 1.442695
        %v2855 = vpow.pop %v2854
        %v2856 = vmul.f32 %v2586, 1.442695
        %v2857 = vpow.pop %v2856
        %v2858 = vmul.f32 %v2587, 1.442695
        %v2859 = vpow.pop %v2858
        %v2860 = vmul.f32 %v2588, 1.442695
        %v2861 = vpow.pop %v2860
        %v2862 = vmul.f32 %v2589, 1.442695
        %v2863 = vpow.pop %v2862
        %v2864 = vmul.f32 %v2590, 1.442695
        %v2865 = vpow.pop %v2864
        %v2866 = vmul.f32 %v2591, 1.442695
        %v2867 = vpow.pop %v2866
        %v2868 = vmul.f32 %v2592, 1.442695
        %v2869 = vpow.pop %v2868
        %v2870 = vmul.f32 %v2593, 1.442695
        %v2871 = vpow.pop %v2870
        %v2872 = vmul.f32 %v2594, 1.442695
        %v2873 = vpow.pop %v2872
        %v2874 = vmul.f32 %v2595, 1.442695
        %v2875 = vpow.pop %v2874
        %v2876 = vmul.f32 %v2596, 1.442695
        %v2877 = vpow.pop %v2876
        %v2878 = vmul.f32 %v2597, 1.442695
        %v2879 = vpow.pop %v2878
        %v2880 = vmul.f32 %v2598, 1.442695
        %v2881 = vpow.pop %v2880
        %v2882 = vmul.f32 %v2599, 1.442695
        %v2883 = vpow.pop %v2882
        %v2884 = vmul.f32 %v2600, 1.442695
        %v2885 = vpow.pop %v2884
        %v2886 = vmul.f32 %v2601, 1.442695
        %v2887 = vpow.pop %v2886
        %v2888 = vmul.f32 %v2602, 1.442695
        %v2889 = vpow.pop %v2888
        %v2890 = vmul.f32 %v2603, 1.442695
        %v2891 = vpow.pop %v2890
        %v2892 = vmul.f32 %v2604, 1.442695
        %v2893 = vpow.pop %v2892
        %v2894 = vmul.f32 %v2605, 1.442695
        %v2895 = vpow.pop %v2894
        %v2896 = vmul.f32 %v2606, 1.442695
        %v2897 = vpow.pop %v2896
        %v2898 = vmul.f32 %v2607, 1.442695
        %v2899 = vpow.pop %v2898
        %v2900 = vmul.f32 %v2608, 1.442695
        %v2901 = vpow.pop %v2900
        %v2902 = vmul.f32 %v2609, 1.442695
        %v2903 = vpow.pop %v2902
        %v2904 = vmul.f32 %v2610, 1.442695
        %v2905 = vpow.pop %v2904
        %v2906 = vmul.f32 %v2611, 1.442695
        %v2907 = vpow.pop %v2906
        %v2908 = vmul.f32 %v2612, 1.442695
        %v2909 = vpow.pop %v2908
        %v2910 = vmul.f32 %v2613, 1.442695
        %v2911 = vpow.pop %v2910
        %v2912 = vmul.f32 %v2614, 1.442695
        %v2913 = vpow.pop %v2912
        %v2914 = vmul.f32 %v2615, 1.442695
        %v2915 = vpow.pop %v2914
        %v2916 = vmul.f32 %v2616, 1.442695
        %v2917 = vpow.pop %v2916
        %v2918 = vmul.f32 %v2617, 1.442695
        %v2919 = vpow.pop %v2918
        %v2920 = vmul.f32 %v2618, 1.442695
        %v2921 = vpow.pop %v2920
        %v2922 = vmul.f32 %v2619, 1.442695
        %v2923 = vpow.pop %v2922
        %v2924 = vmul.f32 %v2620, 1.442695
        %v2925 = vpow.pop %v2924
        %v2926 = vmul.f32 %v2621, 1.442695
        %v2927 = vpow.pop %v2926
        %v2928 = vmul.f32 %v2622, 1.442695
        %v2929 = vpow.pop %v2928
        %v2930 = vmul.f32 %v2623, 1.442695
        %v2931 = vpow.pop %v2930
        %v2932 = vmul.f32 %v2624, 1.442695
        %v2933 = vpow.pop %v2932
        %v2934 = vmul.f32 %v2625, 1.442695
        %v2935 = vpow.pop %v2934
        %v2936 = vmul.f32 %v2626, 1.442695
        %v2937 = vpow.pop %v2936
        %v2938 = vmul.f32 %v2627, 1.442695
        %v2939 = vpow.pop %v2938
        %v2940 = vmul.f32 %v2628, 1.442695
        %v2941 = vpow.pop %v2940
        %v2942 = vmul.f32 %v2629, 1.442695
        %v2943 = vpow.pop %v2942
        %v2944 = vmul.f32 %v2630, 1.442695
        %v2945 = vpow.pop %v2944
        %v2946 = vmul.f32 %v2631, 1.442695
        %v2947 = vpow.pop %v2946
        %v2948 = vmul.f32 %v2632, 1.442695
        %v2949 = vpow.pop %v2948
        %v2950 = vmul.f32 %v2633, 1.442695
        %v2951 = vpow.pop %v2950
        %v2952 = vmul.f32 %v2634, 1.442695
        %v2953 = vpow.pop %v2952
        %v2954 = vmul.f32 %v2635, 1.442695
        %v2955 = vpow.pop %v2954
        %v2956 = vmul.f32 %v2636, 1.442695
        %v2957 = vpow.pop %v2956
        %v2958 = vmul.f32 %v2637, 1.442695
        %v2959 = vpow.pop %v2958
        %v2960 = vmul.f32 %v2638, 1.442695
        %v2961 = vpow.pop %v2960
        %v2962 = vmul.f32 %v2639, 1.442695
        %v2963 = vpow.pop %v2962
        %v2964 = vmul.f32 %v2640, 1.442695
        %v2965 = vpow.pop %v2964
        %v2966 = vmul.f32 %v2641, 1.442695
        %v2967 = vpow.pop %v2966
        %v2968 = vmul.f32 %v2642, 1.442695
        %v2969 = vpow.pop %v2968
        %v2970 = vmul.f32 %v2643, 1.442695
        %v2971 = vpow.pop %v2970
        %v2972 = vmul.f32 %v2644, 1.442695
        %v2973 = vpow.pop %v2972
        %v2974 = vmul.f32 %v2645, 1.442695
        %v2975 = vpow.pop %v2974
        %v2976 = vmul.f32 %v2646, 1.442695
        %v2977 = vpow.pop %v2976
        %v2978 = vmul.f32 %v2647, 1.442695
        %v2979 = vpow.pop %v2978
        %v2980 = vmul.f32 %v2648, 1.442695
        %v2981 = vpow.pop %v2980
        %v2982 = vmul.f32 %v2649, 1.442695
        %v2983 = vpow.pop %v2982
        %v2984 = vmul.f32 %v2650, 1.442695
        %v2985 = vpow.pop %v2984
        %v2986 = vmul.f32 %v2651, 1.442695
        %v2987 = vpow.pop %v2986
        %v2988 = vmul.f32 %v2652, 1.442695
        %v2989 = vpow.pop %v2988
        %v2990 = vmul.f32 %v2653, 1.442695
        %v2991 = vpow.pop %v2990
        %v2992 = vmul.f32 %v2654, 1.442695
        %v2993 = vpow.pop %v2992
        %v2994 = vmul.f32 %v2655, 1.442695
        %v2995 = vpow.pop %v2994
        %v2996 = vmul.f32 %v2656, 1.442695
        %v2997 = vpow.pop %v2996
        %v2998 = vmul.f32 %v2657, 1.442695
        %v2999 = vpow.pop %v2998
        %v3000 = vmul.f32 %v2658, 1.442695
        %v3001 = vpow.pop %v3000
        %v3002 = vmul.f32 %v2659, 1.442695
        %v3003 = vpow.pop %v3002
        %v3004 = vmul.f32 %v2660, 1.442695
        %v3005 = vpow.pop %v3004
        %v3006 = vmul.f32 %v2661, 1.442695
        %v3007 = vpow.pop %v3006
        %v3008 = vmul.f32 %v2662, 1.442695
        %v3009 = vpow.pop %v3008
        %v3010 = vmul.f32 %v2663, 1.442695
        %v3011 = vpow.pop %v3010
        %v3012 = vmul.f32 %v2664, 1.442695
        %v3013 = vpow.pop %v3012
        %v3014 = vmul.f32 %v2665, 1.442695
        %v3015 = vpow.pop %v3014
        %v3016 = vmul.f32 %v2666, 1.442695
        %v3017 = vpow.pop %v3016
        %v3018 = vmul.f32 %v2667, 1.442695
        %v3019 = vpow.pop %v3018
        %v3020 = vmul.f32 %v2668, 1.442695
        %v3021 = vpow.pop %v3020
        %v3022 = vmul.f32 %v2669, 1.442695
        %v3023 = vpow.pop %v3022
        %v3024 = vmul.f32 %v2670, 1.442695
        %v3025 = vpow.pop %v3024
        %v3026 = vmul.f32 %v2671, 1.442695
        %v3027 = vpow.pop %v3026
        %v3028 = vmul.f32 %v2672, 1.442695
        %v3029 = vpow.pop %v3028
        %v3030 = vmul.f32 %v2673, 1.442695
        %v3031 = vpow.pop %v3030
        %v3032 = vmul.f32 %v2674, 1.442695
        %v3033 = vpow.pop %v3032
        %v3034 = vmul.f32 %v2675, 1.442695
        %v3035 = vpow.pop %v3034
        %v3036 = vmul.f32 %v2676, 1.442695
        %v3037 = vpow.pop %v3036
        %v3038 = vmul.f32 %v2677, 1.442695
        %v3039 = vpow.pop %v3038
        %v3040 = vmul.f32 %v2678, 1.442695
        %v3041 = vpow.pop %v3040
        %v3042 = vmul.f32 %v2679, 1.442695
        %v3043 = vpow.pop %v3042
        %v3044 = vmul.f32 %v2680, 1.442695
        %v3045 = vpow.pop %v3044
        %v3046 = vmul.f32 %v2681, 1.442695
        %v3047 = vpow.pop %v3046
        %v3048 = vmul.f32 %v2682, 1.442695
        %v3049 = vpow.pop %v3048
        %v3050 = vmul.f32 %v2683, 1.442695
        %v3051 = vpow.pop %v3050
        %v3052 = vmul.f32 %v2684, 1.442695
        %v3053 = vpow.pop %v3052
        %v3054 = vmul.f32 %v2685, 1.442695
        %v3055 = vpow.pop %v3054
        %v3056 = vmul.f32 %v2686, 1.442695
        %v3057 = vpow.pop %v3056
        %v3058 = vmul.f32 %v2687, 1.442695
        %v3059 = vpow.pop %v3058
        %v3060 = vmul.f32 %v2688, 1.442695
        %v3061 = vpow.pop %v3060
        %v3062 = vmul.f32 %v2689, 1.442695
        %v3063 = vpow.pop %v3062
        %v3064 = vmul.f32 %v2690, 1.442695
        %v3065 = vpow.pop %v3064
        %v3066 = vmul.f32 %v2691, 1.442695
        %v3067 = vpow.pop %v3066
        %v3068 = vmul.f32 %v2692, 1.442695
        %v3069 = vpow.pop %v3068
        %v3070 = vmul.f32 %v2693, 1.442695
        %v3071 = vpow.pop %v3070
        %v3072 = vmul.f32 %v2694, 1.442695
        %v3073 = vpow.pop %v3072
        %v3074 = vmul.f32 %v2695, 1.442695
        %v3075 = vpow.pop %v3074
        %v3076 = vmul.f32 %v2696, 1.442695
        %v3077 = vpow.pop %v3076
        %v3078 = vmul.f32 %v2697, 1.442695
        %v3079 = vpow.pop %v3078
        %v3080 = vmul.f32 %v2698, 1.442695
        %v3081 = vpow.pop %v3080
        %v3082 = vmul.f32 %v2699, 1.442695
        %v3083 = vpow.pop %v3082
        %v3084 = vmul.f32 %v2700, 1.442695
        %v3085 = vpow.pop %v3084
        %v3086 = vmul.f32 %v2701, 1.442695
        %v3087 = vpow.pop %v3086
        %v3088 = vmul.f32 %v2702, 1.442695
        %v3089 = vpow.pop %v3088
        %v3090 = vmul.f32 %v2703, 1.442695
        %v3091 = vpow.pop %v3090
        %v3092 = vmul.f32 %v2704, 1.442695
        %v3093 = vpow.pop %v3092
        %v3094 = vmul.f32 %v2705, 1.442695
        %v3095 = vpow.pop %v3094
        %v3096 = vmul.f32 %v2706, 1.442695
        %v3097 = vpow.pop %v3096
        %v3098 = vmul.f32 %v2707, 1.442695
        %v3099 = vpow.pop %v3098
        %v3100 = vmul.f32 %v2708, 1.442695
        %v3101 = vpow.pop %v3100
        %v3102 = vmul.f32 %v2709, 1.442695
        %v3103 = vpow.pop %v3102
        %v3104 = vmul.f32 %v2710, 1.442695
        %v3105 = vpow.pop %v3104
        %v3106 = vmul.f32 %v2711, 1.442695
        %v3107 = vpow.pop %v3106
        %v3108 = vmul.f32 %v2712, 1.442695
        %v3109 = vpow.pop %v3108
        %v3110 = vmul.f32 %v2713, 1.442695
        %v3111 = vpow.pop %v3110
        %v3112 = vmul.f32 %v2714, 1.442695
        %v3113 = vpow.pop %v3112
        %v3114 = vmul.f32 %v2715, 1.442695
        %v3115 = vpow.pop %v3114
        %v3116 = vmul.f32 %v2716, 1.442695
        %v3117 = vpow.pop %v3116
        %v3118 = vmul.f32 %v2717, 1.442695
        %v3119 = vpow.pop %v3118
        %v3120 = vmul.f32 %v2718, 1.442695
        %v3121 = vpow.pop %v3120
        %v3122 = vmul.f32 %v2719, 1.442695
        %v3123 = vpow.pop %v3122
        %v3124 = vmul.f32 %v2720, 1.442695
        %v3125 = vpow.pop %v3124
        %v3126 = vmul.f32 %v2721, 1.442695
        %v3127 = vpow.pop %v3126
        %v3128 = vmul.f32 %v2722, 1.442695
        %v3129 = vpow.pop %v3128
        %v3130 = vmul.f32 %v2723, 1.442695
        %v3131 = vpow.pop %v3130
        %v3132 = vmul.f32 %v2724, 1.442695
        %v3133 = vpow.pop %v3132
        %v3134 = vmul.f32 %v2725, 1.442695
        %v3135 = vpow.pop %v3134
        %v3136 = vmul.f32 %v2726, 1.442695
        %v3137 = vpow.pop %v3136
        %v3138 = vmul.f32 %v2727, 1.442695
        %v3139 = vpow.pop %v3138
        %v3140 = vmul.f32 %v2728, 1.442695
        %v3141 = vpow.pop %v3140
        %v3142 = vmul.f32 %v2729, 1.442695
        %v3143 = vpow.pop %v3142
        %v3144 = vmul.f32 %v2730, 1.442695
        %v3145 = vpow.pop %v3144
        %v3146 = vmul.f32 %v2731, 1.442695
        %v3147 = vpow.pop %v3146
        %v3148 = vmul.f32 %v2732, 1.442695
        %v3149 = vpow.pop %v3148
        %v3150 = vmul.f32 %v2733, 1.442695
        %v3151 = vpow.pop %v3150
        %v3152 = vmul.f32 %v2734, 1.442695
        %v3153 = vpow.pop %v3152
        %v3154 = vmul.f32 %v2735, 1.442695
        %v3155 = vpow.pop %v3154
        %v3156 = vmul.f32 %v2736, 1.442695
        %v3157 = vpow.pop %v3156
        %v3158 = vmul.f32 %v2737, 1.442695
        %v3159 = vpow.pop %v3158
        %v3160 = vmul.f32 %v2738, 1.442695
        %v3161 = vpow.pop %v3160
        %v3162 = vmul.f32 %v2739, 1.442695
        %v3163 = vpow.pop %v3162
        %v3164 = vmul.f32 %v2740, 1.442695
        %v3165 = vpow.pop %v3164
        %v3166 = vmul.f32 %v2741, 1.442695
        %v3167 = vpow.pop %v3166
        %v3168 = vmul.f32 %v2742, 1.442695
        %v3169 = vpow.pop %v3168
        %v3170 = vmul.f32 %v2743, 1.442695
        %v3171 = vpow.pop %v3170
        %v3172 = vmul.f32 %v2744, 1.442695
        %v3173 = vpow.pop %v3172
        %v3174 = vmul.f32 %v2745, 1.442695
        %v3175 = vpow.pop %v3174
        %v3176 = vmul.f32 %v2746, 1.442695
        %v3177 = vpow.pop %v3176
        %v3178 = vmul.f32 %v2747, 1.442695
        %v3179 = vpow.pop %v3178
        %v3180 = vmul.f32 %v2748, 1.442695
        %v3181 = vpow.pop %v3180
        %v3182 = vmul.f32 %v2749, 1.442695
        %v3183 = vpow.pop %v3182
        %v3184 = vmul.f32 %v2750, 1.442695
        %v3185 = vpow.pop %v3184
        %v3186 = vmul.f32 %v2751, 1.442695
        %v3187 = vpow.pop %v3186
        %v3188 = vmul.f32 %v2752, 1.442695
        %v3189 = vpow.pop %v3188
        %v3190 = vmul.f32 %v2753, 1.442695
        %v3191 = vpow.pop %v3190
        %v3192 = vmul.f32 %v2754, 1.442695
        %v3193 = vpow.pop %v3192
        %v3194 = vmul.f32 %v2755, 1.442695
        %v3195 = vpow.pop %v3194
        %v3196 = vmul.f32 %v2756, 1.442695
        %v3197 = vpow.pop %v3196
        %v3198 = vmul.f32 %v2757, 1.442695
        %v3199 = vpow.pop %v3198
        %v3200 = vmul.f32 %v2758, 1.442695
        %v3201 = vpow.pop %v3200
        %v3202 = vmul.f32 %v2759, 1.442695
        %v3203 = vpow.pop %v3202
        %v3204 = vmul.f32 %v2760, 1.442695
        %v3205 = vpow.pop %v3204
        %v3206 = vmul.f32 %v2761, 1.442695
        %v3207 = vpow.pop %v3206
        %v3208 = vmul.f32 %v2762, 1.442695
        %v3209 = vpow.pop %v3208
        %v3210 = vmul.f32 %v2763, 1.442695
        %v3211 = vpow.pop %v3210
        %v3212 = vmul.f32 %v2764, 1.442695
        %v3213 = vpow.pop %v3212
        %v3214 = vmul.f32 %v2765, 1.442695
        %v3215 = vpow.pop %v3214
        %v3216 = vmul.f32 %v2766, 1.442695
        %v3217 = vpow.pop %v3216
        %v3218 = vmul.f32 %v2767, 1.442695
        %v3219 = vpow.pop %v3218
        %v3220 = vmul.f32 %v2768, 1.442695
        %v3221 = vpow.pop %v3220
        %v3222 = vmul.f32 %v2769, 1.442695
        %v3223 = vpow.pop %v3222
        %v3224 = vmul.f32 %v2770, 1.442695
        %v3225 = vpow.pop %v3224
        %v3226 = vmul.f32 %v2771, 1.442695
        %v3227 = vpow.pop %v3226
        %v3228 = vmul.f32 %v2772, 1.442695
        %v3229 = vpow.pop %v3228
        %v3230 = vmul.f32 %v2773, 1.442695
        %v3231 = vpow.pop %v3230
        %v3232 = vmul.f32 %v2774, 1.442695
        %v3233 = vpow.pop %v3232
        %v3234 = vmul.f32 %v2775, 1.442695
        %v3235 = vpow.pop %v3234
        %v3236 = vmul.f32 %v2776, 1.442695
        %v3237 = vpow.pop %v3236
        %v3238 = vmul.f32 %v2777, 1.442695
        %v3239 = vpow.pop %v3238
        %v3240 = vmul.f32 %v2778, 1.442695
        %v3241 = vpow.pop %v3240
        %v3242 = vmul.f32 %v2779, 1.442695
        %v3243 = vpow.pop %v3242
        %v3244 = vmul.f32 %v2780, 1.442695
        %v3245 = vpow.pop %v3244
        %v3246 = vmul.f32 %v2781, 1.442695
        %v3247 = vpow.pop %v3246
        %v3248 = vmul.f32 %v2782, 1.442695
        %v3249 = vpow.pop %v3248
        %v3250 = vmul.f32 %v2783, 1.442695
        %v3251 = vpow.pop %v3250
        %v3252 = vmul.f32 %v2784, 1.442695
        %v3253 = vpow.pop %v3252
        %v3254 = vmul.f32 %v2785, 1.442695
        %v3255 = vpow.pop %v3254
        %v3256 = vmul.f32 %v2786, 1.442695
        %v3257 = vpow.pop %v3256
        %v3258 = vmul.f32 %v2787, 1.442695
        %v3259 = vpow.pop %v3258
        %v3260 = vmul.f32 %v2788, 1.442695
        %v3261 = vpow.pop %v3260
        %v3262 = vmul.f32 %v2789, 1.442695
        %v3263 = vpow.pop %v3262
        %v3264 = vmul.f32 %v2790, 1.442695
        %v3265 = vpow.pop %v3264
        %v3266 = vmul.f32 %v2791, 1.442695
        %v3267 = vpow.pop %v3266
        %v3268 = vmul.f32 %v2792, 1.442695
        %v3269 = vpow.pop %v3268
        %v3270 = vmul.f32 %v2793, 1.442695
        %v3271 = vpow.pop %v3270
        %v3272 = vmul.f32 %v2794, 1.442695
        %v3273 = vpow.pop %v3272
        %v3274 = vmul.f32 %v2795, 1.442695
        %v3275 = vpow.pop %v3274
        %v3276 = vmul.f32 %v2796, 1.442695
        %v3277 = vpow.pop %v3276
        %v3278 = vmul.f32 %v2797, 1.442695
        %v3279 = vpow.pop %v3278
        %v3280 = vmul.f32 %v2798, 1.442695
        %v3281 = vpow.pop %v3280
        %v3282 = vmul.f32 %v2799, 1.442695
        %v3283 = vpow.pop %v3282
        %v3284 = vmul.f32 %v2800, 1.442695
        %v3285 = vpow.pop %v3284
        %v3286 = vmul.f32 %v2801, 1.442695
        %v3287 = vpow.pop %v3286
        %v3288 = vmul.f32 %v2802, 1.442695
        %v3289 = vpow.pop %v3288
        %v3290 = vmul.f32 %v2803, 1.442695
        %v3291 = vpow.pop %v3290
        %v3292 = vmul.f32 %v2804, 1.442695
        %v3293 = vpow.pop %v3292
        %v3294 = vmul.f32 %v2805, 1.442695
        %v3295 = vpow.pop %v3294
        %v3296 = vmul.f32 %v2806, 1.442695
        %v3297 = vpow.pop %v3296
        %v3298 = vmul.f32 %v2807, 1.442695
        %v3299 = vpow.pop %v3298
        %v3300 = vmul.f32 %v2808, 1.442695
        %v3301 = vpow.pop %v3300
        %v3302 = vmul.f32 %v2809, 1.442695
        %v3303 = vpow.pop %v3302
        %v3304 = vmul.f32 %v2810, 1.442695
        %v3305 = vpow.pop %v3304
        %v3306 = vmul.f32 %v2811, 1.442695
        %v3307 = vpow.pop %v3306
        %v3308 = vmul.f32 %v2812, 1.442695
        %v3309 = vpow.pop %v3308
        %v3310 = vmul.f32 %v2813, 1.442695
        %v3311 = vpow.pop %v3310
        %v3312 = vmul.f32 %v2814, 1.442695
        %v3313 = vpow.pop %v3312
        %v3314 = vmul.f32 %v2815, 1.442695
        %v3315 = vpow.pop %v3314
        %v3316 = vmul.f32 %v2816, 1.442695
        %v3317 = vpow.pop %v3316
        %v3318 = vmul.f32 %v2817, 1.442695
        %v3319 = vpow.pop %v3318
        %v3320 = vmul.f32 %v2818, 1.442695
        %v3321 = vpow.pop %v3320
        %v3322 = vmul.f32 %v2819, 1.442695
        %v3323 = vpow.pop %v3322
        %v3324 = vmul.f32 %v2820, 1.442695
        %v3325 = vpow.pop %v3324
        %v3326 = vmul.f32 %v2821, 1.442695
        %v3327 = vpow.pop %v3326
        %v3328 = vmul.f32 %v2822, 1.442695
        %v3329 = vpow.pop %v3328
        %v3330 = vmul.f32 %v2823, 1.442695
        %v3331 = vpow.pop %v3330
        %v3332 = vmul.f32 %v2824, 1.442695
        %v3333 = vpow.pop %v3332
        %v3334 = vmul.f32 %v2825, 1.442695
        %v3335 = vpow.pop %v3334
        %v3336 = vmul.f32 %v2826, 1.442695
        %v3337 = vpow.pop %v3336
        %v3338 = vmul.f32 %v2827, 1.442695
        %v3339 = vpow.pop %v3338
        %v3340 = vsel %vm2316, %v2829, 0.0
        %v3341 = vsel %vm2317, %v2831, 0.0
        %v3342 = vsel %vm2318, %v2833, 0.0
        %v3343 = vsel %vm2319, %v2835, 0.0
        %v3344 = vsel %vm2320, %v2837, 0.0
        %v3345 = vsel %vm2321, %v2839, 0.0
        %v3346 = vsel %vm2322, %v2841, 0.0
        %v3347 = vsel %vm2323, %v2843, 0.0
        %v3348 = vsel %vm2324, %v2845, 0.0
        %v3349 = vsel %vm2325, %v2847, 0.0
        %v3350 = vsel %vm2326, %v2849, 0.0
        %v3351 = vsel %vm2327, %v2851, 0.0
        %v3352 = vsel %vm2328, %v2853, 0.0
        %v3353 = vsel %vm2329, %v2855, 0.0
        %v3354 = vsel %vm2330, %v2857, 0.0
        %v3355 = vsel %vm2331, %v2859, 0.0
        %v3356 = vsel %vm2332, %v2861, 0.0
        %v3357 = vsel %vm2333, %v2863, 0.0
        %v3358 = vsel %vm2334, %v2865, 0.0
        %v3359 = vsel %vm2335, %v2867, 0.0
        %v3360 = vsel %vm2336, %v2869, 0.0
        %v3361 = vsel %vm2337, %v2871, 0.0
        %v3362 = vsel %vm2338, %v2873, 0.0
        %v3363 = vsel %vm2339, %v2875, 0.0
        %v3364 = vsel %vm2340, %v2877, 0.0
        %v3365 = vsel %vm2341, %v2879, 0.0
        %v3366 = vsel %vm2342, %v2881, 0.0
        %v3367 = vsel %vm2343, %v2883, 0.0
        %v3368 = vsel %vm2344, %v2885, 0.0
        %v3369 = vsel %vm2345, %v2887, 0.0
        %v3370 = vsel %vm2346, %v2889, 0.0
        %v3371 = vsel %vm2347, %v2891, 0.0
        %v3372 = vsel %vm2348, %v2893, 0.0
        %v3373 = vsel %vm2349, %v2895, 0.0
        %v3374 = vsel %vm2350, %v2897, 0.0
        %v3375 = vsel %vm2351, %v2899, 0.0
        %v3376 = vsel %vm2352, %v2901, 0.0
        %v3377 = vsel %vm2353, %v2903, 0.0
        %v3378 = vsel %vm2354, %v2905, 0.0
        %v3379 = vsel %vm2355, %v2907, 0.0
        %v3380 = vsel %vm2356, %v2909, 0.0
        %v3381 = vsel %vm2357, %v2911, 0.0
        %v3382 = vsel %vm2358, %v2913, 0.0
        %v3383 = vsel %vm2359, %v2915, 0.0
        %v3384 = vsel %vm2360, %v2917, 0.0
        %v3385 = vsel %vm2361, %v2919, 0.0
        %v3386 = vsel %vm2362, %v2921, 0.0
        %v3387 = vsel %vm2363, %v2923, 0.0
        %v3388 = vsel %vm2364, %v2925, 0.0
        %v3389 = vsel %vm2365, %v2927, 0.0
        %v3390 = vsel %vm2366, %v2929, 0.0
        %v3391 = vsel %vm2367, %v2931, 0.0
        %v3392 = vsel %vm2368, %v2933, 0.0
        %v3393 = vsel %vm2369, %v2935, 0.0
        %v3394 = vsel %vm2370, %v2937, 0.0
        %v3395 = vsel %vm2371, %v2939, 0.0
        %v3396 = vsel %vm2372, %v2941, 0.0
        %v3397 = vsel %vm2373, %v2943, 0.0
        %v3398 = vsel %vm2374, %v2945, 0.0
        %v3399 = vsel %vm2375, %v2947, 0.0
        %v3400 = vsel %vm2376, %v2949, 0.0
        %v3401 = vsel %vm2377, %v2951, 0.0
        %v3402 = vsel %vm2378, %v2953, 0.0
        %v3403 = vsel %vm2379, %v2955, 0.0
        %v3404 = vsel %vm2380, %v2957, 0.0
        %v3405 = vsel %vm2381, %v2959, 0.0
        %v3406 = vsel %vm2382, %v2961, 0.0
        %v3407 = vsel %vm2383, %v2963, 0.0
        %v3408 = vsel %vm2384, %v2965, 0.0
        %v3409 = vsel %vm2385, %v2967, 0.0
        %v3410 = vsel %vm2386, %v2969, 0.0
        %v3411 = vsel %vm2387, %v2971, 0.0
        %v3412 = vsel %vm2388, %v2973, 0.0
        %v3413 = vsel %vm2389, %v2975, 0.0
        %v3414 = vsel %vm2390, %v2977, 0.0
        %v3415 = vsel %vm2391, %v2979, 0.0
        %v3416 = vsel %vm2392, %v2981, 0.0
        %v3417 = vsel %vm2393, %v2983, 0.0
        %v3418 = vsel %vm2394, %v2985, 0.0
        %v3419 = vsel %vm2395, %v2987, 0.0
        %v3420 = vsel %vm2396, %v2989, 0.0
        %v3421 = vsel %vm2397, %v2991, 0.0
        %v3422 = vsel %vm2398, %v2993, 0.0
        %v3423 = vsel %vm2399, %v2995, 0.0
        %v3424 = vsel %vm2400, %v2997, 0.0
        %v3425 = vsel %vm2401, %v2999, 0.0
        %v3426 = vsel %vm2402, %v3001, 0.0
        %v3427 = vsel %vm2403, %v3003, 0.0
        %v3428 = vsel %vm2404, %v3005, 0.0
        %v3429 = vsel %vm2405, %v3007, 0.0
        %v3430 = vsel %vm2406, %v3009, 0.0
        %v3431 = vsel %vm2407, %v3011, 0.0
        %v3432 = vsel %vm2408, %v3013, 0.0
        %v3433 = vsel %vm2409, %v3015, 0.0
        %v3434 = vsel %vm2410, %v3017, 0.0
        %v3435 = vsel %vm2411, %v3019, 0.0
        %v3436 = vsel %vm2412, %v3021, 0.0
        %v3437 = vsel %vm2413, %v3023, 0.0
        %v3438 = vsel %vm2414, %v3025, 0.0
        %v3439 = vsel %vm2415, %v3027, 0.0
        %v3440 = vsel %vm2416, %v3029, 0.0
        %v3441 = vsel %vm2417, %v3031, 0.0
        %v3442 = vsel %vm2418, %v3033, 0.0
        %v3443 = vsel %vm2419, %v3035, 0.0
        %v3444 = vsel %vm2420, %v3037, 0.0
        %v3445 = vsel %vm2421, %v3039, 0.0
        %v3446 = vsel %vm2422, %v3041, 0.0
        %v3447 = vsel %vm2423, %v3043, 0.0
        %v3448 = vsel %vm2424, %v3045, 0.0
        %v3449 = vsel %vm2425, %v3047, 0.0
        %v3450 = vsel %vm2426, %v3049, 0.0
        %v3451 = vsel %vm2427, %v3051, 0.0
        %v3452 = vsel %vm2428, %v3053, 0.0
        %v3453 = vsel %vm2429, %v3055, 0.0
        %v3454 = vsel %vm2430, %v3057, 0.0
        %v3455 = vsel %vm2431, %v3059, 0.0
        %v3456 = vsel %vm2432, %v3061, 0.0
        %v3457 = vsel %vm2433, %v3063, 0.0
        %v3458 = vsel %vm2434, %v3065, 0.0
        %v3459 = vsel %vm2435, %v3067, 0.0
        %v3460 = vsel %vm2436, %v3069, 0.0
        %v3461 = vsel %vm2437, %v3071, 0.0
        %v3462 = vsel %vm2438, %v3073, 0.0
        %v3463 = vsel %vm2439, %v3075, 0.0
        %v3464 = vsel %vm2440, %v3077, 0.0
        %v3465 = vsel %vm2441, %v3079, 0.0
        %v3466 = vsel %vm2442, %v3081, 0.0
        %v3467 = vsel %vm2443, %v3083, 0.0
        %v3468 = vsel %vm2444, %v3085, 0.0
        %v3469 = vsel %vm2445, %v3087, 0.0
        %v3470 = vsel %vm2446, %v3089, 0.0
        %v3471 = vsel %vm2447, %v3091, 0.0
        %v3472 = vsel %vm2448, %v3093, 0.0
        %v3473 = vsel %vm2449, %v3095, 0.0
        %v3474 = vsel %vm2450, %v3097, 0.0
        %v3475 = vsel %vm2451, %v3099, 0.0
        %v3476 = vsel %vm2452, %v3101, 0.0
        %v3477 = vsel %vm2453, %v3103, 0.0
        %v3478 = vsel %vm2454, %v3105, 0.0
        %v3479 = vsel %vm2455, %v3107, 0.0
        %v3480 = vsel %vm2456, %v3109, 0.0
        %v3481 = vsel %vm2457, %v3111, 0.0
        %v3482 = vsel %vm2458, %v3113, 0.0
        %v3483 = vsel %vm2459, %v3115, 0.0
        %v3484 = vsel %vm2460, %v3117, 0.0
        %v3485 = vsel %vm2461, %v3119, 0.0
        %v3486 = vsel %vm2462, %v3121, 0.0
        %v3487 = vsel %vm2463, %v3123, 0.0
        %v3488 = vsel %vm2464, %v3125, 0.0
        %v3489 = vsel %vm2465, %v3127, 0.0
        %v3490 = vsel %vm2466, %v3129, 0.0
        %v3491 = vsel %vm2467, %v3131, 0.0
        %v3492 = vsel %vm2468, %v3133, 0.0
        %v3493 = vsel %vm2469, %v3135, 0.0
        %v3494 = vsel %vm2470, %v3137, 0.0
        %v3495 = vsel %vm2471, %v3139, 0.0
        %v3496 = vsel %vm2472, %v3141, 0.0
        %v3497 = vsel %vm2473, %v3143, 0.0
        %v3498 = vsel %vm2474, %v3145, 0.0
        %v3499 = vsel %vm2475, %v3147, 0.0
        %v3500 = vsel %vm2476, %v3149, 0.0
        %v3501 = vsel %vm2477, %v3151, 0.0
        %v3502 = vsel %vm2478, %v3153, 0.0
        %v3503 = vsel %vm2479, %v3155, 0.0
        %v3504 = vsel %vm2480, %v3157, 0.0
        %v3505 = vsel %vm2481, %v3159, 0.0
        %v3506 = vsel %vm2482, %v3161, 0.0
        %v3507 = vsel %vm2483, %v3163, 0.0
        %v3508 = vsel %vm2484, %v3165, 0.0
        %v3509 = vsel %vm2485, %v3167, 0.0
        %v3510 = vsel %vm2486, %v3169, 0.0
        %v3511 = vsel %vm2487, %v3171, 0.0
        %v3512 = vsel %vm2488, %v3173, 0.0
        %v3513 = vsel %vm2489, %v3175, 0.0
        %v3514 = vsel %vm2490, %v3177, 0.0
        %v3515 = vsel %vm2491, %v3179, 0.0
        %v3516 = vsel %vm2492, %v3181, 0.0
        %v3517 = vsel %vm2493, %v3183, 0.0
        %v3518 = vsel %vm2494, %v3185, 0.0
        %v3519 = vsel %vm2495, %v3187, 0.0
        %v3520 = vsel %vm2496, %v3189, 0.0
        %v3521 = vsel %vm2497, %v3191, 0.0
        %v3522 = vsel %vm2498, %v3193, 0.0
        %v3523 = vsel %vm2499, %v3195, 0.0
        %v3524 = vsel %vm2500, %v3197, 0.0
        %v3525 = vsel %vm2501, %v3199, 0.0
        %v3526 = vsel %vm2502, %v3201, 0.0
        %v3527 = vsel %vm2503, %v3203, 0.0
        %v3528 = vsel %vm2504, %v3205, 0.0
        %v3529 = vsel %vm2505, %v3207, 0.0
        %v3530 = vsel %vm2506, %v3209, 0.0
        %v3531 = vsel %vm2507, %v3211, 0.0
        %v3532 = vsel %vm2508, %v3213, 0.0
        %v3533 = vsel %vm2509, %v3215, 0.0
        %v3534 = vsel %vm2510, %v3217, 0.0
        %v3535 = vsel %vm2511, %v3219, 0.0
        %v3536 = vsel %vm2512, %v3221, 0.0
        %v3537 = vsel %vm2513, %v3223, 0.0
        %v3538 = vsel %vm2514, %v3225, 0.0
        %v3539 = vsel %vm2515, %v3227, 0.0
        %v3540 = vsel %vm2516, %v3229, 0.0
        %v3541 = vsel %vm2517, %v3231, 0.0
        %v3542 = vsel %vm2518, %v3233, 0.0
        %v3543 = vsel %vm2519, %v3235, 0.0
        %v3544 = vsel %vm2520, %v3237, 0.0
        %v3545 = vsel %vm2521, %v3239, 0.0
        %v3546 = vsel %vm2522, %v3241, 0.0
        %v3547 = vsel %vm2523, %v3243, 0.0
        %v3548 = vsel %vm2524, %v3245, 0.0
        %v3549 = vsel %vm2525, %v3247, 0.0
        %v3550 = vsel %vm2526, %v3249, 0.0
        %v3551 = vsel %vm2527, %v3251, 0.0
        %v3552 = vsel %vm2528, %v3253, 0.0
        %v3553 = vsel %vm2529, %v3255, 0.0
        %v3554 = vsel %vm2530, %v3257, 0.0
        %v3555 = vsel %vm2531, %v3259, 0.0
        %v3556 = vsel %vm2532, %v3261, 0.0
        %v3557 = vsel %vm2533, %v3263, 0.0
        %v3558 = vsel %vm2534, %v3265, 0.0
        %v3559 = vsel %vm2535, %v3267, 0.0
        %v3560 = vsel %vm2536, %v3269, 0.0
        %v3561 = vsel %vm2537, %v3271, 0.0
        %v3562 = vsel %vm2538, %v3273, 0.0
        %v3563 = vsel %vm2539, %v3275, 0.0
        %v3564 = vsel %vm2540, %v3277, 0.0
        %v3565 = vsel %vm2541, %v3279, 0.0
        %v3566 = vsel %vm2542, %v3281, 0.0
        %v3567 = vsel %vm2543, %v3283, 0.0
        %v3568 = vsel %vm2544, %v3285, 0.0
        %v3569 = vsel %vm2545, %v3287, 0.0
        %v3570 = vsel %vm2546, %v3289, 0.0
        %v3571 = vsel %vm2547, %v3291, 0.0
        %v3572 = vsel %vm2548, %v3293, 0.0
        %v3573 = vsel %vm2549, %v3295, 0.0
        %v3574 = vsel %vm2550, %v3297, 0.0
        %v3575 = vsel %vm2551, %v3299, 0.0
        %v3576 = vsel %vm2552, %v3301, 0.0
        %v3577 = vsel %vm2553, %v3303, 0.0
        %v3578 = vsel %vm2554, %v3305, 0.0
        %v3579 = vsel %vm2555, %v3307, 0.0
        %v3580 = vsel %vm2556, %v3309, 0.0
        %v3581 = vsel %vm2557, %v3311, 0.0
        %v3582 = vsel %vm2558, %v3313, 0.0
        %v3583 = vsel %vm2559, %v3315, 0.0
        %v3584 = vsel %vm2560, %v3317, 0.0
        %v3585 = vsel %vm2561, %v3319, 0.0
        %v3586 = vsel %vm2562, %v3321, 0.0
        %v3587 = vsel %vm2563, %v3323, 0.0
        %v3588 = vsel %vm2564, %v3325, 0.0
        %v3589 = vsel %vm2565, %v3327, 0.0
        %v3590 = vsel %vm2566, %v3329, 0.0
        %v3591 = vsel %vm2567, %v3331, 0.0
        %v3592 = vsel %vm2568, %v3333, 0.0
        %v3593 = vsel %vm2569, %v3335, 0.0
        %v3594 = vsel %vm2570, %v3337, 0.0
        %v3595 = vsel %vm2571, %v3339, 0.0
        %v3852 = vcombine.low %v3340, %v3341
        %v3853 = vcombine.low %v3342, %v3343
        %v3854 = vcombine.low %v3344, %v3345
        %v3855 = vcombine.low %v3346, %v3347
        %v3856 = vcombine.low %v3348, %v3349
        %v3857 = vcombine.low %v3350, %v3351
        %v3858 = vcombine.low %v3352, %v3353
        %v3859 = vcombine.low %v3354, %v3355
        %v3860 = vcombine.low %v3356, %v3357
        %v3861 = vcombine.low %v3358, %v3359
        %v3862 = vcombine.low %v3360, %v3361
        %v3863 = vcombine.low %v3362, %v3363
        %v3864 = vcombine.low %v3364, %v3365
        %v3865 = vcombine.low %v3366, %v3367
        %v3866 = vcombine.low %v3368, %v3369
        %v3867 = vcombine.low %v3370, %v3371
        %v3868 = vcombine.low %v3372, %v3373
        %v3869 = vcombine.low %v3374, %v3375
        %v3870 = vcombine.low %v3376, %v3377
        %v3871 = vcombine.low %v3378, %v3379
        %v3872 = vcombine.low %v3380, %v3381
        %v3873 = vcombine.low %v3382, %v3383
        %v3874 = vcombine.low %v3384, %v3385
        %v3875 = vcombine.low %v3386, %v3387
        %v3876 = vcombine.low %v3388, %v3389
        %v3877 = vcombine.low %v3390, %v3391
        %v3878 = vcombine.low %v3392, %v3393
        %v3879 = vcombine.low %v3394, %v3395
        %v3880 = vcombine.low %v3396, %v3397
        %v3881 = vcombine.low %v3398, %v3399
        %v3882 = vcombine.low %v3400, %v3401
        %v3883 = vcombine.low %v3402, %v3403
        %v3884 = vcombine.low %v3404, %v3405
        %v3885 = vcombine.low %v3406, %v3407
        %v3886 = vcombine.low %v3408, %v3409
        %v3887 = vcombine.low %v3410, %v3411
        %v3888 = vcombine.low %v3412, %v3413
        %v3889 = vcombine.low %v3414, %v3415
        %v3890 = vcombine.low %v3416, %v3417
        %v3891 = vcombine.low %v3418, %v3419
        %v3892 = vcombine.low %v3420, %v3421
        %v3893 = vcombine.low %v3422, %v3423
        %v3894 = vcombine.low %v3424, %v3425
        %v3895 = vcombine.low %v3426, %v3427
        %v3896 = vcombine.low %v3428, %v3429
        %v3897 = vcombine.low %v3430, %v3431
        %v3898 = vcombine.low %v3432, %v3433
        %v3899 = vcombine.low %v3434, %v3435
        %v3900 = vcombine.low %v3436, %v3437
        %v3901 = vcombine.low %v3438, %v3439
        %v3902 = vcombine.low %v3440, %v3441
        %v3903 = vcombine.low %v3442, %v3443
        %v3904 = vcombine.low %v3444, %v3445
        %v3905 = vcombine.low %v3446, %v3447
        %v3906 = vcombine.low %v3448, %v3449
        %v3907 = vcombine.low %v3450, %v3451
        %v3908 = vcombine.low %v3452, %v3453
        %v3909 = vcombine.low %v3454, %v3455
        %v3910 = vcombine.low %v3456, %v3457
        %v3911 = vcombine.low %v3458, %v3459
        %v3912 = vcombine.low %v3460, %v3461
        %v3913 = vcombine.low %v3462, %v3463
        %v3914 = vcombine.low %v3464, %v3465
        %v3915 = vcombine.low %v3466, %v3467
        %v3916 = vcombine.low %v3468, %v3469
        %v3917 = vcombine.low %v3470, %v3471
        %v3918 = vcombine.low %v3472, %v3473
        %v3919 = vcombine.low %v3474, %v3475
        %v3920 = vcombine.low %v3476, %v3477
        %v3921 = vcombine.low %v3478, %v3479
        %v3922 = vcombine.low %v3480, %v3481
        %v3923 = vcombine.low %v3482, %v3483
        %v3924 = vcombine.low %v3484, %v3485
        %v3925 = vcombine.low %v3486, %v3487
        %v3926 = vcombine.low %v3488, %v3489
        %v3927 = vcombine.low %v3490, %v3491
        %v3928 = vcombine.low %v3492, %v3493
        %v3929 = vcombine.low %v3494, %v3495
        %v3930 = vcombine.low %v3496, %v3497
        %v3931 = vcombine.low %v3498, %v3499
        %v3932 = vcombine.low %v3500, %v3501
        %v3933 = vcombine.low %v3502, %v3503
        %v3934 = vcombine.low %v3504, %v3505
        %v3935 = vcombine.low %v3506, %v3507
        %v3936 = vcombine.low %v3508, %v3509
        %v3937 = vcombine.low %v3510, %v3511
        %v3938 = vcombine.low %v3512, %v3513
        %v3939 = vcombine.low %v3514, %v3515
        %v3940 = vcombine.low %v3516, %v3517
        %v3941 = vcombine.low %v3518, %v3519
        %v3942 = vcombine.low %v3520, %v3521
        %v3943 = vcombine.low %v3522, %v3523
        %v3944 = vcombine.low %v3524, %v3525
        %v3945 = vcombine.low %v3526, %v3527
        %v3946 = vcombine.low %v3528, %v3529
        %v3947 = vcombine.low %v3530, %v3531
        %v3948 = vcombine.low %v3532, %v3533
        %v3949 = vcombine.low %v3534, %v3535
        %v3950 = vcombine.low %v3536, %v3537
        %v3951 = vcombine.low %v3538, %v3539
        %v3952 = vcombine.low %v3540, %v3541
        %v3953 = vcombine.low %v3542, %v3543
        %v3954 = vcombine.low %v3544, %v3545
        %v3955 = vcombine.low %v3546, %v3547
        %v3956 = vcombine.low %v3548, %v3549
        %v3957 = vcombine.low %v3550, %v3551
        %v3958 = vcombine.low %v3552, %v3553
        %v3959 = vcombine.low %v3554, %v3555
        %v3960 = vcombine.low %v3556, %v3557
        %v3961 = vcombine.low %v3558, %v3559
        %v3962 = vcombine.low %v3560, %v3561
        %v3963 = vcombine.low %v3562, %v3563
        %v3964 = vcombine.low %v3564, %v3565
        %v3965 = vcombine.low %v3566, %v3567
        %v3966 = vcombine.low %v3568, %v3569
        %v3967 = vcombine.low %v3570, %v3571
        %v3968 = vcombine.low %v3572, %v3573
        %v3969 = vcombine.low %v3574, %v3575
        %v3970 = vcombine.low %v3576, %v3577
        %v3971 = vcombine.low %v3578, %v3579
        %v3972 = vcombine.low %v3580, %v3581
        %v3973 = vcombine.low %v3582, %v3583
        %v3974 = vcombine.low %v3584, %v3585
        %v3975 = vcombine.low %v3586, %v3587
        %v3976 = vcombine.low %v3588, %v3589
        %v3977 = vcombine.low %v3590, %v3591
        %v3978 = vcombine.low %v3592, %v3593
        %v3979 = vcombine.low %v3594, %v3595
        %4108 = vst [vmem:[%s181] sm:$0xff] %v3852
        %4109 = vst [vmem:[%s181 + $0x8] sm:$0xff] %v3853
        %4110 = vst [vmem:[%s181 + $0x10] sm:$0xff] %v3854
        %4111 = vst [vmem:[%s181 + $0x18] sm:$0xff] %v3855
        %4112 = vst [vmem:[%s181 + $0x20] sm:$0xff] %v3856
        %4113 = vst [vmem:[%s181 + $0x28] sm:$0xff] %v3857
        %4114 = vst [vmem:[%s181 + $0x30] sm:$0xff] %v3858
        %4115 = vst [vmem:[%s181 + $0x38] sm:$0xff] %v3859
        %4116 = vst [vmem:[%s181 + $0x40] sm:$0xff] %v3860
        %4117 = vst [vmem:[%s181 + $0x48] sm:$0xff] %v3861
        %4118 = vst [vmem:[%s181 + $0x50] sm:$0xff] %v3862
        %4119 = vst [vmem:[%s181 + $0x58] sm:$0xff] %v3863
        %4120 = vst [vmem:[%s181 + $0x60] sm:$0xff] %v3864
        %4121 = vst [vmem:[%s181 + $0x68] sm:$0xff] %v3865
        %4122 = vst [vmem:[%s181 + $0x70] sm:$0xff] %v3866
        %4123 = vst [vmem:[%s181 + $0x78] sm:$0xff] %v3867
        %4124 = vst [vmem:[%s181 + $0x80] sm:$0xff] %v3868
        %4125 = vst [vmem:[%s181 + $0x88] sm:$0xff] %v3869
        %4126 = vst [vmem:[%s181 + $0x90] sm:$0xff] %v3870
        %4127 = vst [vmem:[%s181 + $0x98] sm:$0xff] %v3871
        %4128 = vst [vmem:[%s181 + $0xa0] sm:$0xff] %v3872
        %4129 = vst [vmem:[%s181 + $0xa8] sm:$0xff] %v3873
        %4130 = vst [vmem:[%s181 + $0xb0] sm:$0xff] %v3874
        %4131 = vst [vmem:[%s181 + $0xb8] sm:$0xff] %v3875
        %4132 = vst [vmem:[%s181 + $0xc0] sm:$0xff] %v3876
        %4133 = vst [vmem:[%s181 + $0xc8] sm:$0xff] %v3877
        %4134 = vst [vmem:[%s181 + $0xd0] sm:$0xff] %v3878
        %4135 = vst [vmem:[%s181 + $0xd8] sm:$0xff] %v3879
        %4136 = vst [vmem:[%s181 + $0xe0] sm:$0xff] %v3880
        %4137 = vst [vmem:[%s181 + $0xe8] sm:$0xff] %v3881
        %4138 = vst [vmem:[%s181 + $0xf0] sm:$0xff] %v3882
        %4139 = vst [vmem:[%s181 + $0xf8] sm:$0xff] %v3883
        %4140 = vst [vmem:[%s181 + $0x100] sm:$0xff] %v3884
        %4141 = vst [vmem:[%s181 + $0x108] sm:$0xff] %v3885
        %4142 = vst [vmem:[%s181 + $0x110] sm:$0xff] %v3886
        %4143 = vst [vmem:[%s181 + $0x118] sm:$0xff] %v3887
        %4144 = vst [vmem:[%s181 + $0x120] sm:$0xff] %v3888
        %4145 = vst [vmem:[%s181 + $0x128] sm:$0xff] %v3889
        %4146 = vst [vmem:[%s181 + $0x130] sm:$0xff] %v3890
        %4147 = vst [vmem:[%s181 + $0x138] sm:$0xff] %v3891
        %4148 = vst [vmem:[%s181 + $0x140] sm:$0xff] %v3892
        %4149 = vst [vmem:[%s181 + $0x148] sm:$0xff] %v3893
        %4150 = vst [vmem:[%s181 + $0x150] sm:$0xff] %v3894
        %4151 = vst [vmem:[%s181 + $0x158] sm:$0xff] %v3895
        %4152 = vst [vmem:[%s181 + $0x160] sm:$0xff] %v3896
        %4153 = vst [vmem:[%s181 + $0x168] sm:$0xff] %v3897
        %4154 = vst [vmem:[%s181 + $0x170] sm:$0xff] %v3898
        %4155 = vst [vmem:[%s181 + $0x178] sm:$0xff] %v3899
        %4156 = vst [vmem:[%s181 + $0x180] sm:$0xff] %v3900
        %4157 = vst [vmem:[%s181 + $0x188] sm:$0xff] %v3901
        %4158 = vst [vmem:[%s181 + $0x190] sm:$0xff] %v3902
        %4159 = vst [vmem:[%s181 + $0x198] sm:$0xff] %v3903
        %4160 = vst [vmem:[%s181 + $0x1a0] sm:$0xff] %v3904
        %4161 = vst [vmem:[%s181 + $0x1a8] sm:$0xff] %v3905
        %4162 = vst [vmem:[%s181 + $0x1b0] sm:$0xff] %v3906
        %4163 = vst [vmem:[%s181 + $0x1b8] sm:$0xff] %v3907
        %4164 = vst [vmem:[%s181 + $0x1c0] sm:$0xff] %v3908
        %4165 = vst [vmem:[%s181 + $0x1c8] sm:$0xff] %v3909
        %4166 = vst [vmem:[%s181 + $0x1d0] sm:$0xff] %v3910
        %4167 = vst [vmem:[%s181 + $0x1d8] sm:$0xff] %v3911
        %4168 = vst [vmem:[%s181 + $0x1e0] sm:$0xff] %v3912
        %4169 = vst [vmem:[%s181 + $0x1e8] sm:$0xff] %v3913
        %4170 = vst [vmem:[%s181 + $0x1f0] sm:$0xff] %v3914
        %4171 = vst [vmem:[%s181 + $0x1f8] sm:$0xff] %v3915
        %4172 = vst [vmem:[%s181 + $0x200] sm:$0xff] %v3916
        %4173 = vst [vmem:[%s181 + $0x208] sm:$0xff] %v3917
        %4174 = vst [vmem:[%s181 + $0x210] sm:$0xff] %v3918
        %4175 = vst [vmem:[%s181 + $0x218] sm:$0xff] %v3919
        %4176 = vst [vmem:[%s181 + $0x220] sm:$0xff] %v3920
        %4177 = vst [vmem:[%s181 + $0x228] sm:$0xff] %v3921
        %4178 = vst [vmem:[%s181 + $0x230] sm:$0xff] %v3922
        %4179 = vst [vmem:[%s181 + $0x238] sm:$0xff] %v3923
        %4180 = vst [vmem:[%s181 + $0x240] sm:$0xff] %v3924
        %4181 = vst [vmem:[%s181 + $0x248] sm:$0xff] %v3925
        %4182 = vst [vmem:[%s181 + $0x250] sm:$0xff] %v3926
        %4183 = vst [vmem:[%s181 + $0x258] sm:$0xff] %v3927
        %4184 = vst [vmem:[%s181 + $0x260] sm:$0xff] %v3928
        %4185 = vst [vmem:[%s181 + $0x268] sm:$0xff] %v3929
        %4186 = vst [vmem:[%s181 + $0x270] sm:$0xff] %v3930
        %4187 = vst [vmem:[%s181 + $0x278] sm:$0xff] %v3931
        %4188 = vst [vmem:[%s181 + $0x280] sm:$0xff] %v3932
        %4189 = vst [vmem:[%s181 + $0x288] sm:$0xff] %v3933
        %4190 = vst [vmem:[%s181 + $0x290] sm:$0xff] %v3934
        %4191 = vst [vmem:[%s181 + $0x298] sm:$0xff] %v3935
        %4192 = vst [vmem:[%s181 + $0x2a0] sm:$0xff] %v3936
        %4193 = vst [vmem:[%s181 + $0x2a8] sm:$0xff] %v3937
        %4194 = vst [vmem:[%s181 + $0x2b0] sm:$0xff] %v3938
        %4195 = vst [vmem:[%s181 + $0x2b8] sm:$0xff] %v3939
        %4196 = vst [vmem:[%s181 + $0x2c0] sm:$0xff] %v3940
        %4197 = vst [vmem:[%s181 + $0x2c8] sm:$0xff] %v3941
        %4198 = vst [vmem:[%s181 + $0x2d0] sm:$0xff] %v3942
        %4199 = vst [vmem:[%s181 + $0x2d8] sm:$0xff] %v3943
        %4200 = vst [vmem:[%s181 + $0x2e0] sm:$0xff] %v3944
        %4201 = vst [vmem:[%s181 + $0x2e8] sm:$0xff] %v3945
        %4202 = vst [vmem:[%s181 + $0x2f0] sm:$0xff] %v3946
        %4203 = vst [vmem:[%s181 + $0x2f8] sm:$0xff] %v3947
        %4204 = vst [vmem:[%s181 + $0x300] sm:$0xff] %v3948
        %4205 = vst [vmem:[%s181 + $0x308] sm:$0xff] %v3949
        %4206 = vst [vmem:[%s181 + $0x310] sm:$0xff] %v3950
        %4207 = vst [vmem:[%s181 + $0x318] sm:$0xff] %v3951
        %4208 = vst [vmem:[%s181 + $0x320] sm:$0xff] %v3952
        %4209 = vst [vmem:[%s181 + $0x328] sm:$0xff] %v3953
        %4210 = vst [vmem:[%s181 + $0x330] sm:$0xff] %v3954
        %4211 = vst [vmem:[%s181 + $0x338] sm:$0xff] %v3955
        %4212 = vst [vmem:[%s181 + $0x340] sm:$0xff] %v3956
        %4213 = vst [vmem:[%s181 + $0x348] sm:$0xff] %v3957
        %4214 = vst [vmem:[%s181 + $0x350] sm:$0xff] %v3958
        %4215 = vst [vmem:[%s181 + $0x358] sm:$0xff] %v3959
        %4216 = vst [vmem:[%s181 + $0x360] sm:$0xff] %v3960
        %4217 = vst [vmem:[%s181 + $0x368] sm:$0xff] %v3961
        %4218 = vst [vmem:[%s181 + $0x370] sm:$0xff] %v3962
        %4219 = vst [vmem:[%s181 + $0x378] sm:$0xff] %v3963
        %4220 = vst [vmem:[%s181 + $0x380] sm:$0xff] %v3964
        %4221 = vst [vmem:[%s181 + $0x388] sm:$0xff] %v3965
        %4222 = vst [vmem:[%s181 + $0x390] sm:$0xff] %v3966
        %4223 = vst [vmem:[%s181 + $0x398] sm:$0xff] %v3967
        %4224 = vst [vmem:[%s181 + $0x3a0] sm:$0xff] %v3968
        %4225 = vst [vmem:[%s181 + $0x3a8] sm:$0xff] %v3969
        %4226 = vst [vmem:[%s181 + $0x3b0] sm:$0xff] %v3970
        %4227 = vst [vmem:[%s181 + $0x3b8] sm:$0xff] %v3971
        %4228 = vst [vmem:[%s181 + $0x3c0] sm:$0xff] %v3972
        %4229 = vst [vmem:[%s181 + $0x3c8] sm:$0xff] %v3973
        %4230 = vst [vmem:[%s181 + $0x3d0] sm:$0xff] %v3974
        %4231 = vst [vmem:[%s181 + $0x3d8] sm:$0xff] %v3975
        %4232 = vst [vmem:[%s181 + $0x3e0] sm:$0xff] %v3976
        %4233 = vst [vmem:[%s181 + $0x3e8] sm:$0xff] %v3977
        %4234 = vst [vmem:[%s181 + $0x3f0] sm:$0xff] %v3978
        %4235 = vst [vmem:[%s181 + $0x3f8] sm:$0xff] %v3979
        %p4236 = scmp.eq.s32.totalorder %s25, 0
        // Predicated region
        $region29: #{tpu_custom_call.1} parent=23 // pred_check
          %p4237 = pneg %p4236
        $region30: #{tpu_custom_call.1} parent=23 // pred_check_branch
          %4239 = sbr.rel (%p4237) target = $region32
        $region31: #{tpu_custom_call.1} parent=23 // pred_region
          %vm4240 = vcmask 3072
          %4241 = vst.msk [vmem:[%s197] sm:$0xf] %vm4240, 0.0
          %4242 = vst.msk [vmem:[%s197 + $0x4] sm:$0xf] %vm4240, 0.0
          %4243 = vst.msk [vmem:[%s197 + $0x8] sm:$0xf] %vm4240, 0.0
          %4244 = vst.msk [vmem:[%s197 + $0xc] sm:$0xf] %vm4240, 0.0
          %4245 = vst.msk [vmem:[%s197 + $0x10] sm:$0xf] %vm4240, 0.0
          %4246 = vst.msk [vmem:[%s197 + $0x14] sm:$0xf] %vm4240, 0.0
          %4247 = vst.msk [vmem:[%s197 + $0x18] sm:$0xf] %vm4240, 0.0
          %4248 = vst.msk [vmem:[%s197 + $0x1c] sm:$0xf] %vm4240, 0.0
          %4249 = vst.msk [vmem:[%s197 + $0x20] sm:$0xf] %vm4240, 0.0
          %4250 = vst.msk [vmem:[%s197 + $0x24] sm:$0xf] %vm4240, 0.0
          %4251 = vst.msk [vmem:[%s197 + $0x28] sm:$0xf] %vm4240, 0.0
          %4252 = vst.msk [vmem:[%s197 + $0x2c] sm:$0xf] %vm4240, 0.0
          %4253 = vst.msk [vmem:[%s197 + $0x30] sm:$0xf] %vm4240, 0.0
          %4254 = vst.msk [vmem:[%s197 + $0x34] sm:$0xf] %vm4240, 0.0
          %4255 = vst.msk [vmem:[%s197 + $0x38] sm:$0xf] %vm4240, 0.0
          %4256 = vst.msk [vmem:[%s197 + $0x3c] sm:$0xf] %vm4240, 0.0
        $region32: #{tpu_custom_call.1} parent=23 // pred_fallthru
          _
        %v4257 = vld [vmem:[%s197] sm:$0xf]
        %v4258 = vld [vmem:[%s197 + $0x4] sm:$0xf]
        %v4259 = vld [vmem:[%s197 + $0x8] sm:$0xf]
        %v4260 = vld [vmem:[%s197 + $0xc] sm:$0xf]
        %v4261 = vld [vmem:[%s197 + $0x10] sm:$0xf]
        %v4262 = vld [vmem:[%s197 + $0x14] sm:$0xf]
        %v4263 = vld [vmem:[%s197 + $0x18] sm:$0xf]
        %v4264 = vld [vmem:[%s197 + $0x1c] sm:$0xf]
        %v4265 = vld [vmem:[%s197 + $0x20] sm:$0xf]
        %v4266 = vld [vmem:[%s197 + $0x24] sm:$0xf]
        %v4267 = vld [vmem:[%s197 + $0x28] sm:$0xf]
        %v4268 = vld [vmem:[%s197 + $0x2c] sm:$0xf]
        %v4269 = vld [vmem:[%s197 + $0x30] sm:$0xf]
        %v4270 = vld [vmem:[%s197 + $0x34] sm:$0xf]
        %v4271 = vld [vmem:[%s197 + $0x38] sm:$0xf]
        %v4272 = vld [vmem:[%s197 + $0x3c] sm:$0xf]
        %vm4273 = vcmask 1043456
        %v4274 = vsel %vm4273, %v3340, 0.0
        %v4275 = vsel %vm4273, %v3341, 0.0
        %v4276 = vadd.f32 %v4274, %v4275
        %v4277 = vsel %vm4273, %v3342, 0.0
        %v4278 = vadd.f32 %v4276, %v4277
        %v4279 = vsel %vm4273, %v3343, 0.0
        %v4280 = vadd.f32 %v4278, %v4279
        %v4281 = vsel %vm4273, %v3344, 0.0
        %v4282 = vadd.f32 %v4280, %v4281
        %v4283 = vsel %vm4273, %v3345, 0.0
        %v4284 = vadd.f32 %v4282, %v4283
        %v4285 = vsel %vm4273, %v3346, 0.0
        %v4286 = vadd.f32 %v4284, %v4285
        %v4287 = vsel %vm4273, %v3347, 0.0
        %v4288 = vadd.f32 %v4286, %v4287
        %v4289 = vsel %vm4273, %v3348, 0.0
        %v4290 = vadd.f32 %v4288, %v4289
        %v4291 = vsel %vm4273, %v3349, 0.0
        %v4292 = vadd.f32 %v4290, %v4291
        %v4293 = vsel %vm4273, %v3350, 0.0
        %v4294 = vadd.f32 %v4292, %v4293
        %v4295 = vsel %vm4273, %v3351, 0.0
        %v4296 = vadd.f32 %v4294, %v4295
        %v4297 = vsel %vm4273, %v3352, 0.0
        %v4298 = vadd.f32 %v4296, %v4297
        %v4299 = vsel %vm4273, %v3353, 0.0
        %v4300 = vadd.f32 %v4298, %v4299
        %v4301 = vsel %vm4273, %v3354, 0.0
        %v4302 = vadd.f32 %v4300, %v4301
        %v4303 = vsel %vm4273, %v3355, 0.0
        %v4304 = vadd.f32 %v4302, %v4303
        %4305 = vadd.xlane.f32.xlu0 %v4304
        %v4306 = vpop.xlane.xlu0 %4305
        %v4307 = vsel %vm4273, %v3356, 0.0
        %v4308 = vsel %vm4273, %v3357, 0.0
        %v4309 = vadd.f32 %v4307, %v4308
        %v4310 = vsel %vm4273, %v3358, 0.0
        %v4311 = vadd.f32 %v4309, %v4310
        %v4312 = vsel %vm4273, %v3359, 0.0
        %v4313 = vadd.f32 %v4311, %v4312
        %v4314 = vsel %vm4273, %v3360, 0.0
        %v4315 = vadd.f32 %v4313, %v4314
        %v4316 = vsel %vm4273, %v3361, 0.0
        %v4317 = vadd.f32 %v4315, %v4316
        %v4318 = vsel %vm4273, %v3362, 0.0
        %v4319 = vadd.f32 %v4317, %v4318
        %v4320 = vsel %vm4273, %v3363, 0.0
        %v4321 = vadd.f32 %v4319, %v4320
        %v4322 = vsel %vm4273, %v3364, 0.0
        %v4323 = vadd.f32 %v4321, %v4322
        %v4324 = vsel %vm4273, %v3365, 0.0
        %v4325 = vadd.f32 %v4323, %v4324
        %v4326 = vsel %vm4273, %v3366, 0.0
        %v4327 = vadd.f32 %v4325, %v4326
        %v4328 = vsel %vm4273, %v3367, 0.0
        %v4329 = vadd.f32 %v4327, %v4328
        %v4330 = vsel %vm4273, %v3368, 0.0
        %v4331 = vadd.f32 %v4329, %v4330
        %v4332 = vsel %vm4273, %v3369, 0.0
        %v4333 = vadd.f32 %v4331, %v4332
        %v4334 = vsel %vm4273, %v3370, 0.0
        %v4335 = vadd.f32 %v4333, %v4334
        %v4336 = vsel %vm4273, %v3371, 0.0
        %v4337 = vadd.f32 %v4335, %v4336
        %4338 = vadd.xlane.f32.xlu0 %v4337
        %v4339 = vpop.xlane.xlu0 %4338
        %v4340 = vsel %vm4273, %v3372, 0.0
        %v4341 = vsel %vm4273, %v3373, 0.0
        %v4342 = vadd.f32 %v4340, %v4341
        %v4343 = vsel %vm4273, %v3374, 0.0
        %v4344 = vadd.f32 %v4342, %v4343
        %v4345 = vsel %vm4273, %v3375, 0.0
        %v4346 = vadd.f32 %v4344, %v4345
        %v4347 = vsel %vm4273, %v3376, 0.0
        %v4348 = vadd.f32 %v4346, %v4347
        %v4349 = vsel %vm4273, %v3377, 0.0
        %v4350 = vadd.f32 %v4348, %v4349
        %v4351 = vsel %vm4273, %v3378, 0.0
        %v4352 = vadd.f32 %v4350, %v4351
        %v4353 = vsel %vm4273, %v3379, 0.0
        %v4354 = vadd.f32 %v4352, %v4353
        %v4355 = vsel %vm4273, %v3380, 0.0
        %v4356 = vadd.f32 %v4354, %v4355
        %v4357 = vsel %vm4273, %v3381, 0.0
        %v4358 = vadd.f32 %v4356, %v4357
        %v4359 = vsel %vm4273, %v3382, 0.0
        %v4360 = vadd.f32 %v4358, %v4359
        %v4361 = vsel %vm4273, %v3383, 0.0
        %v4362 = vadd.f32 %v4360, %v4361
        %v4363 = vsel %vm4273, %v3384, 0.0
        %v4364 = vadd.f32 %v4362, %v4363
        %v4365 = vsel %vm4273, %v3385, 0.0
        %v4366 = vadd.f32 %v4364, %v4365
        %v4367 = vsel %vm4273, %v3386, 0.0
        %v4368 = vadd.f32 %v4366, %v4367
        %v4369 = vsel %vm4273, %v3387, 0.0
        %v4370 = vadd.f32 %v4368, %v4369
        %4371 = vadd.xlane.f32.xlu0 %v4370
        %v4372 = vpop.xlane.xlu0 %4371
        %v4373 = vsel %vm4273, %v3388, 0.0
        %v4374 = vsel %vm4273, %v3389, 0.0
        %v4375 = vadd.f32 %v4373, %v4374
        %v4376 = vsel %vm4273, %v3390, 0.0
        %v4377 = vadd.f32 %v4375, %v4376
        %v4378 = vsel %vm4273, %v3391, 0.0
        %v4379 = vadd.f32 %v4377, %v4378
        %v4380 = vsel %vm4273, %v3392, 0.0
        %v4381 = vadd.f32 %v4379, %v4380
        %v4382 = vsel %vm4273, %v3393, 0.0
        %v4383 = vadd.f32 %v4381, %v4382
        %v4384 = vsel %vm4273, %v3394, 0.0
        %v4385 = vadd.f32 %v4383, %v4384
        %v4386 = vsel %vm4273, %v3395, 0.0
        %v4387 = vadd.f32 %v4385, %v4386
        %v4388 = vsel %vm4273, %v3396, 0.0
        %v4389 = vadd.f32 %v4387, %v4388
        %v4390 = vsel %vm4273, %v3397, 0.0
        %v4391 = vadd.f32 %v4389, %v4390
        %v4392 = vsel %vm4273, %v3398, 0.0
        %v4393 = vadd.f32 %v4391, %v4392
        %v4394 = vsel %vm4273, %v3399, 0.0
        %v4395 = vadd.f32 %v4393, %v4394
        %v4396 = vsel %vm4273, %v3400, 0.0
        %v4397 = vadd.f32 %v4395, %v4396
        %v4398 = vsel %vm4273, %v3401, 0.0
        %v4399 = vadd.f32 %v4397, %v4398
        %v4400 = vsel %vm4273, %v3402, 0.0
        %v4401 = vadd.f32 %v4399, %v4400
        %v4402 = vsel %vm4273, %v3403, 0.0
        %v4403 = vadd.f32 %v4401, %v4402
        %4404 = vadd.xlane.f32.xlu0 %v4403
        %v4405 = vpop.xlane.xlu0 %4404
        %v4406 = vsel %vm4273, %v3404, 0.0
        %v4407 = vsel %vm4273, %v3405, 0.0
        %v4408 = vadd.f32 %v4406, %v4407
        %v4409 = vsel %vm4273, %v3406, 0.0
        %v4410 = vadd.f32 %v4408, %v4409
        %v4411 = vsel %vm4273, %v3407, 0.0
        %v4412 = vadd.f32 %v4410, %v4411
        %v4413 = vsel %vm4273, %v3408, 0.0
        %v4414 = vadd.f32 %v4412, %v4413
        %v4415 = vsel %vm4273, %v3409, 0.0
        %v4416 = vadd.f32 %v4414, %v4415
        %v4417 = vsel %vm4273, %v3410, 0.0
        %v4418 = vadd.f32 %v4416, %v4417
        %v4419 = vsel %vm4273, %v3411, 0.0
        %v4420 = vadd.f32 %v4418, %v4419
        %v4421 = vsel %vm4273, %v3412, 0.0
        %v4422 = vadd.f32 %v4420, %v4421
        %v4423 = vsel %vm4273, %v3413, 0.0
        %v4424 = vadd.f32 %v4422, %v4423
        %v4425 = vsel %vm4273, %v3414, 0.0
        %v4426 = vadd.f32 %v4424, %v4425
        %v4427 = vsel %vm4273, %v3415, 0.0
        %v4428 = vadd.f32 %v4426, %v4427
        %v4429 = vsel %vm4273, %v3416, 0.0
        %v4430 = vadd.f32 %v4428, %v4429
        %v4431 = vsel %vm4273, %v3417, 0.0
        %v4432 = vadd.f32 %v4430, %v4431
        %v4433 = vsel %vm4273, %v3418, 0.0
        %v4434 = vadd.f32 %v4432, %v4433
        %v4435 = vsel %vm4273, %v3419, 0.0
        %v4436 = vadd.f32 %v4434, %v4435
        %4437 = vadd.xlane.f32.xlu0 %v4436
        %v4438 = vpop.xlane.xlu0 %4437
        %v4439 = vsel %vm4273, %v3420, 0.0
        %v4440 = vsel %vm4273, %v3421, 0.0
        %v4441 = vadd.f32 %v4439, %v4440
        %v4442 = vsel %vm4273, %v3422, 0.0
        %v4443 = vadd.f32 %v4441, %v4442
        %v4444 = vsel %vm4273, %v3423, 0.0
        %v4445 = vadd.f32 %v4443, %v4444
        %v4446 = vsel %vm4273, %v3424, 0.0
        %v4447 = vadd.f32 %v4445, %v4446
        %v4448 = vsel %vm4273, %v3425, 0.0
        %v4449 = vadd.f32 %v4447, %v4448
        %v4450 = vsel %vm4273, %v3426, 0.0
        %v4451 = vadd.f32 %v4449, %v4450
        %v4452 = vsel %vm4273, %v3427, 0.0
        %v4453 = vadd.f32 %v4451, %v4452
        %v4454 = vsel %vm4273, %v3428, 0.0
        %v4455 = vadd.f32 %v4453, %v4454
        %v4456 = vsel %vm4273, %v3429, 0.0
        %v4457 = vadd.f32 %v4455, %v4456
        %v4458 = vsel %vm4273, %v3430, 0.0
        %v4459 = vadd.f32 %v4457, %v4458
        %v4460 = vsel %vm4273, %v3431, 0.0
        %v4461 = vadd.f32 %v4459, %v4460
        %v4462 = vsel %vm4273, %v3432, 0.0
        %v4463 = vadd.f32 %v4461, %v4462
        %v4464 = vsel %vm4273, %v3433, 0.0
        %v4465 = vadd.f32 %v4463, %v4464
        %v4466 = vsel %vm4273, %v3434, 0.0
        %v4467 = vadd.f32 %v4465, %v4466
        %v4468 = vsel %vm4273, %v3435, 0.0
        %v4469 = vadd.f32 %v4467, %v4468
        %4470 = vadd.xlane.f32.xlu0 %v4469
        %v4471 = vpop.xlane.xlu0 %4470
        %v4472 = vsel %vm4273, %v3436, 0.0
        %v4473 = vsel %vm4273, %v3437, 0.0
        %v4474 = vadd.f32 %v4472, %v4473
        %v4475 = vsel %vm4273, %v3438, 0.0
        %v4476 = vadd.f32 %v4474, %v4475
        %v4477 = vsel %vm4273, %v3439, 0.0
        %v4478 = vadd.f32 %v4476, %v4477
        %v4479 = vsel %vm4273, %v3440, 0.0
        %v4480 = vadd.f32 %v4478, %v4479
        %v4481 = vsel %vm4273, %v3441, 0.0
        %v4482 = vadd.f32 %v4480, %v4481
        %v4483 = vsel %vm4273, %v3442, 0.0
        %v4484 = vadd.f32 %v4482, %v4483
        %v4485 = vsel %vm4273, %v3443, 0.0
        %v4486 = vadd.f32 %v4484, %v4485
        %v4487 = vsel %vm4273, %v3444, 0.0
        %v4488 = vadd.f32 %v4486, %v4487
        %v4489 = vsel %vm4273, %v3445, 0.0
        %v4490 = vadd.f32 %v4488, %v4489
        %v4491 = vsel %vm4273, %v3446, 0.0
        %v4492 = vadd.f32 %v4490, %v4491
        %v4493 = vsel %vm4273, %v3447, 0.0
        %v4494 = vadd.f32 %v4492, %v4493
        %v4495 = vsel %vm4273, %v3448, 0.0
        %v4496 = vadd.f32 %v4494, %v4495
        %v4497 = vsel %vm4273, %v3449, 0.0
        %v4498 = vadd.f32 %v4496, %v4497
        %v4499 = vsel %vm4273, %v3450, 0.0
        %v4500 = vadd.f32 %v4498, %v4499
        %v4501 = vsel %vm4273, %v3451, 0.0
        %v4502 = vadd.f32 %v4500, %v4501
        %4503 = vadd.xlane.f32.xlu0 %v4502
        %v4504 = vpop.xlane.xlu0 %4503
        %v4505 = vsel %vm4273, %v3452, 0.0
        %v4506 = vsel %vm4273, %v3453, 0.0
        %v4507 = vadd.f32 %v4505, %v4506
        %v4508 = vsel %vm4273, %v3454, 0.0
        %v4509 = vadd.f32 %v4507, %v4508
        %v4510 = vsel %vm4273, %v3455, 0.0
        %v4511 = vadd.f32 %v4509, %v4510
        %v4512 = vsel %vm4273, %v3456, 0.0
        %v4513 = vadd.f32 %v4511, %v4512
        %v4514 = vsel %vm4273, %v3457, 0.0
        %v4515 = vadd.f32 %v4513, %v4514
        %v4516 = vsel %vm4273, %v3458, 0.0
        %v4517 = vadd.f32 %v4515, %v4516
        %v4518 = vsel %vm4273, %v3459, 0.0
        %v4519 = vadd.f32 %v4517, %v4518
        %v4520 = vsel %vm4273, %v3460, 0.0
        %v4521 = vadd.f32 %v4519, %v4520
        %v4522 = vsel %vm4273, %v3461, 0.0
        %v4523 = vadd.f32 %v4521, %v4522
        %v4524 = vsel %vm4273, %v3462, 0.0
        %v4525 = vadd.f32 %v4523, %v4524
        %v4526 = vsel %vm4273, %v3463, 0.0
        %v4527 = vadd.f32 %v4525, %v4526
        %v4528 = vsel %vm4273, %v3464, 0.0
        %v4529 = vadd.f32 %v4527, %v4528
        %v4530 = vsel %vm4273, %v3465, 0.0
        %v4531 = vadd.f32 %v4529, %v4530
        %v4532 = vsel %vm4273, %v3466, 0.0
        %v4533 = vadd.f32 %v4531, %v4532
        %v4534 = vsel %vm4273, %v3467, 0.0
        %v4535 = vadd.f32 %v4533, %v4534
        %4536 = vadd.xlane.f32.xlu0 %v4535
        %v4537 = vpop.xlane.xlu0 %4536
        %v4538 = vsel %vm4273, %v3468, 0.0
        %v4539 = vsel %vm4273, %v3469, 0.0
        %v4540 = vadd.f32 %v4538, %v4539
        %v4541 = vsel %vm4273, %v3470, 0.0
        %v4542 = vadd.f32 %v4540, %v4541
        %v4543 = vsel %vm4273, %v3471, 0.0
        %v4544 = vadd.f32 %v4542, %v4543
        %v4545 = vsel %vm4273, %v3472, 0.0
        %v4546 = vadd.f32 %v4544, %v4545
        %v4547 = vsel %vm4273, %v3473, 0.0
        %v4548 = vadd.f32 %v4546, %v4547
        %v4549 = vsel %vm4273, %v3474, 0.0
        %v4550 = vadd.f32 %v4548, %v4549
        %v4551 = vsel %vm4273, %v3475, 0.0
        %v4552 = vadd.f32 %v4550, %v4551
        %v4553 = vsel %vm4273, %v3476, 0.0
        %v4554 = vadd.f32 %v4552, %v4553
        %v4555 = vsel %vm4273, %v3477, 0.0
        %v4556 = vadd.f32 %v4554, %v4555
        %v4557 = vsel %vm4273, %v3478, 0.0
        %v4558 = vadd.f32 %v4556, %v4557
        %v4559 = vsel %vm4273, %v3479, 0.0
        %v4560 = vadd.f32 %v4558, %v4559
        %v4561 = vsel %vm4273, %v3480, 0.0
        %v4562 = vadd.f32 %v4560, %v4561
        %v4563 = vsel %vm4273, %v3481, 0.0
        %v4564 = vadd.f32 %v4562, %v4563
        %v4565 = vsel %vm4273, %v3482, 0.0
        %v4566 = vadd.f32 %v4564, %v4565
        %v4567 = vsel %vm4273, %v3483, 0.0
        %v4568 = vadd.f32 %v4566, %v4567
        %4569 = vadd.xlane.f32.xlu0 %v4568
        %v4570 = vpop.xlane.xlu0 %4569
        %v4571 = vsel %vm4273, %v3484, 0.0
        %v4572 = vsel %vm4273, %v3485, 0.0
        %v4573 = vadd.f32 %v4571, %v4572
        %v4574 = vsel %vm4273, %v3486, 0.0
        %v4575 = vadd.f32 %v4573, %v4574
        %v4576 = vsel %vm4273, %v3487, 0.0
        %v4577 = vadd.f32 %v4575, %v4576
        %v4578 = vsel %vm4273, %v3488, 0.0
        %v4579 = vadd.f32 %v4577, %v4578
        %v4580 = vsel %vm4273, %v3489, 0.0
        %v4581 = vadd.f32 %v4579, %v4580
        %v4582 = vsel %vm4273, %v3490, 0.0
        %v4583 = vadd.f32 %v4581, %v4582
        %v4584 = vsel %vm4273, %v3491, 0.0
        %v4585 = vadd.f32 %v4583, %v4584
        %v4586 = vsel %vm4273, %v3492, 0.0
        %v4587 = vadd.f32 %v4585, %v4586
        %v4588 = vsel %vm4273, %v3493, 0.0
        %v4589 = vadd.f32 %v4587, %v4588
        %v4590 = vsel %vm4273, %v3494, 0.0
        %v4591 = vadd.f32 %v4589, %v4590
        %v4592 = vsel %vm4273, %v3495, 0.0
        %v4593 = vadd.f32 %v4591, %v4592
        %v4594 = vsel %vm4273, %v3496, 0.0
        %v4595 = vadd.f32 %v4593, %v4594
        %v4596 = vsel %vm4273, %v3497, 0.0
        %v4597 = vadd.f32 %v4595, %v4596
        %v4598 = vsel %vm4273, %v3498, 0.0
        %v4599 = vadd.f32 %v4597, %v4598
        %v4600 = vsel %vm4273, %v3499, 0.0
        %v4601 = vadd.f32 %v4599, %v4600
        %4602 = vadd.xlane.f32.xlu0 %v4601
        %v4603 = vpop.xlane.xlu0 %4602
        %v4604 = vsel %vm4273, %v3500, 0.0
        %v4605 = vsel %vm4273, %v3501, 0.0
        %v4606 = vadd.f32 %v4604, %v4605
        %v4607 = vsel %vm4273, %v3502, 0.0
        %v4608 = vadd.f32 %v4606, %v4607
        %v4609 = vsel %vm4273, %v3503, 0.0
        %v4610 = vadd.f32 %v4608, %v4609
        %v4611 = vsel %vm4273, %v3504, 0.0
        %v4612 = vadd.f32 %v4610, %v4611
        %v4613 = vsel %vm4273, %v3505, 0.0
        %v4614 = vadd.f32 %v4612, %v4613
        %v4615 = vsel %vm4273, %v3506, 0.0
        %v4616 = vadd.f32 %v4614, %v4615
        %v4617 = vsel %vm4273, %v3507, 0.0
        %v4618 = vadd.f32 %v4616, %v4617
        %v4619 = vsel %vm4273, %v3508, 0.0
        %v4620 = vadd.f32 %v4618, %v4619
        %v4621 = vsel %vm4273, %v3509, 0.0
        %v4622 = vadd.f32 %v4620, %v4621
        %v4623 = vsel %vm4273, %v3510, 0.0
        %v4624 = vadd.f32 %v4622, %v4623
        %v4625 = vsel %vm4273, %v3511, 0.0
        %v4626 = vadd.f32 %v4624, %v4625
        %v4627 = vsel %vm4273, %v3512, 0.0
        %v4628 = vadd.f32 %v4626, %v4627
        %v4629 = vsel %vm4273, %v3513, 0.0
        %v4630 = vadd.f32 %v4628, %v4629
        %v4631 = vsel %vm4273, %v3514, 0.0
        %v4632 = vadd.f32 %v4630, %v4631
        %v4633 = vsel %vm4273, %v3515, 0.0
        %v4634 = vadd.f32 %v4632, %v4633
        %4635 = vadd.xlane.f32.xlu0 %v4634
        %v4636 = vpop.xlane.xlu0 %4635
        %v4637 = vsel %vm4273, %v3516, 0.0
        %v4638 = vsel %vm4273, %v3517, 0.0
        %v4639 = vadd.f32 %v4637, %v4638
        %v4640 = vsel %vm4273, %v3518, 0.0
        %v4641 = vadd.f32 %v4639, %v4640
        %v4642 = vsel %vm4273, %v3519, 0.0
        %v4643 = vadd.f32 %v4641, %v4642
        %v4644 = vsel %vm4273, %v3520, 0.0
        %v4645 = vadd.f32 %v4643, %v4644
        %v4646 = vsel %vm4273, %v3521, 0.0
        %v4647 = vadd.f32 %v4645, %v4646
        %v4648 = vsel %vm4273, %v3522, 0.0
        %v4649 = vadd.f32 %v4647, %v4648
        %v4650 = vsel %vm4273, %v3523, 0.0
        %v4651 = vadd.f32 %v4649, %v4650
        %v4652 = vsel %vm4273, %v3524, 0.0
        %v4653 = vadd.f32 %v4651, %v4652
        %v4654 = vsel %vm4273, %v3525, 0.0
        %v4655 = vadd.f32 %v4653, %v4654
        %v4656 = vsel %vm4273, %v3526, 0.0
        %v4657 = vadd.f32 %v4655, %v4656
        %v4658 = vsel %vm4273, %v3527, 0.0
        %v4659 = vadd.f32 %v4657, %v4658
        %v4660 = vsel %vm4273, %v3528, 0.0
        %v4661 = vadd.f32 %v4659, %v4660
        %v4662 = vsel %vm4273, %v3529, 0.0
        %v4663 = vadd.f32 %v4661, %v4662
        %v4664 = vsel %vm4273, %v3530, 0.0
        %v4665 = vadd.f32 %v4663, %v4664
        %v4666 = vsel %vm4273, %v3531, 0.0
        %v4667 = vadd.f32 %v4665, %v4666
        %4668 = vadd.xlane.f32.xlu0 %v4667
        %v4669 = vpop.xlane.xlu0 %4668
        %v4670 = vsel %vm4273, %v3532, 0.0
        %v4671 = vsel %vm4273, %v3533, 0.0
        %v4672 = vadd.f32 %v4670, %v4671
        %v4673 = vsel %vm4273, %v3534, 0.0
        %v4674 = vadd.f32 %v4672, %v4673
        %v4675 = vsel %vm4273, %v3535, 0.0
        %v4676 = vadd.f32 %v4674, %v4675
        %v4677 = vsel %vm4273, %v3536, 0.0
        %v4678 = vadd.f32 %v4676, %v4677
        %v4679 = vsel %vm4273, %v3537, 0.0
        %v4680 = vadd.f32 %v4678, %v4679
        %v4681 = vsel %vm4273, %v3538, 0.0
        %v4682 = vadd.f32 %v4680, %v4681
        %v4683 = vsel %vm4273, %v3539, 0.0
        %v4684 = vadd.f32 %v4682, %v4683
        %v4685 = vsel %vm4273, %v3540, 0.0
        %v4686 = vadd.f32 %v4684, %v4685
        %v4687 = vsel %vm4273, %v3541, 0.0
        %v4688 = vadd.f32 %v4686, %v4687
        %v4689 = vsel %vm4273, %v3542, 0.0
        %v4690 = vadd.f32 %v4688, %v4689
        %v4691 = vsel %vm4273, %v3543, 0.0
        %v4692 = vadd.f32 %v4690, %v4691
        %v4693 = vsel %vm4273, %v3544, 0.0
        %v4694 = vadd.f32 %v4692, %v4693
        %v4695 = vsel %vm4273, %v3545, 0.0
        %v4696 = vadd.f32 %v4694, %v4695
        %v4697 = vsel %vm4273, %v3546, 0.0
        %v4698 = vadd.f32 %v4696, %v4697
        %v4699 = vsel %vm4273, %v3547, 0.0
        %v4700 = vadd.f32 %v4698, %v4699
        %4701 = vadd.xlane.f32.xlu0 %v4700
        %v4702 = vpop.xlane.xlu0 %4701
        %v4703 = vsel %vm4273, %v3548, 0.0
        %v4704 = vsel %vm4273, %v3549, 0.0
        %v4705 = vadd.f32 %v4703, %v4704
        %v4706 = vsel %vm4273, %v3550, 0.0
        %v4707 = vadd.f32 %v4705, %v4706
        %v4708 = vsel %vm4273, %v3551, 0.0
        %v4709 = vadd.f32 %v4707, %v4708
        %v4710 = vsel %vm4273, %v3552, 0.0
        %v4711 = vadd.f32 %v4709, %v4710
        %v4712 = vsel %vm4273, %v3553, 0.0
        %v4713 = vadd.f32 %v4711, %v4712
        %v4714 = vsel %vm4273, %v3554, 0.0
        %v4715 = vadd.f32 %v4713, %v4714
        %v4716 = vsel %vm4273, %v3555, 0.0
        %v4717 = vadd.f32 %v4715, %v4716
        %v4718 = vsel %vm4273, %v3556, 0.0
        %v4719 = vadd.f32 %v4717, %v4718
        %v4720 = vsel %vm4273, %v3557, 0.0
        %v4721 = vadd.f32 %v4719, %v4720
        %v4722 = vsel %vm4273, %v3558, 0.0
        %v4723 = vadd.f32 %v4721, %v4722
        %v4724 = vsel %vm4273, %v3559, 0.0
        %v4725 = vadd.f32 %v4723, %v4724
        %v4726 = vsel %vm4273, %v3560, 0.0
        %v4727 = vadd.f32 %v4725, %v4726
        %v4728 = vsel %vm4273, %v3561, 0.0
        %v4729 = vadd.f32 %v4727, %v4728
        %v4730 = vsel %vm4273, %v3562, 0.0
        %v4731 = vadd.f32 %v4729, %v4730
        %v4732 = vsel %vm4273, %v3563, 0.0
        %v4733 = vadd.f32 %v4731, %v4732
        %4734 = vadd.xlane.f32.xlu0 %v4733
        %v4735 = vpop.xlane.xlu0 %4734
        %v4736 = vsel %vm4273, %v3564, 0.0
        %v4737 = vsel %vm4273, %v3565, 0.0
        %v4738 = vadd.f32 %v4736, %v4737
        %v4739 = vsel %vm4273, %v3566, 0.0
        %v4740 = vadd.f32 %v4738, %v4739
        %v4741 = vsel %vm4273, %v3567, 0.0
        %v4742 = vadd.f32 %v4740, %v4741
        %v4743 = vsel %vm4273, %v3568, 0.0
        %v4744 = vadd.f32 %v4742, %v4743
        %v4745 = vsel %vm4273, %v3569, 0.0
        %v4746 = vadd.f32 %v4744, %v4745
        %v4747 = vsel %vm4273, %v3570, 0.0
        %v4748 = vadd.f32 %v4746, %v4747
        %v4749 = vsel %vm4273, %v3571, 0.0
        %v4750 = vadd.f32 %v4748, %v4749
        %v4751 = vsel %vm4273, %v3572, 0.0
        %v4752 = vadd.f32 %v4750, %v4751
        %v4753 = vsel %vm4273, %v3573, 0.0
        %v4754 = vadd.f32 %v4752, %v4753
        %v4755 = vsel %vm4273, %v3574, 0.0
        %v4756 = vadd.f32 %v4754, %v4755
        %v4757 = vsel %vm4273, %v3575, 0.0
        %v4758 = vadd.f32 %v4756, %v4757
        %v4759 = vsel %vm4273, %v3576, 0.0
        %v4760 = vadd.f32 %v4758, %v4759
        %v4761 = vsel %vm4273, %v3577, 0.0
        %v4762 = vadd.f32 %v4760, %v4761
        %v4763 = vsel %vm4273, %v3578, 0.0
        %v4764 = vadd.f32 %v4762, %v4763
        %v4765 = vsel %vm4273, %v3579, 0.0
        %v4766 = vadd.f32 %v4764, %v4765
        %4767 = vadd.xlane.f32.xlu0 %v4766
        %v4768 = vpop.xlane.xlu0 %4767
        %v4769 = vsel %vm4273, %v3580, 0.0
        %v4770 = vsel %vm4273, %v3581, 0.0
        %v4771 = vadd.f32 %v4769, %v4770
        %v4772 = vsel %vm4273, %v3582, 0.0
        %v4773 = vadd.f32 %v4771, %v4772
        %v4774 = vsel %vm4273, %v3583, 0.0
        %v4775 = vadd.f32 %v4773, %v4774
        %v4776 = vsel %vm4273, %v3584, 0.0
        %v4777 = vadd.f32 %v4775, %v4776
        %v4778 = vsel %vm4273, %v3585, 0.0
        %v4779 = vadd.f32 %v4777, %v4778
        %v4780 = vsel %vm4273, %v3586, 0.0
        %v4781 = vadd.f32 %v4779, %v4780
        %v4782 = vsel %vm4273, %v3587, 0.0
        %v4783 = vadd.f32 %v4781, %v4782
        %v4784 = vsel %vm4273, %v3588, 0.0
        %v4785 = vadd.f32 %v4783, %v4784
        %v4786 = vsel %vm4273, %v3589, 0.0
        %v4787 = vadd.f32 %v4785, %v4786
        %v4788 = vsel %vm4273, %v3590, 0.0
        %v4789 = vadd.f32 %v4787, %v4788
        %v4790 = vsel %vm4273, %v3591, 0.0
        %v4791 = vadd.f32 %v4789, %v4790
        %v4792 = vsel %vm4273, %v3592, 0.0
        %v4793 = vadd.f32 %v4791, %v4792
        %v4794 = vsel %vm4273, %v3593, 0.0
        %v4795 = vadd.f32 %v4793, %v4794
        %v4796 = vsel %vm4273, %v3594, 0.0
        %v4797 = vadd.f32 %v4795, %v4796
        %v4798 = vsel %vm4273, %v3595, 0.0
        %v4799 = vadd.f32 %v4797, %v4798
        %4800 = vadd.xlane.f32.xlu0 %v4799
        %v4801 = vpop.xlane.xlu0 %4800
        %v4802 = vadd.f32 %v4257, %v4306
        %v4803 = vadd.f32 %v4258, %v4339
        %v4804 = vadd.f32 %v4259, %v4372
        %v4805 = vadd.f32 %v4260, %v4405
        %v4806 = vadd.f32 %v4261, %v4438
        %v4807 = vadd.f32 %v4262, %v4471
        %v4808 = vadd.f32 %v4263, %v4504
        %v4809 = vadd.f32 %v4264, %v4537
        %v4810 = vadd.f32 %v4265, %v4570
        %v4811 = vadd.f32 %v4266, %v4603
        %v4812 = vadd.f32 %v4267, %v4636
        %v4813 = vadd.f32 %v4268, %v4669
        %v4814 = vadd.f32 %v4269, %v4702
        %v4815 = vadd.f32 %v4270, %v4735
        %v4816 = vadd.f32 %v4271, %v4768
        %v4817 = vadd.f32 %v4272, %v4801
        %vm4818 = vcmask 3072
        %4819 = vst.msk [vmem:[%s197] sm:$0xf] %vm4818, %v4802
        %4820 = vst.msk [vmem:[%s197 + $0x4] sm:$0xf] %vm4818, %v4803
        %4821 = vst.msk [vmem:[%s197 + $0x8] sm:$0xf] %vm4818, %v4804
        %4822 = vst.msk [vmem:[%s197 + $0xc] sm:$0xf] %vm4818, %v4805
        %4823 = vst.msk [vmem:[%s197 + $0x10] sm:$0xf] %vm4818, %v4806
        %4824 = vst.msk [vmem:[%s197 + $0x14] sm:$0xf] %vm4818, %v4807
        %4825 = vst.msk [vmem:[%s197 + $0x18] sm:$0xf] %vm4818, %v4808
        %4826 = vst.msk [vmem:[%s197 + $0x1c] sm:$0xf] %vm4818, %v4809
        %4827 = vst.msk [vmem:[%s197 + $0x20] sm:$0xf] %vm4818, %v4810
        %4828 = vst.msk [vmem:[%s197 + $0x24] sm:$0xf] %vm4818, %v4811
        %4829 = vst.msk [vmem:[%s197 + $0x28] sm:$0xf] %vm4818, %v4812
        %4830 = vst.msk [vmem:[%s197 + $0x2c] sm:$0xf] %vm4818, %v4813
        %4831 = vst.msk [vmem:[%s197 + $0x30] sm:$0xf] %vm4818, %v4814
        %4832 = vst.msk [vmem:[%s197 + $0x34] sm:$0xf] %vm4818, %v4815
        %4833 = vst.msk [vmem:[%s197 + $0x38] sm:$0xf] %vm4818, %v4816
        %4834 = vst.msk [vmem:[%s197 + $0x3c] sm:$0xf] %vm4818, %v4817
        %s4835 = sand.u32 %s70, 1
        %s4836 = scalar_lea.sflag [#allocation4], %s4835
        %s4837 = sand.u32 %s70, 1
        %s4838 = smul.addr %s4837, 1024
        %s4839 = scalar_lea.vmem [#allocation5], %s4838
        %s4840 = smul.u32 16, %s24
        %p4841 = scmp.lt.s32.totalorder %s4840, 31
        %s4842 = scalar_select %p4841, %s4840, 31
        %s4843 = smul.addr %s4842, 4
        %s4844 = scalar_lea.vmem %s2, %s4843
        // Predicated region
        $region33: #{tpu_custom_call.1} parent=23 // pred_check
          %p4845 = pneg %p80
        $region34: #{tpu_custom_call.1} parent=23 // pred_check_branch
          %4847 = sbr.rel (%p4845) target = $region36
        $region35: #{tpu_custom_call.1} parent=23 // pred_region
          %s4848 = smul.u32 16, %s24
          %s4849 = smul.u32 16, %s25
          %s4851 = ssub.s32 16384, 16384
          %4852 = vsyncadd %s4836, %s4851
          %s4853 = smul.addr %s4848, 32
          %s4854 = sadd.s32 %s4849, %s4853
          %s4855 = smul.addr %s4854, 64
          %s4856 = scalar_lea.hbm %s1, %s4855
          %s4857 = sshll.u32 %s4839, 4
          %s4858 = int_to_ptr.vmem [resolvable:$true] %s4857
          %4863 = dma.vmem_to_hbm [thread:$0]  %s4858, 16384, %s4856, %s4836, 1024, 2048, 64
        $region36: #{tpu_custom_call.1} parent=23 // pred_fallthru
          _
        // Predicated region
        $region37: #{tpu_custom_call.1} parent=23 // pred_check
          %p4864 = pneg %p106
        $region38: #{tpu_custom_call.1} parent=23 // pred_check_branch
          %4866 = sbr.rel (%p4864) target = $region40
        $region39: #{tpu_custom_call.1} parent=23 // pred_region
          %s4867 = smul.u32 16, %s24
        $region40: #{tpu_custom_call.1} parent=23 // pred_fallthru
          _
      $region24: #{tpu_custom_call.1} parent=5 // pred_fallthru
        _
      %p4868 = scmp.le.s32.totalorder 2, %s15
      // Predicated region
      $region41: #{tpu_custom_call.1} parent=5 // pred_check
        %p4869 = pneg %p4868
      $region42: #{tpu_custom_call.1} parent=5 // pred_check_branch
        %4871 = sbr.rel (%p4869) target = $region44
      $region43: #{tpu_custom_call.1} parent=5 // pred_region
        %s4872 = ssub.s32 %s15, 2
        // Predicated region
        $region45: #{tpu_custom_call.1} parent=43 // pred_check
          %p4873 = pneg %p86
        $region46: #{tpu_custom_call.1} parent=43 // pred_check_branch
          %4875 = sbr.rel (%p4873) target = $region48
        $region47: #{tpu_custom_call.1} parent=43 // pred_region
          %s4876 = sand.u32 %s71, 1
          %s4877 = scalar_lea.sflag [#allocation4], %s4876
          %s4878 = sand.u32 %s71, 1
          %s4879 = smul.addr %s4878, 1024
          %s4880 = scalar_lea.vmem [#allocation5], %s4879
          %4881 = dma.done %s4877, 16384
        $region48: #{tpu_custom_call.1} parent=43 // pred_fallthru
          _
        // Predicated region
        $region49: #{tpu_custom_call.1} parent=43 // pred_check
          %p4882 = pneg %p112
        $region50: #{tpu_custom_call.1} parent=43 // pred_check_branch
          %4884 = sbr.rel (%p4882) target = $region52
        $region51: #{tpu_custom_call.1} parent=43 // pred_region
          %s4885 = smul.u32 16, %s26
          %p4886 = scmp.lt.s32.totalorder %s4885, 31
          %s4887 = scalar_select %p4886, %s4885, 31
          %s4888 = smul.addr %s4887, 4
          %s4889 = scalar_lea.vmem %s2, %s4888
        $region52: #{tpu_custom_call.1} parent=43 // pred_fallthru
          _
      $region44: #{tpu_custom_call.1} parent=5 // pred_fallthru
        _
    $region6: #{tpu_custom_call.1} parent=1 // loop_footer
      %s19 = sadd.s32 1, %s15
    $region7: #{tpu_custom_call.1} parent=1 // loop_footer_branch
      %14 = sbr.rel target = $region3
    $region8: #{tpu_custom_call.1} parent=1 // loop_exit
      _
    %4890 = vsyncpa [#allocation3], 1
    %s4891 = scalar_lea.sflag [#allocation3], 1
    %4892 = vsyncpa %s4891, 1
    %4893 = vsyncpa [#allocation4], 1
    %s4894 = scalar_lea.sflag [#allocation4], 1
    %4895 = vsyncpa %s4894, 1

</llo_original>
